<compile_context>
chip_gen: v5e
topology: v5e:2x2
jax: 0.10.0
libtpu: 0.0.40
codegen_flags: <defaults>
</compile_context>

<pallas_src>
import functools

import jax
import jax.numpy as jnp
from jax.experimental import pallas as pl
from jax.experimental.pallas import tpu as pltpu


# ----------------------------------------------------------------------------
# Helpers
# ----------------------------------------------------------------------------

def _round_up(x, m):
    return ((x + m - 1) // m) * m


def _pad2d(x, rows, cols):
    r, c = x.shape
    if r == rows and c == cols:
        return x
    return jnp.pad(x, ((0, rows - r), (0, cols - c)))


_MM_COMPILER_PARAMS_3D = pltpu.CompilerParams(
    dimension_semantics=("parallel", "parallel", "arbitrary"),
    vmem_limit_bytes=32 * 1024 * 1024,
)
_MM_COMPILER_PARAMS_2D = pltpu.CompilerParams(
    dimension_semantics=("parallel", "parallel"),
    vmem_limit_bytes=32 * 1024 * 1024,
)


# ----------------------------------------------------------------------------
# Pallas kernels
# ----------------------------------------------------------------------------

def _matmul_kernel(x_ref, w_ref, *rest, act, has_bias):
    """Tiled matmul with K-reduction grid axis, optional bias + ReLU epilogue.

    x_ref/w_ref are bf16 tiles; accumulation is f32 in a VMEM scratch.
    """
    if has_bias:
        bias_ref, o_ref, acc_ref = rest
    else:
        o_ref, acc_ref = rest
        bias_ref = None

    k = pl.program_id(2)

    @pl.when(k == 0)
    def _init():
        acc_ref[...] = jnp.zeros_like(acc_ref)

    acc_ref[...] += jnp.dot(x_ref[...], w_ref[...],
                            preferred_element_type=jnp.float32)

    @pl.when(k == pl.num_programs(2) - 1)
    def _finish():
        y = acc_ref[...]
        if has_bias:
            y = y + bias_ref[...]
        if act == "relu":
            y = jnp.maximum(y, 0.0)
        o_ref[...] = y


def matmul_bias_act(x, w, bias=None, act=None, *, tm=256, tn=256, tk=512):
    """y = act(x @ w + bias).  x:(M,K) f32, w:(K,N) f32, bias:(N,) f32 -> (M,N) f32.

    Operands are padded to sublane/lane friendly sizes, cast to bf16 for the MXU,
    and tiled over a (M, N, K) grid with a f32 accumulator in VMEM.
    """
    M, K = x.shape
    K2, N = w.shape
    assert K == K2

    tm = min(tm, _round_up(M, 8))
    tn = min(tn, _round_up(N, 128))
    tk = min(tk, _round_up(K, 128))
    Mp, Np, Kp = _round_up(M, tm), _round_up(N, tn), _round_up(K, tk)

    xp = _pad2d(x.astype(jnp.bfloat16), Mp, Kp)
    wp = _pad2d(w.astype(jnp.bfloat16), Kp, Np)

    has_bias = bias is not None
    in_specs = [
        pl.BlockSpec((tm, tk), lambda i, j, k: (i, k)),
        pl.BlockSpec((tk, tn), lambda i, j, k: (k, j)),
    ]
    args = [xp, wp]
    if has_bias:
        bp = jnp.pad(bias.astype(jnp.float32), (0, Np - N)).reshape(1, Np)
        in_specs.append(pl.BlockSpec((1, tn), lambda i, j, k: (0, j)))
        args.append(bp)

    kern = functools.partial(_matmul_kernel, act=act, has_bias=has_bias)
    out = pl.pallas_call(
        kern,
        out_shape=jax.ShapeDtypeStruct((Mp, Np), jnp.float32),
        grid=(Mp // tm, Np // tn, Kp // tk),
        in_specs=in_specs,
        out_specs=pl.BlockSpec((tm, tn), lambda i, j, k: (i, j)),
        scratch_shapes=[pltpu.VMEM((tm, tn), jnp.float32)],
        compiler_params=_MM_COMPILER_PARAMS_3D,
    )(*args)
    return out[:M, :N]


def _matmul_ln_kernel(x_ref, g_ref, b_ref, w_ref, *rest, eps, act, has_bias):
    """Fused LayerNorm(x) @ w (+ bias, + ReLU).  LN runs in f32 over the full
    feature dim (block carries the whole K); the dot runs in bf16 on the MXU."""
    if has_bias:
        bias_ref, o_ref = rest
    else:
        (o_ref,) = rest
        bias_ref = None

    x = x_ref[...]
    mean = jnp.mean(x, axis=-1, keepdims=True)
    var = jnp.mean(jnp.square(x - mean), axis=-1, keepdims=True)
    xn = (x - mean) * jax.lax.rsqrt(var + eps) * g_ref[...] + b_ref[...]

    y = jnp.dot(xn.astype(jnp.bfloat16), w_ref[...],
                preferred_element_type=jnp.float32)
    if has_bias:
        y = y + bias_ref[...]
    if act == "relu":
        y = jnp.maximum(y, 0.0)
    o_ref[...] = y


def matmul_ln_bias_act(x, gamma, beta, w, bias=None, act=None, *,
                       eps=1e-5, tm=256, tn=256):
    """y = act(LayerNorm(x) @ w + bias).  x:(M,D), gamma/beta:(D,), w:(D,N)."""
    M, D = x.shape
    D2, N = w.shape
    assert D == D2

    tm = min(tm, _round_up(M, 8))
    tn = min(tn, _round_up(N, 128))
    Mp, Np = _round_up(M, tm), _round_up(N, tn)

    xp = _pad2d(x.astype(jnp.float32), Mp, D)       # LN axis kept un-padded
    wp = _pad2d(w.astype(jnp.bfloat16), D, Np)
    g2 = gamma.astype(jnp.float32).reshape(1, D)
    b2 = beta.astype(jnp.float32).reshape(1, D)

    has_bias = bias is not None
    in_specs = [
        pl.BlockSpec((tm, D), lambda i, j: (i, 0)),
        pl.BlockSpec((1, D), lambda i, j: (0, 0)),
        pl.BlockSpec((1, D), lambda i, j: (0, 0)),
        pl.BlockSpec((D, tn), lambda i, j: (0, j)),
    ]
    args = [xp, g2, b2, wp]
    if has_bias:
        bp = jnp.pad(bias.astype(jnp.float32), (0, Np - N)).reshape(1, Np)
        in_specs.append(pl.BlockSpec((1, tn), lambda i, j: (0, j)))
        args.append(bp)

    kern = functools.partial(_matmul_ln_kernel, eps=eps, act=act,
                             has_bias=has_bias)
    out = pl.pallas_call(
        kern,
        out_shape=jax.ShapeDtypeStruct((Mp, Np), jnp.float32),
        grid=(Mp // tm, Np // tn),
        in_specs=in_specs,
        out_specs=pl.BlockSpec((tm, tn), lambda i, j: (i, j)),
        compiler_params=_MM_COMPILER_PARAMS_2D,
    )(*args)
    return out[:M, :N]


def _attention_kernel(q_ref, k_ref, v_ref, o_ref, *, scale, n_valid):
    """All heads of one batch element per grid step.  Padded keys are masked."""
    q = (q_ref[0] * scale).astype(jnp.bfloat16)        # (H, n, d)
    k = k_ref[0].astype(jnp.bfloat16)                  # (H, n, d)
    v = v_ref[0].astype(jnp.bfloat16)                  # (H, n, d)

    dots = jnp.einsum("hqd,hkd->hqk", q, k,
                      preferred_element_type=jnp.float32)   # (H, n, n)
    n_keys = dots.shape[-1]
    if n_valid < n_keys:
        key_idx = jax.lax.broadcasted_iota(jnp.int32, dots.shape, 2)
        dots = jnp.where(key_idx < n_valid, dots, -1e30)

    m = jnp.max(dots, axis=-1, keepdims=True)
    e = jnp.exp(dots - m)
    s = jnp.sum(e, axis=-1, keepdims=True)
    attn = e * pl.reciprocal(s, approx=True)

    o_ref[0] = jnp.einsum("hqk,hkd->hqd", attn.astype(jnp.bfloat16), v,
                          preferred_element_type=jnp.float32)


def attention_pallas(q, k, v, scale, n_valid):
    """q/k/v: (B, H, n, d) f32.  softmax(q k^T * scale) v with padded-key mask."""
    B, H, n, d = q.shape
    kern = functools.partial(_attention_kernel, scale=scale, n_valid=n_valid)
    spec = pl.BlockSpec((1, H, n, d), lambda b: (b, 0, 0, 0))
    return pl.pallas_call(
        kern,
        out_shape=jax.ShapeDtypeStruct((B, H, n, d), jnp.float32),
        grid=(B,),
        in_specs=[spec, spec, spec],
        out_specs=spec,
        compiler_params=pltpu.CompilerParams(dimension_semantics=("parallel",)),
    )(q, k, v)


# ----------------------------------------------------------------------------
# Conv stem (im2col in JAX, BN-folded matmul + ReLU in Pallas)
# ----------------------------------------------------------------------------

def _im2col_3x3(x_nhwc, stride):
    B, H, W, C = x_nhwc.shape
    xp = jnp.pad(x_nhwc, ((0, 0), (1, 1), (1, 1), (0, 0)))
    Ho = (H + 2 - 3) // stride + 1
    Wo = (W + 2 - 3) // stride + 1
    cols = []
    for di in range(3):
        for dj in range(3):
            cols.append(
                xp[:, di:di + (Ho - 1) * stride + 1:stride,
                      dj:dj + (Wo - 1) * stride + 1:stride, :])
    patches = jnp.stack(cols, axis=3)              # (B, Ho, Wo, 9, C)
    return patches.reshape(B * Ho * Wo, 9 * C), Ho, Wo


def conv_bn_relu(x_nhwc, w, b, gamma, beta, mean, var, stride, eps=1e-5):
    """3x3 conv (pad=1) + BatchNorm (inference) + ReLU; BN scale folded into w.
    w is PyTorch layout (Cout, Cin, 3, 3)."""
    # TODO(synk): im2col still materializes the 9x patch tensor in HBM; a
    # 9-tap accumulating Pallas kernel with overlapping windows would avoid it.
    B = x_nhwc.shape[0]
    Cout = w.shape[0]
    cols, Ho, Wo = _im2col_3x3(x_nhwc, stride)
    w2 = jnp.transpose(w, (2, 3, 1, 0)).reshape(-1, Cout)  # (9*Cin, Cout)
    scale_bn = gamma / jnp.sqrt(var + eps)
    w2 = w2 * scale_bn[None, :]                            # fold BN scale
    shift = (b - mean) * scale_bn + beta
    y = matmul_bias_act(cols, w2, shift, act="relu")
    return y.reshape(B, Ho, Wo, Cout)


# ----------------------------------------------------------------------------
# Transformer blocks
# ----------------------------------------------------------------------------

def attention_block(x, p, heads, dim_head, n_valid):
    B, n, dim = x.shape
    inner = heads * dim_head

    # fused LayerNorm -> QKV projection (bias=False)
    qkv = matmul_ln_bias_act(x.reshape(B * n, dim), p["ln_g"], p["ln_b"],
                             p["w_qkv"])                       # (B*n, 3*inner)

    # TODO(synk): head split/merge still round-trips HBM via XLA transposes;
    # could be folded into the attention kernel by slicing per head in VMEM.
    qkv = qkv.reshape(B, n, 3, heads, dim_head)
    qkv = jnp.transpose(qkv, (2, 0, 3, 1, 4))                  # (3, B, H, n, d)
    q, k, v = qkv[0], qkv[1], qkv[2]

    out = attention_pallas(q, k, v, dim_head ** -0.5, n_valid)  # (B, H, n, d)
    out = jnp.transpose(out, (0, 2, 1, 3)).reshape(B * n, inner)

    y = matmul_bias_act(out, p["w_out"], p["b_out"])
    return y.reshape(B, n, dim)


def ff_block(x, p):
    B, n, dim = x.shape
    x2 = x.reshape(B * n, dim)
    h = matmul_ln_bias_act(x2, p["ln_g"], p["ln_b"], p["w1"],
                           bias=p["b1"], act="relu")
    y = matmul_bias_act(h, p["w2"], p["b2"])
    return y.reshape(B, n, dim)


# ----------------------------------------------------------------------------
# Full ViT forward
# ----------------------------------------------------------------------------

def vit_forward(params, img_nchw, *, heads, dim_head):
    # conv stem (strides 1, 1, 2, 2) -> spatial reduced 4x
    x = jnp.transpose(img_nchw, (0, 2, 3, 1)).astype(jnp.float32)  # NCHW -> NHWC
    for p, st in zip(params["conv"], (1, 1, 2, 2)):
        x = conv_bn_relu(x, p["w"], p["b"], p["gamma"], p["beta"],
                         p["mean"], p["var"], stride=st)

    B, H, W, C = x.shape
    x = x.reshape(B, H * W, C)                       # 'b c h w -> b (h w) c'

    pe = params["patch_embed"]
    dim = pe["w"].shape[1]
    x = matmul_bias_act(x.reshape(B * H * W, C), pe["w"],
                        pe["b"]).reshape(B, H * W, dim)

    cls = jnp.broadcast_to(params["cls_token"], (B, 1, dim))
    x = jnp.concatenate([cls, x], axis=1)
    n_valid = x.shape[1]
    x = x + params["pos_embedding"][:, :n_valid]
    # emb_dropout(p=0.0) -> identity

    # pad the token axis to a sublane-friendly multiple of 8; padded tokens
    # are masked as attention keys and discarded at the end.
    n_pad = _round_up(n_valid, 8)
    if n_pad != n_valid:
        x = jnp.pad(x, ((0, 0), (0, n_pad - n_valid), (0, 0)))

    for layer in params["layers"]:
        x = attention_block(x, layer["attn"], heads, dim_head, n_valid) + x
        x = ff_block(x, layer["ff"]) + x

    x0 = x[:, 0]                                     # pool == 'cls'
    head = params["head"]
    logits = matmul_ln_bias_act(x0, head["ln_g"], head["ln_b"],
                                head["w"], head["b"])
    return logits


# ----------------------------------------------------------------------------
# Deterministic parameter init (synthetic — shapes match the nn.Module)
# ----------------------------------------------------------------------------

def init_params(key, *, channels, conv, conv1, dim, depth, heads, dim_head,
                mlp_dim, num_classes, num_patches):
    keys = iter(jax.random.split(key, 512))

    def nrm(shape, s=0.02):
        return (s * jax.random.normal(next(keys), shape)).astype(jnp.float32)

    def conv_params(cin, cout):
        return {
            "w": nrm((cout, cin, 3, 3), 0.05),
            "b": nrm((cout,), 0.02),
            "gamma": 1.0 + nrm((cout,), 0.02),
            "beta": nrm((cout,), 0.02),
            "mean": nrm((cout,), 0.01),
            "var": 1.0 + jnp.abs(nrm((cout,), 0.1)),
        }

    inner = heads * dim_head
    params = {
        "conv": [conv_params(channels, conv), conv_params(conv, conv),
                 conv_params(conv, conv1), conv_params(conv1, conv1)],
        "patch_embed": {"w": nrm((conv1, dim)), "b": nrm((dim,))},
        "cls_token": nrm((1, 1, dim), 1.0),
        "pos_embedding": nrm((1, num_patches + 1, dim), 1.0),
        "layers": [],
        "head": {"ln_g": 1.0 + nrm((dim,), 0.02), "ln_b": nrm((dim,), 0.02),
                 "w": nrm((dim, num_classes)), "b": nrm((num_classes,))},
    }
    for _ in range(depth):
        params["layers"].append({
            "attn": {"ln_g": 1.0 + nrm((dim,), 0.02), "ln_b": nrm((dim,), 0.02),
                     "w_qkv": nrm((dim, 3 * inner)),          # bias=False
                     "w_out": nrm((inner, dim)), "b_out": nrm((dim,))},
            "ff": {"ln_g": 1.0 + nrm((dim,), 0.02), "ln_b": nrm((dim,), 0.02),
                   "w1": nrm((dim, mlp_dim)), "b1": nrm((mlp_dim,)),
                   "w2": nrm((mlp_dim, dim)), "b2": nrm((dim,))},
        })
    return params


# ----------------------------------------------------------------------------
# Main
# ----------------------------------------------------------------------------

if __name__ == "__main__":
    # Small config consistent with the module's forward pass.
    batch = 2
    channels = 4
    image_size = 16
    conv, conv1 = 8, 16            # conv stem widths
    dim = 32
    depth = 2
    heads = 4
    dim_head = 8
    mlp_dim = 64
    num_classes = 10
    num_patches = (image_size // 4) * (image_size // 4)   # stem downsamples 4x

    key = jax.random.PRNGKey(0)
    pkey, xkey = jax.random.split(key)

    params = init_params(
        pkey, channels=channels, conv=conv, conv1=conv1, dim=dim, depth=depth,
        heads=heads, dim_head=dim_head, mlp_dim=mlp_dim,
        num_classes=num_classes, num_patches=num_patches)

    img = jax.random.normal(xkey, (batch, channels, image_size, image_size),
                            dtype=jnp.float32)   # NCHW, matches PyTorch input

    fwd = jax.jit(functools.partial(vit_forward, heads=heads, dim_head=dim_head))
    logits = fwd(params, img)
    logits = jax.block_until_ready(logits)

    assert logits.shape == (batch, num_classes)
    assert bool(jnp.all(jnp.isfinite(logits)))
    # TODO(synk): BatchNorm2d train-mode batch statistics are not reproduced;
    # inference-mode running stats are folded into the Pallas matmul weights.
    print("KERNEL_OK")
</pallas_src>

<mosaic_0001>
module attributes {stable_mosaic.version = 11 : i64} {
  func.func @_matmul_kernel(%arg0: i32, %arg1: i32, %arg2: i32, %arg3: memref<256x128xbf16, #tpu.memory_space<vmem>>, %arg4: memref<128x128xbf16, #tpu.memory_space<vmem>>, %arg5: memref<1x128xf32, #tpu.memory_space<vmem>>, %arg6: memref<256x128xf32, #tpu.memory_space<vmem>>, %arg7: memref<256x128xf32, #tpu.memory_space<vmem>>) attributes {dimension_semantics = [#tpu.dimension_semantics<parallel>, #tpu.dimension_semantics<parallel>, #tpu.dimension_semantics<arbitrary>], iteration_bounds = array<i64: 2, 1, 1>, scalar_prefetch = 0 : i64, scratch_operands = 1 : i64, tpu.core_type = #tpu.core_type<tc>, window_params = [{transform_indices = @transform_0, window_bounds = array<i64: 256, 128>}, {transform_indices = @transform_1, window_bounds = array<i64: 128, 128>}, {transform_indices = @transform_2, window_bounds = array<i64: 1, 128>}, {transform_indices = @transform_3, window_bounds = array<i64: 256, 128>}]} {
    %c0_i32 = arith.constant 0 : i32
    %0 = arith.cmpi eq, %arg2, %c0_i32 : i32
    %1 = arith.extui %0 : i1 to i32
    %c0_i32_0 = arith.constant 0 : i32
    %2 = arith.cmpi ne, %1, %c0_i32_0 : i32
    scf.if %2 {
      %cst_10 = arith.constant 0.000000e+00 : f32
      %12 = vector.broadcast %cst_10 : f32 to vector<256x128xf32>
      %c0_11 = arith.constant 0 : index
      %c0_12 = arith.constant 0 : index
      %13 = vector.load %arg7[%c0_11, %c0_12] : memref<256x128xf32, #tpu.memory_space<vmem>>, vector<256x128xf32>
      tpu.vector_store %arg7[%c0_11, %c0_12], %12 {strides = array<i32>} : memref<256x128xf32, #tpu.memory_space<vmem>>, vector<256x128xf32>,
    } else {
    }
    %c0 = arith.constant 0 : index
    %c0_1 = arith.constant 0 : index
    %3 = vector.load %arg7[%c0, %c0_1] : memref<256x128xf32, #tpu.memory_space<vmem>>, vector<256x128xf32>
    %c0_2 = arith.constant 0 : index
    %c0_3 = arith.constant 0 : index
    %4 = vector.load %arg3[%c0_2, %c0_3] : memref<256x128xbf16, #tpu.memory_space<vmem>>, vector<256x128xbf16>
    %c0_4 = arith.constant 0 : index
    %c0_5 = arith.constant 0 : index
    %5 = vector.load %arg4[%c0_4, %c0_5] : memref<128x128xbf16, #tpu.memory_space<vmem>>, vector<128x128xbf16>
    %cst = arith.constant dense<0.000000e+00> : vector<256x128xf32>
    %6 = tpu.matmul %4, %5, %cst {dimension_numbers = #tpu.dot_dimension_numbers<[1], [0], [0], [1], [0, 0, 1, 1], [], []>} : vector<256x128xbf16>, vector<128x128xbf16>, vector<256x128xf32> -> vector<256x128xf32>
    %7 = arith.addf %3, %6 : vector<256x128xf32>
    %c0_6 = arith.constant 0 : index
    %c0_7 = arith.constant 0 : index
    %8 = vector.load %arg7[%c0_6, %c0_7] : memref<256x128xf32, #tpu.memory_space<vmem>>, vector<256x128xf32>
    tpu.vector_store %arg7[%c0_6, %c0_7], %7 {strides = array<i32>} : memref<256x128xf32, #tpu.memory_space<vmem>>, vector<256x128xf32>,
    %c0_i32_8 = arith.constant 0 : i32
    %9 = arith.cmpi eq, %arg2, %c0_i32_8 : i32
    %10 = arith.extui %9 : i1 to i32
    %c0_i32_9 = arith.constant 0 : i32
    %11 = arith.cmpi ne, %10, %c0_i32_9 : i32
    scf.if %11 {
      %c0_10 = arith.constant 0 : index
      %c0_11 = arith.constant 0 : index
      %12 = vector.load %arg7[%c0_10, %c0_11] : memref<256x128xf32, #tpu.memory_space<vmem>>, vector<256x128xf32>
      %c0_12 = arith.constant 0 : index
      %c0_13 = arith.constant 0 : index
      %13 = vector.load %arg5[%c0_12, %c0_13] : memref<1x128xf32, #tpu.memory_space<vmem>>, vector<1x128xf32>
      %14 = vector.broadcast %13 : vector<1x128xf32> to vector<256x128xf32>
      %15 = arith.addf %12, %14 : vector<256x128xf32>
      %cst_14 = arith.constant 0.000000e+00 : f32
      %16 = vector.broadcast %cst_14 : f32 to vector<256x128xf32>
      %17 = arith.maximumf %15, %16 : vector<256x128xf32>
      %c0_15 = arith.constant 0 : index
      %c0_16 = arith.constant 0 : index
      %18 = vector.load %arg6[%c0_15, %c0_16] : memref<256x128xf32, #tpu.memory_space<vmem>>, vector<256x128xf32>
      tpu.vector_store %arg6[%c0_15, %c0_16], %17 {strides = array<i32>} : memref<256x128xf32, #tpu.memory_space<vmem>>, vector<256x128xf32>,
    } else {
    }
    return
  }
  func.func @transform_0(%arg0: i32, %arg1: i32, %arg2: i32) -> (i32, i32) {
    %c0_i32 = arith.constant 0 : i32
    return %arg0, %arg2 : i32, i32
  }
  func.func @transform_1(%arg0: i32, %arg1: i32, %arg2: i32) -> (i32, i32) {
    %c0_i32 = arith.constant 0 : i32
    return %arg2, %arg1 : i32, i32
  }
  func.func @transform_2(%arg0: i32, %arg1: i32, %arg2: i32) -> (i32, i32) {
    %c0_i32 = arith.constant 0 : i32
    %c0_i32_0 = arith.constant 0 : i32
    return %c0_i32, %arg1 : i32, i32
  }
  func.func @transform_3(%arg0: i32, %arg1: i32, %arg2: i32) -> (i32, i32) {
    %c0_i32 = arith.constant 0 : i32
    return %arg0, %arg1 : i32, i32
  }
}

module attributes {stable_mosaic.version = 11 : i64} {
  func.func @_matmul_kernel(%arg0: i32, %arg1: i32, %arg2: i32, %arg3: memref<128x128xbf16, #tpu.memory_space<vmem>>, %arg4: memref<128x128xbf16, #tpu.memory_space<vmem>>, %arg5: memref<1x128xf32, #tpu.memory_space<vmem>>, %arg6: memref<128x128xf32, #tpu.memory_space<vmem>>, %arg7: memref<128x128xf32, #tpu.memory_space<vmem>>) attributes {dimension_semantics = [#tpu.dimension_semantics<parallel>, #tpu.dimension_semantics<parallel>, #tpu.dimension_semantics<arbitrary>], iteration_bounds = array<i64: 1, 1, 1>, scalar_prefetch = 0 : i64, scratch_operands = 1 : i64, tpu.core_type = #tpu.core_type<tc>, window_params = [{transform_indices = @transform_0, window_bounds = array<i64: 128, 128>}, {transform_indices = @transform_1, window_bounds = array<i64: 128, 128>}, {transform_indices = @transform_2, window_bounds = array<i64: 1, 128>}, {transform_indices = @transform_3, window_bounds = array<i64: 128, 128>}]} {
    %c0_i32 = arith.constant 0 : i32
    %0 = arith.cmpi eq, %arg2, %c0_i32 : i32
    %1 = arith.extui %0 : i1 to i32
    %c0_i32_0 = arith.constant 0 : i32
    %2 = arith.cmpi ne, %1, %c0_i32_0 : i32
    scf.if %2 {
      %cst_10 = arith.constant 0.000000e+00 : f32
      %12 = vector.broadcast %cst_10 : f32 to vector<128x128xf32>
      %c0_11 = arith.constant 0 : index
      %c0_12 = arith.constant 0 : index
      %13 = vector.load %arg7[%c0_11, %c0_12] : memref<128x128xf32, #tpu.memory_space<vmem>>, vector<128x128xf32>
      tpu.vector_store %arg7[%c0_11, %c0_12], %12 {strides = array<i32>} : memref<128x128xf32, #tpu.memory_space<vmem>>, vector<128x128xf32>,
    } else {
    }
    %c0 = arith.constant 0 : index
    %c0_1 = arith.constant 0 : index
    %3 = vector.load %arg7[%c0, %c0_1] : memref<128x128xf32, #tpu.memory_space<vmem>>, vector<128x128xf32>
    %c0_2 = arith.constant 0 : index
    %c0_3 = arith.constant 0 : index
    %4 = vector.load %arg3[%c0_2, %c0_3] : memref<128x128xbf16, #tpu.memory_space<vmem>>, vector<128x128xbf16>
    %c0_4 = arith.constant 0 : index
    %c0_5 = arith.constant 0 : index
    %5 = vector.load %arg4[%c0_4, %c0_5] : memref<128x128xbf16, #tpu.memory_space<vmem>>, vector<128x128xbf16>
    %cst = arith.constant dense<0.000000e+00> : vector<128x128xf32>
    %6 = tpu.matmul %4, %5, %cst {dimension_numbers = #tpu.dot_dimension_numbers<[1], [0], [0], [1], [0, 0, 1, 1], [], []>} : vector<128x128xbf16>, vector<128x128xbf16>, vector<128x128xf32> -> vector<128x128xf32>
    %7 = arith.addf %3, %6 : vector<128x128xf32>
    %c0_6 = arith.constant 0 : index
    %c0_7 = arith.constant 0 : index
    %8 = vector.load %arg7[%c0_6, %c0_7] : memref<128x128xf32, #tpu.memory_space<vmem>>, vector<128x128xf32>
    tpu.vector_store %arg7[%c0_6, %c0_7], %7 {strides = array<i32>} : memref<128x128xf32, #tpu.memory_space<vmem>>, vector<128x128xf32>,
    %c0_i32_8 = arith.constant 0 : i32
    %9 = arith.cmpi eq, %arg2, %c0_i32_8 : i32
    %10 = arith.extui %9 : i1 to i32
    %c0_i32_9 = arith.constant 0 : i32
    %11 = arith.cmpi ne, %10, %c0_i32_9 : i32
    scf.if %11 {
      %c0_10 = arith.constant 0 : index
      %c0_11 = arith.constant 0 : index
      %12 = vector.load %arg7[%c0_10, %c0_11] : memref<128x128xf32, #tpu.memory_space<vmem>>, vector<128x128xf32>
      %c0_12 = arith.constant 0 : index
      %c0_13 = arith.constant 0 : index
      %13 = vector.load %arg5[%c0_12, %c0_13] : memref<1x128xf32, #tpu.memory_space<vmem>>, vector<1x128xf32>
      %14 = vector.broadcast %13 : vector<1x128xf32> to vector<128x128xf32>
      %15 = arith.addf %12, %14 : vector<128x128xf32>
      %cst_14 = arith.constant 0.000000e+00 : f32
      %16 = vector.broadcast %cst_14 : f32 to vector<128x128xf32>
      %17 = arith.maximumf %15, %16 : vector<128x128xf32>
      %c0_15 = arith.constant 0 : index
      %c0_16 = arith.constant 0 : index
      %18 = vector.load %arg6[%c0_15, %c0_16] : memref<128x128xf32, #tpu.memory_space<vmem>>, vector<128x128xf32>
      tpu.vector_store %arg6[%c0_15, %c0_16], %17 {strides = array<i32>} : memref<128x128xf32, #tpu.memory_space<vmem>>, vector<128x128xf32>,
    } else {
    }
    return
  }
  func.func @transform_0(%arg0: i32, %arg1: i32, %arg2: i32) -> (i32, i32) {
    %c0_i32 = arith.constant 0 : i32
    return %arg0, %arg2 : i32, i32
  }
  func.func @transform_1(%arg0: i32, %arg1: i32, %arg2: i32) -> (i32, i32) {
    %c0_i32 = arith.constant 0 : i32
    return %arg2, %arg1 : i32, i32
  }
  func.func @transform_2(%arg0: i32, %arg1: i32, %arg2: i32) -> (i32, i32) {
    %c0_i32 = arith.constant 0 : i32
    %c0_i32_0 = arith.constant 0 : i32
    return %c0_i32, %arg1 : i32, i32
  }
  func.func @transform_3(%arg0: i32, %arg1: i32, %arg2: i32) -> (i32, i32) {
    %c0_i32 = arith.constant 0 : i32
    return %arg0, %arg1 : i32, i32
  }
}

module attributes {stable_mosaic.version = 11 : i64} {
  func.func @_matmul_kernel(%arg0: i32, %arg1: i32, %arg2: i32, %arg3: memref<32x128xbf16, #tpu.memory_space<vmem>>, %arg4: memref<128x128xbf16, #tpu.memory_space<vmem>>, %arg5: memref<1x128xf32, #tpu.memory_space<vmem>>, %arg6: memref<32x128xf32, #tpu.memory_space<vmem>>, %arg7: memref<32x128xf32, #tpu.memory_space<vmem>>) attributes {dimension_semantics = [#tpu.dimension_semantics<parallel>, #tpu.dimension_semantics<parallel>, #tpu.dimension_semantics<arbitrary>], iteration_bounds = array<i64: 1, 1, 1>, scalar_prefetch = 0 : i64, scratch_operands = 1 : i64, tpu.core_type = #tpu.core_type<tc>, window_params = [{transform_indices = @transform_0, window_bounds = array<i64: 32, 128>}, {transform_indices = @transform_1, window_bounds = array<i64: 128, 128>}, {transform_indices = @transform_2, window_bounds = array<i64: 1, 128>}, {transform_indices = @transform_3, window_bounds = array<i64: 32, 128>}]} {
    %c0_i32 = arith.constant 0 : i32
    %0 = arith.cmpi eq, %arg2, %c0_i32 : i32
    %1 = arith.extui %0 : i1 to i32
    %c0_i32_0 = arith.constant 0 : i32
    %2 = arith.cmpi ne, %1, %c0_i32_0 : i32
    scf.if %2 {
      %cst_10 = arith.constant 0.000000e+00 : f32
      %12 = vector.broadcast %cst_10 : f32 to vector<32x128xf32>
      %c0_11 = arith.constant 0 : index
      %c0_12 = arith.constant 0 : index
      %13 = vector.load %arg7[%c0_11, %c0_12] : memref<32x128xf32, #tpu.memory_space<vmem>>, vector<32x128xf32>
      tpu.vector_store %arg7[%c0_11, %c0_12], %12 {strides = array<i32>} : memref<32x128xf32, #tpu.memory_space<vmem>>, vector<32x128xf32>,
    } else {
    }
    %c0 = arith.constant 0 : index
    %c0_1 = arith.constant 0 : index
    %3 = vector.load %arg7[%c0, %c0_1] : memref<32x128xf32, #tpu.memory_space<vmem>>, vector<32x128xf32>
    %c0_2 = arith.constant 0 : index
    %c0_3 = arith.constant 0 : index
    %4 = vector.load %arg3[%c0_2, %c0_3] : memref<32x128xbf16, #tpu.memory_space<vmem>>, vector<32x128xbf16>
    %c0_4 = arith.constant 0 : index
    %c0_5 = arith.constant 0 : index
    %5 = vector.load %arg4[%c0_4, %c0_5] : memref<128x128xbf16, #tpu.memory_space<vmem>>, vector<128x128xbf16>
    %cst = arith.constant dense<0.000000e+00> : vector<32x128xf32>
    %6 = tpu.matmul %4, %5, %cst {dimension_numbers = #tpu.dot_dimension_numbers<[1], [0], [0], [1], [0, 0, 1, 1], [], []>} : vector<32x128xbf16>, vector<128x128xbf16>, vector<32x128xf32> -> vector<32x128xf32>
    %7 = arith.addf %3, %6 : vector<32x128xf32>
    %c0_6 = arith.constant 0 : index
    %c0_7 = arith.constant 0 : index
    %8 = vector.load %arg7[%c0_6, %c0_7] : memref<32x128xf32, #tpu.memory_space<vmem>>, vector<32x128xf32>
    tpu.vector_store %arg7[%c0_6, %c0_7], %7 {strides = array<i32>} : memref<32x128xf32, #tpu.memory_space<vmem>>, vector<32x128xf32>,
    %c0_i32_8 = arith.constant 0 : i32
    %9 = arith.cmpi eq, %arg2, %c0_i32_8 : i32
    %10 = arith.extui %9 : i1 to i32
    %c0_i32_9 = arith.constant 0 : i32
    %11 = arith.cmpi ne, %10, %c0_i32_9 : i32
    scf.if %11 {
      %c0_10 = arith.constant 0 : index
      %c0_11 = arith.constant 0 : index
      %12 = vector.load %arg7[%c0_10, %c0_11] : memref<32x128xf32, #tpu.memory_space<vmem>>, vector<32x128xf32>
      %c0_12 = arith.constant 0 : index
      %c0_13 = arith.constant 0 : index
      %13 = vector.load %arg5[%c0_12, %c0_13] : memref<1x128xf32, #tpu.memory_space<vmem>>, vector<1x128xf32>
      %14 = vector.broadcast %13 : vector<1x128xf32> to vector<32x128xf32>
      %15 = arith.addf %12, %14 : vector<32x128xf32>
      %c0_14 = arith.constant 0 : index
      %c0_15 = arith.constant 0 : index
      %16 = vector.load %arg6[%c0_14, %c0_15] : memref<32x128xf32, #tpu.memory_space<vmem>>, vector<32x128xf32>
      tpu.vector_store %arg6[%c0_14, %c0_15], %15 {strides = array<i32>} : memref<32x128xf32, #tpu.memory_space<vmem>>, vector<32x128xf32>,
    } else {
    }
    return
  }
  func.func @transform_0(%arg0: i32, %arg1: i32, %arg2: i32) -> (i32, i32) {
    %c0_i32 = arith.constant 0 : i32
    return %arg0, %arg2 : i32, i32
  }
  func.func @transform_1(%arg0: i32, %arg1: i32, %arg2: i32) -> (i32, i32) {
    %c0_i32 = arith.constant 0 : i32
    return %arg2, %arg1 : i32, i32
  }
  func.func @transform_2(%arg0: i32, %arg1: i32, %arg2: i32) -> (i32, i32) {
    %c0_i32 = arith.constant 0 : i32
    %c0_i32_0 = arith.constant 0 : i32
    return %c0_i32, %arg1 : i32, i32
  }
  func.func @transform_3(%arg0: i32, %arg1: i32, %arg2: i32) -> (i32, i32) {
    %c0_i32 = arith.constant 0 : i32
    return %arg0, %arg1 : i32, i32
  }
}

module attributes {stable_mosaic.version = 11 : i64} {
  func.func @_matmul_kernel(%arg0: i32, %arg1: i32, %arg2: i32, %arg3: memref<32x256xbf16, #tpu.memory_space<vmem>>, %arg4: memref<256x128xbf16, #tpu.memory_space<vmem>>, %arg5: memref<1x128xf32, #tpu.memory_space<vmem>>, %arg6: memref<32x128xf32, #tpu.memory_space<vmem>>, %arg7: memref<32x128xf32, #tpu.memory_space<vmem>>) attributes {dimension_semantics = [#tpu.dimension_semantics<parallel>, #tpu.dimension_semantics<parallel>, #tpu.dimension_semantics<arbitrary>], iteration_bounds = array<i64: 1, 1, 1>, scalar_prefetch = 0 : i64, scratch_operands = 1 : i64, tpu.core_type = #tpu.core_type<tc>, window_params = [{transform_indices = @transform_0, window_bounds = array<i64: 32, 256>}, {transform_indices = @transform_1, window_bounds = array<i64: 256, 128>}, {transform_indices = @transform_2, window_bounds = array<i64: 1, 128>}, {transform_indices = @transform_3, window_bounds = array<i64: 32, 128>}]} {
    %c0_i32 = arith.constant 0 : i32
    %0 = arith.cmpi eq, %arg2, %c0_i32 : i32
    %1 = arith.extui %0 : i1 to i32
    %c0_i32_0 = arith.constant 0 : i32
    %2 = arith.cmpi ne, %1, %c0_i32_0 : i32
    scf.if %2 {
      %cst_10 = arith.constant 0.000000e+00 : f32
      %12 = vector.broadcast %cst_10 : f32 to vector<32x128xf32>
      %c0_11 = arith.constant 0 : index
      %c0_12 = arith.constant 0 : index
      %13 = vector.load %arg7[%c0_11, %c0_12] : memref<32x128xf32, #tpu.memory_space<vmem>>, vector<32x128xf32>
      tpu.vector_store %arg7[%c0_11, %c0_12], %12 {strides = array<i32>} : memref<32x128xf32, #tpu.memory_space<vmem>>, vector<32x128xf32>,
    } else {
    }
    %c0 = arith.constant 0 : index
    %c0_1 = arith.constant 0 : index
    %3 = vector.load %arg7[%c0, %c0_1] : memref<32x128xf32, #tpu.memory_space<vmem>>, vector<32x128xf32>
    %c0_2 = arith.constant 0 : index
    %c0_3 = arith.constant 0 : index
    %4 = vector.load %arg3[%c0_2, %c0_3] : memref<32x256xbf16, #tpu.memory_space<vmem>>, vector<32x256xbf16>
    %c0_4 = arith.constant 0 : index
    %c0_5 = arith.constant 0 : index
    %5 = vector.load %arg4[%c0_4, %c0_5] : memref<256x128xbf16, #tpu.memory_space<vmem>>, vector<256x128xbf16>
    %cst = arith.constant dense<0.000000e+00> : vector<32x128xf32>
    %6 = tpu.matmul %4, %5, %cst {dimension_numbers = #tpu.dot_dimension_numbers<[1], [0], [0], [1], [0, 0, 1, 1], [], []>} : vector<32x256xbf16>, vector<256x128xbf16>, vector<32x128xf32> -> vector<32x128xf32>
    %7 = arith.addf %3, %6 : vector<32x128xf32>
    %c0_6 = arith.constant 0 : index
    %c0_7 = arith.constant 0 : index
    %8 = vector.load %arg7[%c0_6, %c0_7] : memref<32x128xf32, #tpu.memory_space<vmem>>, vector<32x128xf32>
    tpu.vector_store %arg7[%c0_6, %c0_7], %7 {strides = array<i32>} : memref<32x128xf32, #tpu.memory_space<vmem>>, vector<32x128xf32>,
    %c0_i32_8 = arith.constant 0 : i32
    %9 = arith.cmpi eq, %arg2, %c0_i32_8 : i32
    %10 = arith.extui %9 : i1 to i32
    %c0_i32_9 = arith.constant 0 : i32
    %11 = arith.cmpi ne, %10, %c0_i32_9 : i32
    scf.if %11 {
      %c0_10 = arith.constant 0 : index
      %c0_11 = arith.constant 0 : index
      %12 = vector.load %arg7[%c0_10, %c0_11] : memref<32x128xf32, #tpu.memory_space<vmem>>, vector<32x128xf32>
      %c0_12 = arith.constant 0 : index
      %c0_13 = arith.constant 0 : index
      %13 = vector.load %arg5[%c0_12, %c0_13] : memref<1x128xf32, #tpu.memory_space<vmem>>, vector<1x128xf32>
      %14 = vector.broadcast %13 : vector<1x128xf32> to vector<32x128xf32>
      %15 = arith.addf %12, %14 : vector<32x128xf32>
      %cst_14 = arith.constant 0.000000e+00 : f32
      %16 = vector.broadcast %cst_14 : f32 to vector<32x128xf32>
      %17 = arith.maximumf %15, %16 : vector<32x128xf32>
      %c0_15 = arith.constant 0 : index
      %c0_16 = arith.constant 0 : index
      %18 = vector.load %arg6[%c0_15, %c0_16] : memref<32x128xf32, #tpu.memory_space<vmem>>, vector<32x128xf32>
      tpu.vector_store %arg6[%c0_15, %c0_16], %17 {strides = array<i32>} : memref<32x128xf32, #tpu.memory_space<vmem>>, vector<32x128xf32>,
    } else {
    }
    return
  }
  func.func @transform_0(%arg0: i32, %arg1: i32, %arg2: i32) -> (i32, i32) {
    %c0_i32 = arith.constant 0 : i32
    return %arg0, %arg2 : i32, i32
  }
  func.func @transform_1(%arg0: i32, %arg1: i32, %arg2: i32) -> (i32, i32) {
    %c0_i32 = arith.constant 0 : i32
    return %arg2, %arg1 : i32, i32
  }
  func.func @transform_2(%arg0: i32, %arg1: i32, %arg2: i32) -> (i32, i32) {
    %c0_i32 = arith.constant 0 : i32
    %c0_i32_0 = arith.constant 0 : i32
    return %c0_i32, %arg1 : i32, i32
  }
  func.func @transform_3(%arg0: i32, %arg1: i32, %arg2: i32) -> (i32, i32) {
    %c0_i32 = arith.constant 0 : i32
    return %arg0, %arg1 : i32, i32
  }
}

module attributes {stable_mosaic.version = 11 : i64} {
  func.func @_matmul_ln_kernel(%arg0: i32, %arg1: i32, %arg2: memref<48x32xf32, #tpu.memory_space<vmem>>, %arg3: memref<1x32xf32, #tpu.memory_space<vmem>>, %arg4: memref<1x32xf32, #tpu.memory_space<vmem>>, %arg5: memref<32x128xbf16, #tpu.memory_space<vmem>>, %arg6: memref<48x128xf32, #tpu.memory_space<vmem>>) attributes {dimension_semantics = [#tpu.dimension_semantics<parallel>, #tpu.dimension_semantics<parallel>], iteration_bounds = array<i64: 1, 1>, scalar_prefetch = 0 : i64, scratch_operands = 0 : i64, tpu.core_type = #tpu.core_type<tc>, window_params = [{transform_indices = @transform_0, window_bounds = array<i64: 48, 32>}, {pipeline_mode = #tpu.pipeline_mode<synchronous>, transform_indices = @transform_1, window_bounds = array<i64: 1, 32>}, {pipeline_mode = #tpu.pipeline_mode<synchronous>, transform_indices = @transform_2, window_bounds = array<i64: 1, 32>}, {transform_indices = @transform_3, window_bounds = array<i64: 32, 128>}, {transform_indices = @transform_4, window_bounds = array<i64: 48, 128>}]} {
    %c0 = arith.constant 0 : index
    %c0_0 = arith.constant 0 : index
    %0 = vector.load %arg2[%c0, %c0_0] : memref<48x32xf32, #tpu.memory_space<vmem>>, vector<48x32xf32>
    %cst = arith.constant dense<0.000000e+00> : vector<48xf32>
    %1 = vector.multi_reduction <add>, %0, %cst [1] : vector<48x32xf32> to vector<48xf32>
    %2 = vector.shape_cast %1 : vector<48xf32> to vector<48x1xf32>
    %cst_1 = arith.constant 3.200000e+01 : f32
    %3 = vector.broadcast %cst_1 : f32 to vector<48x1xf32>
    %4 = arith.divf %2, %3 : vector<48x1xf32>
    %5 = vector.broadcast %4 : vector<48x1xf32> to vector<48x32xf32>
    %6 = arith.subf %0, %5 : vector<48x32xf32>
    %7 = arith.mulf %6, %6 : vector<48x32xf32>
    %cst_2 = arith.constant dense<0.000000e+00> : vector<48xf32>
    %8 = vector.multi_reduction <add>, %7, %cst_2 [1] : vector<48x32xf32> to vector<48xf32>
    %9 = vector.shape_cast %8 : vector<48xf32> to vector<48x1xf32>
    %cst_3 = arith.constant 3.200000e+01 : f32
    %10 = vector.broadcast %cst_3 : f32 to vector<48x1xf32>
    %11 = arith.divf %9, %10 : vector<48x1xf32>
    %12 = vector.broadcast %4 : vector<48x1xf32> to vector<48x32xf32>
    %13 = arith.subf %0, %12 : vector<48x32xf32>
    %cst_4 = arith.constant 9.99999974E-6 : f32
    %14 = vector.broadcast %cst_4 : f32 to vector<48x1xf32>
    %15 = arith.addf %11, %14 : vector<48x1xf32>
    %16 = math.rsqrt %15 : vector<48x1xf32>
    %17 = vector.broadcast %16 : vector<48x1xf32> to vector<48x32xf32>
    %18 = arith.mulf %13, %17 : vector<48x32xf32>
    %c0_5 = arith.constant 0 : index
    %c0_6 = arith.constant 0 : index
    %19 = vector.load %arg3[%c0_5, %c0_6] : memref<1x32xf32, #tpu.memory_space<vmem>>, vector<1x32xf32>
    %20 = vector.broadcast %19 : vector<1x32xf32> to vector<48x32xf32>
    %21 = arith.mulf %18, %20 : vector<48x32xf32>
    %c0_7 = arith.constant 0 : index
    %c0_8 = arith.constant 0 : index
    %22 = vector.load %arg4[%c0_7, %c0_8] : memref<1x32xf32, #tpu.memory_space<vmem>>, vector<1x32xf32>
    %23 = vector.broadcast %22 : vector<1x32xf32> to vector<48x32xf32>
    %24 = arith.addf %21, %23 : vector<48x32xf32>
    %25 = arith.truncf %24 : vector<48x32xf32> to vector<48x32xbf16>
    %c0_9 = arith.constant 0 : index
    %c0_10 = arith.constant 0 : index
    %26 = vector.load %arg5[%c0_9, %c0_10] : memref<32x128xbf16, #tpu.memory_space<vmem>>, vector<32x128xbf16>
    %cst_11 = arith.constant dense<0.000000e+00> : vector<48x128xf32>
    %27 = tpu.matmul %25, %26, %cst_11 {dimension_numbers = #tpu.dot_dimension_numbers<[1], [0], [0], [1], [0, 0, 1, 1], [], []>} : vector<48x32xbf16>, vector<32x128xbf16>, vector<48x128xf32> -> vector<48x128xf32>
    %c0_12 = arith.constant 0 : index
    %c0_13 = arith.constant 0 : index
    %28 = vector.load %arg6[%c0_12, %c0_13] : memref<48x128xf32, #tpu.memory_space<vmem>>, vector<48x128xf32>
    tpu.vector_store %arg6[%c0_12, %c0_13], %27 {strides = array<i32>} : memref<48x128xf32, #tpu.memory_space<vmem>>, vector<48x128xf32>,
    return
  }
  func.func @transform_0(%arg0: i32, %arg1: i32) -> (i32, i32) {
    %c0_i32 = arith.constant 0 : i32
    %c0_i32_0 = arith.constant 0 : i32
    return %arg0, %c0_i32 : i32, i32
  }
  func.func @transform_1(%arg0: i32, %arg1: i32) -> (i32, i32) {
    %c0_i32 = arith.constant 0 : i32
    %c0_i32_0 = arith.constant 0 : i32
    %c0_i32_1 = arith.constant 0 : i32
    return %c0_i32, %c0_i32_0 : i32, i32
  }
  func.func @transform_2(%arg0: i32, %arg1: i32) -> (i32, i32) {
    %c0_i32 = arith.constant 0 : i32
    %c0_i32_0 = arith.constant 0 : i32
    %c0_i32_1 = arith.constant 0 : i32
    return %c0_i32, %c0_i32_0 : i32, i32
  }
  func.func @transform_3(%arg0: i32, %arg1: i32) -> (i32, i32) {
    %c0_i32 = arith.constant 0 : i32
    %c0_i32_0 = arith.constant 0 : i32
    return %c0_i32, %arg1 : i32, i32
  }
  func.func @transform_4(%arg0: i32, %arg1: i32) -> (i32, i32) {
    %c0_i32 = arith.constant 0 : i32
    return %arg0, %arg1 : i32, i32
  }
}

module attributes {stable_mosaic.version = 11 : i64} {
  func.func @_attention_kernel(%arg0: i32, %arg1: memref<1x4x24x8xf32, #tpu.memory_space<vmem>>, %arg2: memref<1x4x24x8xf32, #tpu.memory_space<vmem>>, %arg3: memref<1x4x24x8xf32, #tpu.memory_space<vmem>>, %arg4: memref<1x4x24x8xf32, #tpu.memory_space<vmem>>) attributes {dimension_semantics = [#tpu.dimension_semantics<parallel>], iteration_bounds = array<i64: 2>, scalar_prefetch = 0 : i64, scratch_operands = 0 : i64, tpu.core_type = #tpu.core_type<tc>, window_params = [{transform_indices = @transform_0, window_bounds = array<i64: 1, 4, 24, 8>}, {transform_indices = @transform_1, window_bounds = array<i64: 1, 4, 24, 8>}, {transform_indices = @transform_2, window_bounds = array<i64: 1, 4, 24, 8>}, {transform_indices = @transform_3, window_bounds = array<i64: 1, 4, 24, 8>}]} {
    %c0 = arith.constant 0 : index
    %c0_0 = arith.constant 0 : index
    %c0_1 = arith.constant 0 : index
    %c0_2 = arith.constant 0 : index
    %0 = vector.load %arg1[%c0, %c0_0, %c0_1, %c0_2] : memref<1x4x24x8xf32, #tpu.memory_space<vmem>>, vector<1x4x24x8xf32>
    %1 = vector.shape_cast %0 : vector<1x4x24x8xf32> to vector<4x24x8xf32>
    %cst = arith.constant 0.353553385 : f32
    %2 = vector.broadcast %cst : f32 to vector<4x24x8xf32>
    %3 = arith.mulf %1, %2 : vector<4x24x8xf32>
    %4 = arith.truncf %3 : vector<4x24x8xf32> to vector<4x24x8xbf16>
    %c0_3 = arith.constant 0 : index
    %c0_4 = arith.constant 0 : index
    %c0_5 = arith.constant 0 : index
    %c0_6 = arith.constant 0 : index
    %5 = vector.load %arg2[%c0_3, %c0_4, %c0_5, %c0_6] : memref<1x4x24x8xf32, #tpu.memory_space<vmem>>, vector<1x4x24x8xf32>
    %6 = vector.shape_cast %5 : vector<1x4x24x8xf32> to vector<4x24x8xf32>
    %7 = arith.truncf %6 : vector<4x24x8xf32> to vector<4x24x8xbf16>
    %c0_7 = arith.constant 0 : index
    %c0_8 = arith.constant 0 : index
    %c0_9 = arith.constant 0 : index
    %c0_10 = arith.constant 0 : index
    %8 = vector.load %arg3[%c0_7, %c0_8, %c0_9, %c0_10] : memref<1x4x24x8xf32, #tpu.memory_space<vmem>>, vector<1x4x24x8xf32>
    %9 = vector.shape_cast %8 : vector<1x4x24x8xf32> to vector<4x24x8xf32>
    %10 = arith.truncf %9 : vector<4x24x8xf32> to vector<4x24x8xbf16>
    "tpu.trace_start"() <{level = 10 : i32, message = "hqd,hkd->hqk"}> : () -> ()
    %cst_11 = arith.constant dense<0.000000e+00> : vector<4x24x24xf32>
    %11 = tpu.matmul %4, %7, %cst_11 {dimension_numbers = #tpu.dot_dimension_numbers<[2], [2], [1], [1], [0, 0, 0, 1, 1, 1], [0], [0]>} : vector<4x24x8xbf16>, vector<4x24x8xbf16>, vector<4x24x24xf32> -> vector<4x24x24xf32>
    "tpu.trace_stop"() : () -> ()
    %12 = tpu.iota {dimensions = array<i32: 2>} : vector<4x24x24xi32>
    %c17_i32 = arith.constant 17 : i32
    %13 = vector.broadcast %c17_i32 : i32 to vector<4x24x24xi32>
    %14 = arith.cmpi slt, %12, %13 : vector<4x24x24xi32>
    %cst_12 = arith.constant -1.000000e+30 : f32
    %15 = vector.broadcast %cst_12 : f32 to vector<4x24x24xf32>
    %16 = arith.select %14, %11, %15 : vector<4x24x24xi1>, vector<4x24x24xf32>
    %cst_13 = arith.constant dense<0xFF800000> : vector<4x24xf32>
    %17 = vector.multi_reduction <maximumf>, %16, %cst_13 [2] : vector<4x24x24xf32> to vector<4x24xf32>
    %18 = vector.shape_cast %17 : vector<4x24xf32> to vector<4x24x1xf32>
    %19 = vector.broadcast %18 : vector<4x24x1xf32> to vector<4x24x24xf32>
    %20 = arith.subf %16, %19 : vector<4x24x24xf32>
    %21 = math.exp %20 : vector<4x24x24xf32>
    %cst_14 = arith.constant dense<0.000000e+00> : vector<4x24xf32>
    %22 = vector.multi_reduction <add>, %21, %cst_14 [2] : vector<4x24x24xf32> to vector<4x24xf32>
    %23 = vector.shape_cast %22 : vector<4x24xf32> to vector<4x24x1xf32>
    %24 = tpu.reciprocal %23 {approx = true} : vector<4x24x1xf32> -> vector<4x24x1xf32>
    %25 = vector.broadcast %24 : vector<4x24x1xf32> to vector<4x24x24xf32>
    %26 = arith.mulf %21, %25 : vector<4x24x24xf32>
    %27 = arith.truncf %26 : vector<4x24x24xf32> to vector<4x24x24xbf16>
    "tpu.trace_start"() <{level = 10 : i32, message = "hqk,hkd->hqd"}> : () -> ()
    %cst_15 = arith.constant dense<0.000000e+00> : vector<4x24x8xf32>
    %28 = tpu.matmul %27, %10, %cst_15 {dimension_numbers = #tpu.dot_dimension_numbers<[2], [1], [1], [2], [0, 0, 0, 1, 1, 2], [0], [0]>} : vector<4x24x24xbf16>, vector<4x24x8xbf16>, vector<4x24x8xf32> -> vector<4x24x8xf32>
    "tpu.trace_stop"() : () -> ()
    %c0_16 = arith.constant 0 : index
    %c0_17 = arith.constant 0 : index
    %c0_18 = arith.constant 0 : index
    %c0_19 = arith.constant 0 : index
    %29 = vector.load %arg4[%c0_16, %c0_17, %c0_18, %c0_19] : memref<1x4x24x8xf32, #tpu.memory_space<vmem>>, vector<1x4x24x8xf32>
    %30 = vector.shape_cast %29 : vector<1x4x24x8xf32> to vector<4x24x8xf32>
    %31 = vector.shape_cast %28 : vector<4x24x8xf32> to vector<1x4x24x8xf32>
    tpu.vector_store %arg4[%c0_16, %c0_17, %c0_18, %c0_19], %31 {strides = array<i32>} : memref<1x4x24x8xf32, #tpu.memory_space<vmem>>, vector<1x4x24x8xf32>,
    return
  }
  func.func @transform_0(%arg0: i32) -> (i32, i32, i32, i32) {
    %c0_i32 = arith.constant 0 : i32
    %c0_i32_0 = arith.constant 0 : i32
    %c0_i32_1 = arith.constant 0 : i32
    %c0_i32_2 = arith.constant 0 : i32
    return %arg0, %c0_i32, %c0_i32_0, %c0_i32_1 : i32, i32, i32, i32
  }
  func.func @transform_1(%arg0: i32) -> (i32, i32, i32, i32) {
    %c0_i32 = arith.constant 0 : i32
    %c0_i32_0 = arith.constant 0 : i32
    %c0_i32_1 = arith.constant 0 : i32
    %c0_i32_2 = arith.constant 0 : i32
    return %arg0, %c0_i32, %c0_i32_0, %c0_i32_1 : i32, i32, i32, i32
  }
  func.func @transform_2(%arg0: i32) -> (i32, i32, i32, i32) {
    %c0_i32 = arith.constant 0 : i32
    %c0_i32_0 = arith.constant 0 : i32
    %c0_i32_1 = arith.constant 0 : i32
    %c0_i32_2 = arith.constant 0 : i32
    return %arg0, %c0_i32, %c0_i32_0, %c0_i32_1 : i32, i32, i32, i32
  }
  func.func @transform_3(%arg0: i32) -> (i32, i32, i32, i32) {
    %c0_i32 = arith.constant 0 : i32
    %c0_i32_0 = arith.constant 0 : i32
    %c0_i32_1 = arith.constant 0 : i32
    %c0_i32_2 = arith.constant 0 : i32
    return %arg0, %c0_i32, %c0_i32_0, %c0_i32_1 : i32, i32, i32, i32
  }
}

module attributes {stable_mosaic.version = 11 : i64} {
  func.func @_matmul_kernel(%arg0: i32, %arg1: i32, %arg2: i32, %arg3: memref<48x128xbf16, #tpu.memory_space<vmem>>, %arg4: memref<128x128xbf16, #tpu.memory_space<vmem>>, %arg5: memref<1x128xf32, #tpu.memory_space<vmem>>, %arg6: memref<48x128xf32, #tpu.memory_space<vmem>>, %arg7: memref<48x128xf32, #tpu.memory_space<vmem>>) attributes {dimension_semantics = [#tpu.dimension_semantics<parallel>, #tpu.dimension_semantics<parallel>, #tpu.dimension_semantics<arbitrary>], iteration_bounds = array<i64: 1, 1, 1>, scalar_prefetch = 0 : i64, scratch_operands = 1 : i64, tpu.core_type = #tpu.core_type<tc>, window_params = [{transform_indices = @transform_0, window_bounds = array<i64: 48, 128>}, {transform_indices = @transform_1, window_bounds = array<i64: 128, 128>}, {transform_indices = @transform_2, window_bounds = array<i64: 1, 128>}, {transform_indices = @transform_3, window_bounds = array<i64: 48, 128>}]} {
    %c0_i32 = arith.constant 0 : i32
    %0 = arith.cmpi eq, %arg2, %c0_i32 : i32
    %1 = arith.extui %0 : i1 to i32
    %c0_i32_0 = arith.constant 0 : i32
    %2 = arith.cmpi ne, %1, %c0_i32_0 : i32
    scf.if %2 {
      %cst_10 = arith.constant 0.000000e+00 : f32
      %12 = vector.broadcast %cst_10 : f32 to vector<48x128xf32>
      %c0_11 = arith.constant 0 : index
      %c0_12 = arith.constant 0 : index
      %13 = vector.load %arg7[%c0_11, %c0_12] : memref<48x128xf32, #tpu.memory_space<vmem>>, vector<48x128xf32>
      tpu.vector_store %arg7[%c0_11, %c0_12], %12 {strides = array<i32>} : memref<48x128xf32, #tpu.memory_space<vmem>>, vector<48x128xf32>,
    } else {
    }
    %c0 = arith.constant 0 : index
    %c0_1 = arith.constant 0 : index
    %3 = vector.load %arg7[%c0, %c0_1] : memref<48x128xf32, #tpu.memory_space<vmem>>, vector<48x128xf32>
    %c0_2 = arith.constant 0 : index
    %c0_3 = arith.constant 0 : index
    %4 = vector.load %arg3[%c0_2, %c0_3] : memref<48x128xbf16, #tpu.memory_space<vmem>>, vector<48x128xbf16>
    %c0_4 = arith.constant 0 : index
    %c0_5 = arith.constant 0 : index
    %5 = vector.load %arg4[%c0_4, %c0_5] : memref<128x128xbf16, #tpu.memory_space<vmem>>, vector<128x128xbf16>
    %cst = arith.constant dense<0.000000e+00> : vector<48x128xf32>
    %6 = tpu.matmul %4, %5, %cst {dimension_numbers = #tpu.dot_dimension_numbers<[1], [0], [0], [1], [0, 0, 1, 1], [], []>} : vector<48x128xbf16>, vector<128x128xbf16>, vector<48x128xf32> -> vector<48x128xf32>
    %7 = arith.addf %3, %6 : vector<48x128xf32>
    %c0_6 = arith.constant 0 : index
    %c0_7 = arith.constant 0 : index
    %8 = vector.load %arg7[%c0_6, %c0_7] : memref<48x128xf32, #tpu.memory_space<vmem>>, vector<48x128xf32>
    tpu.vector_store %arg7[%c0_6, %c0_7], %7 {strides = array<i32>} : memref<48x128xf32, #tpu.memory_space<vmem>>, vector<48x128xf32>,
    %c0_i32_8 = arith.constant 0 : i32
    %9 = arith.cmpi eq, %arg2, %c0_i32_8 : i32
    %10 = arith.extui %9 : i1 to i32
    %c0_i32_9 = arith.constant 0 : i32
    %11 = arith.cmpi ne, %10, %c0_i32_9 : i32
    scf.if %11 {
      %c0_10 = arith.constant 0 : index
      %c0_11 = arith.constant 0 : index
      %12 = vector.load %arg7[%c0_10, %c0_11] : memref<48x128xf32, #tpu.memory_space<vmem>>, vector<48x128xf32>
      %c0_12 = arith.constant 0 : index
      %c0_13 = arith.constant 0 : index
      %13 = vector.load %arg5[%c0_12, %c0_13] : memref<1x128xf32, #tpu.memory_space<vmem>>, vector<1x128xf32>
      %14 = vector.broadcast %13 : vector<1x128xf32> to vector<48x128xf32>
      %15 = arith.addf %12, %14 : vector<48x128xf32>
      %c0_14 = arith.constant 0 : index
      %c0_15 = arith.constant 0 : index
      %16 = vector.load %arg6[%c0_14, %c0_15] : memref<48x128xf32, #tpu.memory_space<vmem>>, vector<48x128xf32>
      tpu.vector_store %arg6[%c0_14, %c0_15], %15 {strides = array<i32>} : memref<48x128xf32, #tpu.memory_space<vmem>>, vector<48x128xf32>,
    } else {
    }
    return
  }
  func.func @transform_0(%arg0: i32, %arg1: i32, %arg2: i32) -> (i32, i32) {
    %c0_i32 = arith.constant 0 : i32
    return %arg0, %arg2 : i32, i32
  }
  func.func @transform_1(%arg0: i32, %arg1: i32, %arg2: i32) -> (i32, i32) {
    %c0_i32 = arith.constant 0 : i32
    return %arg2, %arg1 : i32, i32
  }
  func.func @transform_2(%arg0: i32, %arg1: i32, %arg2: i32) -> (i32, i32) {
    %c0_i32 = arith.constant 0 : i32
    %c0_i32_0 = arith.constant 0 : i32
    return %c0_i32, %arg1 : i32, i32
  }
  func.func @transform_3(%arg0: i32, %arg1: i32, %arg2: i32) -> (i32, i32) {
    %c0_i32 = arith.constant 0 : i32
    return %arg0, %arg1 : i32, i32
  }
}

module attributes {stable_mosaic.version = 11 : i64} {
  func.func @_matmul_ln_kernel(%arg0: i32, %arg1: i32, %arg2: memref<48x32xf32, #tpu.memory_space<vmem>>, %arg3: memref<1x32xf32, #tpu.memory_space<vmem>>, %arg4: memref<1x32xf32, #tpu.memory_space<vmem>>, %arg5: memref<32x128xbf16, #tpu.memory_space<vmem>>, %arg6: memref<1x128xf32, #tpu.memory_space<vmem>>, %arg7: memref<48x128xf32, #tpu.memory_space<vmem>>) attributes {dimension_semantics = [#tpu.dimension_semantics<parallel>, #tpu.dimension_semantics<parallel>], iteration_bounds = array<i64: 1, 1>, scalar_prefetch = 0 : i64, scratch_operands = 0 : i64, tpu.core_type = #tpu.core_type<tc>, window_params = [{transform_indices = @transform_0, window_bounds = array<i64: 48, 32>}, {pipeline_mode = #tpu.pipeline_mode<synchronous>, transform_indices = @transform_1, window_bounds = array<i64: 1, 32>}, {pipeline_mode = #tpu.pipeline_mode<synchronous>, transform_indices = @transform_2, window_bounds = array<i64: 1, 32>}, {transform_indices = @transform_3, window_bounds = array<i64: 32, 128>}, {transform_indices = @transform_4, window_bounds = array<i64: 1, 128>}, {transform_indices = @transform_5, window_bounds = array<i64: 48, 128>}]} {
    %c0 = arith.constant 0 : index
    %c0_0 = arith.constant 0 : index
    %0 = vector.load %arg2[%c0, %c0_0] : memref<48x32xf32, #tpu.memory_space<vmem>>, vector<48x32xf32>
    %cst = arith.constant dense<0.000000e+00> : vector<48xf32>
    %1 = vector.multi_reduction <add>, %0, %cst [1] : vector<48x32xf32> to vector<48xf32>
    %2 = vector.shape_cast %1 : vector<48xf32> to vector<48x1xf32>
    %cst_1 = arith.constant 3.200000e+01 : f32
    %3 = vector.broadcast %cst_1 : f32 to vector<48x1xf32>
    %4 = arith.divf %2, %3 : vector<48x1xf32>
    %5 = vector.broadcast %4 : vector<48x1xf32> to vector<48x32xf32>
    %6 = arith.subf %0, %5 : vector<48x32xf32>
    %7 = arith.mulf %6, %6 : vector<48x32xf32>
    %cst_2 = arith.constant dense<0.000000e+00> : vector<48xf32>
    %8 = vector.multi_reduction <add>, %7, %cst_2 [1] : vector<48x32xf32> to vector<48xf32>
    %9 = vector.shape_cast %8 : vector<48xf32> to vector<48x1xf32>
    %cst_3 = arith.constant 3.200000e+01 : f32
    %10 = vector.broadcast %cst_3 : f32 to vector<48x1xf32>
    %11 = arith.divf %9, %10 : vector<48x1xf32>
    %12 = vector.broadcast %4 : vector<48x1xf32> to vector<48x32xf32>
    %13 = arith.subf %0, %12 : vector<48x32xf32>
    %cst_4 = arith.constant 9.99999974E-6 : f32
    %14 = vector.broadcast %cst_4 : f32 to vector<48x1xf32>
    %15 = arith.addf %11, %14 : vector<48x1xf32>
    %16 = math.rsqrt %15 : vector<48x1xf32>
    %17 = vector.broadcast %16 : vector<48x1xf32> to vector<48x32xf32>
    %18 = arith.mulf %13, %17 : vector<48x32xf32>
    %c0_5 = arith.constant 0 : index
    %c0_6 = arith.constant 0 : index
    %19 = vector.load %arg3[%c0_5, %c0_6] : memref<1x32xf32, #tpu.memory_space<vmem>>, vector<1x32xf32>
    %20 = vector.broadcast %19 : vector<1x32xf32> to vector<48x32xf32>
    %21 = arith.mulf %18, %20 : vector<48x32xf32>
    %c0_7 = arith.constant 0 : index
    %c0_8 = arith.constant 0 : index
    %22 = vector.load %arg4[%c0_7, %c0_8] : memref<1x32xf32, #tpu.memory_space<vmem>>, vector<1x32xf32>
    %23 = vector.broadcast %22 : vector<1x32xf32> to vector<48x32xf32>
    %24 = arith.addf %21, %23 : vector<48x32xf32>
    %25 = arith.truncf %24 : vector<48x32xf32> to vector<48x32xbf16>
    %c0_9 = arith.constant 0 : index
    %c0_10 = arith.constant 0 : index
    %26 = vector.load %arg5[%c0_9, %c0_10] : memref<32x128xbf16, #tpu.memory_space<vmem>>, vector<32x128xbf16>
    %cst_11 = arith.constant dense<0.000000e+00> : vector<48x128xf32>
    %27 = tpu.matmul %25, %26, %cst_11 {dimension_numbers = #tpu.dot_dimension_numbers<[1], [0], [0], [1], [0, 0, 1, 1], [], []>} : vector<48x32xbf16>, vector<32x128xbf16>, vector<48x128xf32> -> vector<48x128xf32>
    %c0_12 = arith.constant 0 : index
    %c0_13 = arith.constant 0 : index
    %28 = vector.load %arg6[%c0_12, %c0_13] : memref<1x128xf32, #tpu.memory_space<vmem>>, vector<1x128xf32>
    %29 = vector.broadcast %28 : vector<1x128xf32> to vector<48x128xf32>
    %30 = arith.addf %27, %29 : vector<48x128xf32>
    %cst_14 = arith.constant 0.000000e+00 : f32
    %31 = vector.broadcast %cst_14 : f32 to vector<48x128xf32>
    %32 = arith.maximumf %30, %31 : vector<48x128xf32>
    %c0_15 = arith.constant 0 : index
    %c0_16 = arith.constant 0 : index
    %33 = vector.load %arg7[%c0_15, %c0_16] : memref<48x128xf32, #tpu.memory_space<vmem>>, vector<48x128xf32>
    tpu.vector_store %arg7[%c0_15, %c0_16], %32 {strides = array<i32>} : memref<48x128xf32, #tpu.memory_space<vmem>>, vector<48x128xf32>,
    return
  }
  func.func @transform_0(%arg0: i32, %arg1: i32) -> (i32, i32) {
    %c0_i32 = arith.constant 0 : i32
    %c0_i32_0 = arith.constant 0 : i32
    return %arg0, %c0_i32 : i32, i32
  }
  func.func @transform_1(%arg0: i32, %arg1: i32) -> (i32, i32) {
    %c0_i32 = arith.constant 0 : i32
    %c0_i32_0 = arith.constant 0 : i32
    %c0_i32_1 = arith.constant 0 : i32
    return %c0_i32, %c0_i32_0 : i32, i32
  }
  func.func @transform_2(%arg0: i32, %arg1: i32) -> (i32, i32) {
    %c0_i32 = arith.constant 0 : i32
    %c0_i32_0 = arith.constant 0 : i32
    %c0_i32_1 = arith.constant 0 : i32
    return %c0_i32, %c0_i32_0 : i32, i32
  }
  func.func @transform_3(%arg0: i32, %arg1: i32) -> (i32, i32) {
    %c0_i32 = arith.constant 0 : i32
    %c0_i32_0 = arith.constant 0 : i32
    return %c0_i32, %arg1 : i32, i32
  }
  func.func @transform_4(%arg0: i32, %arg1: i32) -> (i32, i32) {
    %c0_i32 = arith.constant 0 : i32
    %c0_i32_0 = arith.constant 0 : i32
    return %c0_i32, %arg1 : i32, i32
  }
  func.func @transform_5(%arg0: i32, %arg1: i32) -> (i32, i32) {
    %c0_i32 = arith.constant 0 : i32
    return %arg0, %arg1 : i32, i32
  }
}

module attributes {stable_mosaic.version = 11 : i64} {
  func.func @_matmul_ln_kernel(%arg0: i32, %arg1: i32, %arg2: memref<8x32xf32, #tpu.memory_space<vmem>>, %arg3: memref<1x32xf32, #tpu.memory_space<vmem>>, %arg4: memref<1x32xf32, #tpu.memory_space<vmem>>, %arg5: memref<32x128xbf16, #tpu.memory_space<vmem>>, %arg6: memref<1x128xf32, #tpu.memory_space<vmem>>, %arg7: memref<8x128xf32, #tpu.memory_space<vmem>>) attributes {dimension_semantics = [#tpu.dimension_semantics<parallel>, #tpu.dimension_semantics<parallel>], iteration_bounds = array<i64: 1, 1>, scalar_prefetch = 0 : i64, scratch_operands = 0 : i64, tpu.core_type = #tpu.core_type<tc>, window_params = [{transform_indices = @transform_0, window_bounds = array<i64: 8, 32>}, {pipeline_mode = #tpu.pipeline_mode<synchronous>, transform_indices = @transform_1, window_bounds = array<i64: 1, 32>}, {pipeline_mode = #tpu.pipeline_mode<synchronous>, transform_indices = @transform_2, window_bounds = array<i64: 1, 32>}, {transform_indices = @transform_3, window_bounds = array<i64: 32, 128>}, {transform_indices = @transform_4, window_bounds = array<i64: 1, 128>}, {transform_indices = @transform_5, window_bounds = array<i64: 8, 128>}]} {
    %c0 = arith.constant 0 : index
    %c0_0 = arith.constant 0 : index
    %0 = vector.load %arg2[%c0, %c0_0] : memref<8x32xf32, #tpu.memory_space<vmem>>, vector<8x32xf32>
    %cst = arith.constant dense<0.000000e+00> : vector<8xf32>
    %1 = vector.multi_reduction <add>, %0, %cst [1] : vector<8x32xf32> to vector<8xf32>
    %2 = vector.shape_cast %1 : vector<8xf32> to vector<8x1xf32>
    %cst_1 = arith.constant 3.200000e+01 : f32
    %3 = vector.broadcast %cst_1 : f32 to vector<8x1xf32>
    %4 = arith.divf %2, %3 : vector<8x1xf32>
    %5 = vector.broadcast %4 : vector<8x1xf32> to vector<8x32xf32>
    %6 = arith.subf %0, %5 : vector<8x32xf32>
    %7 = arith.mulf %6, %6 : vector<8x32xf32>
    %cst_2 = arith.constant dense<0.000000e+00> : vector<8xf32>
    %8 = vector.multi_reduction <add>, %7, %cst_2 [1] : vector<8x32xf32> to vector<8xf32>
    %9 = vector.shape_cast %8 : vector<8xf32> to vector<8x1xf32>
    %cst_3 = arith.constant 3.200000e+01 : f32
    %10 = vector.broadcast %cst_3 : f32 to vector<8x1xf32>
    %11 = arith.divf %9, %10 : vector<8x1xf32>
    %12 = vector.broadcast %4 : vector<8x1xf32> to vector<8x32xf32>
    %13 = arith.subf %0, %12 : vector<8x32xf32>
    %cst_4 = arith.constant 9.99999974E-6 : f32
    %14 = vector.broadcast %cst_4 : f32 to vector<8x1xf32>
    %15 = arith.addf %11, %14 : vector<8x1xf32>
    %16 = math.rsqrt %15 : vector<8x1xf32>
    %17 = vector.broadcast %16 : vector<8x1xf32> to vector<8x32xf32>
    %18 = arith.mulf %13, %17 : vector<8x32xf32>
    %c0_5 = arith.constant 0 : index
    %c0_6 = arith.constant 0 : index
    %19 = vector.load %arg3[%c0_5, %c0_6] : memref<1x32xf32, #tpu.memory_space<vmem>>, vector<1x32xf32>
    %20 = vector.broadcast %19 : vector<1x32xf32> to vector<8x32xf32>
    %21 = arith.mulf %18, %20 : vector<8x32xf32>
    %c0_7 = arith.constant 0 : index
    %c0_8 = arith.constant 0 : index
    %22 = vector.load %arg4[%c0_7, %c0_8] : memref<1x32xf32, #tpu.memory_space<vmem>>, vector<1x32xf32>
    %23 = vector.broadcast %22 : vector<1x32xf32> to vector<8x32xf32>
    %24 = arith.addf %21, %23 : vector<8x32xf32>
    %25 = arith.truncf %24 : vector<8x32xf32> to vector<8x32xbf16>
    %c0_9 = arith.constant 0 : index
    %c0_10 = arith.constant 0 : index
    %26 = vector.load %arg5[%c0_9, %c0_10] : memref<32x128xbf16, #tpu.memory_space<vmem>>, vector<32x128xbf16>
    %cst_11 = arith.constant dense<0.000000e+00> : vector<8x128xf32>
    %27 = tpu.matmul %25, %26, %cst_11 {dimension_numbers = #tpu.dot_dimension_numbers<[1], [0], [0], [1], [0, 0, 1, 1], [], []>} : vector<8x32xbf16>, vector<32x128xbf16>, vector<8x128xf32> -> vector<8x128xf32>
    %c0_12 = arith.constant 0 : index
    %c0_13 = arith.constant 0 : index
    %28 = vector.load %arg6[%c0_12, %c0_13] : memref<1x128xf32, #tpu.memory_space<vmem>>, vector<1x128xf32>
    %29 = vector.broadcast %28 : vector<1x128xf32> to vector<8x128xf32>
    %30 = arith.addf %27, %29 : vector<8x128xf32>
    %c0_14 = arith.constant 0 : index
    %c0_15 = arith.constant 0 : index
    %31 = vector.load %arg7[%c0_14, %c0_15] : memref<8x128xf32, #tpu.memory_space<vmem>>, vector<8x128xf32>
    tpu.vector_store %arg7[%c0_14, %c0_15], %30 {strides = array<i32>} : memref<8x128xf32, #tpu.memory_space<vmem>>, vector<8x128xf32>,
    return
  }
  func.func @transform_0(%arg0: i32, %arg1: i32) -> (i32, i32) {
    %c0_i32 = arith.constant 0 : i32
    %c0_i32_0 = arith.constant 0 : i32
    return %arg0, %c0_i32 : i32, i32
  }
  func.func @transform_1(%arg0: i32, %arg1: i32) -> (i32, i32) {
    %c0_i32 = arith.constant 0 : i32
    %c0_i32_0 = arith.constant 0 : i32
    %c0_i32_1 = arith.constant 0 : i32
    return %c0_i32, %c0_i32_0 : i32, i32
  }
  func.func @transform_2(%arg0: i32, %arg1: i32) -> (i32, i32) {
    %c0_i32 = arith.constant 0 : i32
    %c0_i32_0 = arith.constant 0 : i32
    %c0_i32_1 = arith.constant 0 : i32
    return %c0_i32, %c0_i32_0 : i32, i32
  }
  func.func @transform_3(%arg0: i32, %arg1: i32) -> (i32, i32) {
    %c0_i32 = arith.constant 0 : i32
    %c0_i32_0 = arith.constant 0 : i32
    return %c0_i32, %arg1 : i32, i32
  }
  func.func @transform_4(%arg0: i32, %arg1: i32) -> (i32, i32) {
    %c0_i32 = arith.constant 0 : i32
    %c0_i32_0 = arith.constant 0 : i32
    return %c0_i32, %arg1 : i32, i32
  }
  func.func @transform_5(%arg0: i32, %arg1: i32) -> (i32, i32) {
    %c0_i32 = arith.constant 0 : i32
    return %arg0, %arg1 : i32, i32
  }
}

</mosaic_0001>

<llo_original>
// kernel: vit_forward.16
$region0: #{vit_forward.16}
  #allocation0 [shape = 'u32[]', space=smem, size = 0x4, offset = 0x4, fixed_abs, tag = 'smem constant byte address 0x4 - core index']
  #allocation1 [shape = 'u32[72,128]{1,0:T(1,128)}', space=vmem, size = 0x9000, scoped, tag = 'internal scratch']
  #allocation2 [shape = 'f32[256,128]{1,0:T(8,128)}', space=vmem, size = 0x20000, scoped, tag = 'scratch operand']
  %s0 = inlined_call_operand.vmem [shape: bf16[512,128], index: 0, kind: input, shape index: {}]
  %s1 = inlined_call_operand.vmem [shape: bf16[128,128], index: 1, kind: input, shape index: {}]
  %s2 = inlined_call_operand.vmem [shape: f32[1,128], index: 2, kind: input, shape index: {}]
  %s3 = inlined_call_operand.vmem [shape: f32[512,128], index: 3, kind: output, shape index: {}]
  %s4 = sld [smem:[#allocation0]]
  $region53: #{vit_forward.16} parent=0
    _
  %s6 = ssub.s32 1, %s4
  %s7 = scalar_select 0, %s6, %s4
  loop: start=0, step=1, limit=4
  $region2: #{vit_forward.16} parent=0 // loop_pre_header
    _
  $region3: #{vit_forward.16} parent=0 // loop_header
    %s9 = sphi 0, %s13
    %p10 = scmp.ge.s32.totalorder %s9, 4
    %s16 = sphi 0, %s35
    %s17 = sphi 0, %s31
    %s18 = sphi 0, %s27
    %s19 = sphi 0, %s16
    %s20 = sphi 0, %s17
    %s21 = sphi 0, %s18
    %s22 = sphi 0, %s19
    %s23 = sphi 0, %s20
    %s24 = sphi 0, %s21
    %s40 = sphi 0, %s42
    %s43 = sphi 0, %s40
    %s44 = sphi 0, %s43
    %s60 = sphi 0, %s44
    %s68 = sphi 0, %s70
    %s71 = sphi 0, %s68
    %s72 = sphi 0, %s71
    %s88 = sphi 0, %s72
    %s94 = sphi 0, %s96
    %s97 = sphi 0, %s94
    %s98 = sphi 0, %s97
    %s114 = sphi 0, %s98
    %s122 = sphi 0, %s124
    %s125 = sphi 0, %s122
    %s126 = sphi 0, %s125
    %s142 = sphi 0, %s126
  $region4: #{vit_forward.16} parent=0 // loop_header_branch
    %12 = sbr.rel (%p10) target = $region8
  $region5: #{vit_forward.16} parent=0 // loop_body
    %s14 = ssub.s32 %s9, 1
    %s15 = ssub.s32 %s9, 2
    %s25 = sadd.s32 1, %s18
    %p26 = scmp.ge.s32.totalorder %s25, 1
    %s27 = scalar_select %p26, 0, %s25
    %s28 = sadd.s32 1, %s17
    %s29 = scalar_select %p26, %s28, %s17
    %p30 = scmp.ge.s32.totalorder %s29, 1
    %s31 = scalar_select %p30, 0, %s29
    %s32 = sadd.s32 1, %s16
    %s33 = scalar_select %p30, %s32, %s16
    %p34 = scmp.ge.s32.totalorder %s33, 2
    %s35 = scalar_select %p34, 0, %s33
    %s36 = ssub.s32 %s16, %s35
    %s37 = ssub.s32 %s18, %s27
    %s38 = sor.u32 %s36, %s37
    %p39 = scmp.eq.s32.totalorder %s38, 0
    %s41 = sadd.s32 %s40, 1
    %s42 = scalar_select %p39, %s40, %s41
    %p45 = pneg %p39
    %p46 = scmp.eq.s32.totalorder %s9, 1
    %p47 = por %p45, %p46
    %p48 = scmp.ne.s32.totalorder %s40, %s43
    %p49 = scmp.eq.s32.totalorder %s9, 0
    %p50 = por %p48, %p49
    %p51 = scmp.ne.s32.totalorder %s40, %s43
    %p52 = scmp.eq.s32.totalorder %s14, 1
    %p53 = por %p51, %p52
    %p54 = scmp.ne.s32.totalorder %s43, %s44
    %p55 = scmp.eq.s32.totalorder %s14, 0
    %p56 = por %p54, %p55
    %p57 = scmp.ne.s32.totalorder %s43, %s44
    %p58 = scmp.eq.s32.totalorder %s15, 1
    %p59 = por %p57, %p58
    %p61 = scmp.ne.s32.totalorder %s44, %s60
    %p62 = scmp.eq.s32.totalorder %s15, 0
    %p63 = por %p61, %p62
    %s64 = ssub.s32 %s18, %s27
    %s65 = ssub.s32 %s17, %s31
    %s66 = sor.u32 %s64, %s65
    %p67 = scmp.eq.s32.totalorder %s66, 0
    %s69 = sadd.s32 %s68, 1
    %s70 = scalar_select %p67, %s68, %s69
    %p73 = pneg %p67
    %p74 = scmp.eq.s32.totalorder %s9, 1
    %p75 = por %p73, %p74
    %p76 = scmp.ne.s32.totalorder %s68, %s71
    %p77 = scmp.eq.s32.totalorder %s9, 0
    %p78 = por %p76, %p77
    %p79 = scmp.ne.s32.totalorder %s68, %s71
    %p80 = scmp.eq.s32.totalorder %s14, 1
    %p81 = por %p79, %p80
    %p82 = scmp.ne.s32.totalorder %s71, %s72
    %p83 = scmp.eq.s32.totalorder %s14, 0
    %p84 = por %p82, %p83
    %p85 = scmp.ne.s32.totalorder %s71, %s72
    %p86 = scmp.eq.s32.totalorder %s15, 1
    %p87 = por %p85, %p86
    %p89 = scmp.ne.s32.totalorder %s72, %s88
    %p90 = scmp.eq.s32.totalorder %s15, 0
    %p91 = por %p89, %p90
    %s92 = ssub.s32 %s17, %s31
    %p93 = scmp.eq.s32.totalorder %s92, 0
    %s95 = sadd.s32 %s94, 1
    %s96 = scalar_select %p93, %s94, %s95
    %p99 = pneg %p93
    %p100 = scmp.eq.s32.totalorder %s9, 1
    %p101 = por %p99, %p100
    %p102 = scmp.ne.s32.totalorder %s94, %s97
    %p103 = scmp.eq.s32.totalorder %s9, 0
    %p104 = por %p102, %p103
    %p105 = scmp.ne.s32.totalorder %s94, %s97
    %p106 = scmp.eq.s32.totalorder %s14, 1
    %p107 = por %p105, %p106
    %p108 = scmp.ne.s32.totalorder %s97, %s98
    %p109 = scmp.eq.s32.totalorder %s14, 0
    %p110 = por %p108, %p109
    %p111 = scmp.ne.s32.totalorder %s97, %s98
    %p112 = scmp.eq.s32.totalorder %s15, 1
    %p113 = por %p111, %p112
    %p115 = scmp.ne.s32.totalorder %s98, %s114
    %p116 = scmp.eq.s32.totalorder %s15, 0
    %p117 = por %p115, %p116
    %s118 = ssub.s32 %s16, %s35
    %s119 = ssub.s32 %s17, %s31
    %s120 = sor.u32 %s118, %s119
    %p121 = scmp.eq.s32.totalorder %s120, 0
    %s123 = sadd.s32 %s122, 1
    %s124 = scalar_select %p121, %s122, %s123
    %p127 = pneg %p121
    %p128 = scmp.eq.s32.totalorder %s9, 1
    %p129 = por %p127, %p128
    %p130 = scmp.ne.s32.totalorder %s122, %s125
    %p131 = scmp.eq.s32.totalorder %s9, 0
    %p132 = por %p130, %p131
    %p133 = scmp.ne.s32.totalorder %s122, %s125
    %p134 = scmp.eq.s32.totalorder %s14, 1
    %p135 = por %p133, %p134
    %p136 = scmp.ne.s32.totalorder %s125, %s126
    %p137 = scmp.eq.s32.totalorder %s14, 0
    %p138 = por %p136, %p137
    %p139 = scmp.ne.s32.totalorder %s125, %s126
    %p140 = scmp.eq.s32.totalorder %s15, 1
    %p141 = por %p139, %p140
    %p143 = scmp.ne.s32.totalorder %s126, %s142
    %p144 = scmp.eq.s32.totalorder %s15, 0
    %p145 = por %p143, %p144
    %p146 = scmp.le.s32.totalorder 1, %s9
    %p147 = scmp.lt.s32.totalorder %s9, 3
    %p148 = pnand %p146, %p147
    %p149 = pneg %p148
    // Predicated region
    $region9: #{vit_forward.16} parent=5 // pred_check
      _
    $region10: #{vit_forward.16} parent=5 // pred_check_branch
      %151 = sbr.rel (%p148) target = $region12
    $region11: #{vit_forward.16} parent=5 // pred_region
      %s152 = ssub.s32 %s9, 1
      // Predicated region
      $region13: #{vit_forward.16} parent=11 // pred_check
        %p153 = pneg %p84
      $region14: #{vit_forward.16} parent=11 // pred_check_branch
        %155 = sbr.rel (%p153) target = $region16
      $region15: #{vit_forward.16} parent=11 // pred_region
        %s156 = smul.u32 16, %s21
        %p157 = scmp.lt.s32.totalorder %s156, 15
        %s158 = scalar_select %p157, %s156, 15
        %p159 = scmp.lt.s32.totalorder %s20, 0
        %s160 = scalar_select %p159, %s20, 0
        %s161 = sadd.s32 %s160, %s158
        %s162 = smul.addr %s161, 4
        %s163 = scalar_lea.vmem %s1, %s162
        %s164 = smul.u32 16, %s21
      $region16: #{vit_forward.16} parent=11 // pred_fallthru
        _
      // Predicated region
      $region17: #{vit_forward.16} parent=11 // pred_check
        %p165 = pneg %p110
      $region18: #{vit_forward.16} parent=11 // pred_check_branch
        %167 = sbr.rel (%p165) target = $region20
      $region19: #{vit_forward.16} parent=11 // pred_region
        %p168 = scmp.lt.s32.totalorder %s20, 0
        %s169 = scalar_select %p168, %s20, 0
        %s170 = scalar_lea.vmem %s2, %s169
      $region20: #{vit_forward.16} parent=11 // pred_fallthru
        _
    $region12: #{vit_forward.16} parent=5 // pred_fallthru
      _
    %p171 = scmp.lt.s32.totalorder %s9, 2
    // Predicated region
    $region21: #{vit_forward.16} parent=5 // pred_check
      %p172 = pneg %p171
    $region22: #{vit_forward.16} parent=5 // pred_check_branch
      %174 = sbr.rel (%p172) target = $region24
    $region23: #{vit_forward.16} parent=5 // pred_region
      // Predicated region
      $region25: #{vit_forward.16} parent=23 // pred_check
        %p175 = pneg %p50
      $region26: #{vit_forward.16} parent=23 // pred_check_branch
        %177 = sbr.rel (%p175) target = $region28
      $region27: #{vit_forward.16} parent=23 // pred_region
        %s178 = smul.u32 32, %s16
        %p179 = scmp.lt.s32.totalorder %s178, 63
        %s180 = scalar_select %p179, %s178, 63
        %p181 = scmp.lt.s32.totalorder %s18, 0
        %s182 = scalar_select %p181, %s18, 0
        %s183 = sadd.s32 %s182, %s180
        %s184 = smul.addr %s183, 4
        %s185 = scalar_lea.vmem %s0, %s184
        %s186 = smul.u32 32, %s16
      $region28: #{vit_forward.16} parent=23 // pred_fallthru
        _
    $region24: #{vit_forward.16} parent=5 // pred_fallthru
      _
    %p187 = scmp.le.s32.totalorder 1, %s9
    %p188 = scmp.lt.s32.totalorder %s9, 3
    %p189 = pnand %p187, %p188
    %p190 = pneg %p189
    // Predicated region
    $region29: #{vit_forward.16} parent=5 // pred_check
      _
    $region30: #{vit_forward.16} parent=5 // pred_check_branch
      %192 = sbr.rel (%p189) target = $region32
    $region31: #{vit_forward.16} parent=5 // pred_region
      %s193 = ssub.s32 %s9, 1
      %s194 = smul.u32 32, %s19
      %p195 = scmp.lt.s32.totalorder %s194, 63
      %s196 = scalar_select %p195, %s194, 63
      %p197 = scmp.lt.s32.totalorder %s21, 0
      %s198 = scalar_select %p197, %s21, 0
      %s199 = sadd.s32 %s198, %s196
      %s200 = smul.addr %s199, 4
      %s201 = scalar_lea.vmem %s0, %s200
      %p202 = pneg %p56
      %p203 = pneg %p53
      %s204 = smul.u32 16, %s21
      %p205 = scmp.lt.s32.totalorder %s204, 15
      %s206 = scalar_select %p205, %s204, 15
      %p207 = scmp.lt.s32.totalorder %s20, 0
      %s208 = scalar_select %p207, %s20, 0
      %s209 = sadd.s32 %s208, %s206
      %s210 = smul.addr %s209, 4
      %s211 = scalar_lea.vmem %s1, %s210
      %p212 = pneg %p84
      %p213 = pneg %p81
      %p214 = scmp.lt.s32.totalorder %s20, 0
      %s215 = scalar_select %p214, %s20, 0
      %s216 = scalar_lea.vmem %s2, %s215
      %p217 = pneg %p110
      %p218 = pneg %p107
      %p219 = pneg %p138
      %p220 = pneg %p135
      %s221 = smul.u32 32, %s19
      %p222 = scmp.lt.s32.totalorder %s221, 63
      %s223 = scalar_select %p222, %s221, 63
      %p224 = scmp.lt.s32.totalorder %s20, 0
      %s225 = scalar_select %p224, %s20, 0
      %s226 = sadd.s32 %s225, %s223
      %s227 = smul.addr %s226, 8
      %s228 = scalar_lea.vmem %s3, %s227
      %s229 = smul.u32 32, %s19
      %p230 = scmp.lt.s32.totalorder %s229, 63
      %s231 = scalar_select %p230, %s229, 63
      %p232 = scmp.lt.s32.totalorder %s21, 0
      %s233 = scalar_select %p232, %s21, 0
      %s234 = sadd.s32 %s233, %s231
      %s235 = smul.addr %s234, 4
      %s236 = scalar_lea.vmem %s0, %s235
      %s237 = smul.u32 32, %s19
      %s238 = smul.u32 16, %s21
      %p239 = scmp.lt.s32.totalorder %s238, 15
      %s240 = scalar_select %p239, %s238, 15
      %p241 = scmp.lt.s32.totalorder %s20, 0
      %s242 = scalar_select %p241, %s20, 0
      %s243 = sadd.s32 %s242, %s240
      %s244 = smul.addr %s243, 4
      %s245 = scalar_lea.vmem %s1, %s244
      %s246 = smul.u32 16, %s21
      %p247 = scmp.lt.s32.totalorder %s20, 0
      %s248 = scalar_select %p247, %s20, 0
      %s249 = scalar_lea.vmem %s2, %s248
      %s250 = smul.u32 32, %s19
      %p251 = scmp.lt.s32.totalorder %s250, 63
      %s252 = scalar_select %p251, %s250, 63
      %p253 = scmp.lt.s32.totalorder %s20, 0
      %s254 = scalar_select %p253, %s20, 0
      %s255 = sadd.s32 %s254, %s252
      %s256 = smul.addr %s255, 8
      %s257 = scalar_lea.vmem %s3, %s256
      %s258 = smul.u32 32, %s19
      %p259 = scmp.eq.s32.totalorder %s21, 0
      // Predicated region
      $region33: #{vit_forward.16} parent=31 // pred_check
        %p260 = pneg %p259
      $region34: #{vit_forward.16} parent=31 // pred_check_branch
        %262 = sbr.rel (%p260) target = $region36
      $region35: #{vit_forward.16} parent=31 // pred_region
        %263 = vst [vmem:[#allocation2] sm:$0xff] 0.0
        %264 = vst [vmem:[#allocation2 + $0x8] sm:$0xff] 0.0
        %265 = vst [vmem:[#allocation2 + $0x10] sm:$0xff] 0.0
        %266 = vst [vmem:[#allocation2 + $0x18] sm:$0xff] 0.0
        %267 = vst [vmem:[#allocation2 + $0x20] sm:$0xff] 0.0
        %268 = vst [vmem:[#allocation2 + $0x28] sm:$0xff] 0.0
        %269 = vst [vmem:[#allocation2 + $0x30] sm:$0xff] 0.0
        %270 = vst [vmem:[#allocation2 + $0x38] sm:$0xff] 0.0
        %271 = vst [vmem:[#allocation2 + $0x40] sm:$0xff] 0.0
        %272 = vst [vmem:[#allocation2 + $0x48] sm:$0xff] 0.0
        %273 = vst [vmem:[#allocation2 + $0x50] sm:$0xff] 0.0
        %274 = vst [vmem:[#allocation2 + $0x58] sm:$0xff] 0.0
        %275 = vst [vmem:[#allocation2 + $0x60] sm:$0xff] 0.0
        %276 = vst [vmem:[#allocation2 + $0x68] sm:$0xff] 0.0
        %277 = vst [vmem:[#allocation2 + $0x70] sm:$0xff] 0.0
        %278 = vst [vmem:[#allocation2 + $0x78] sm:$0xff] 0.0
        %279 = vst [vmem:[#allocation2 + $0x80] sm:$0xff] 0.0
        %280 = vst [vmem:[#allocation2 + $0x88] sm:$0xff] 0.0
        %281 = vst [vmem:[#allocation2 + $0x90] sm:$0xff] 0.0
        %282 = vst [vmem:[#allocation2 + $0x98] sm:$0xff] 0.0
        %283 = vst [vmem:[#allocation2 + $0xa0] sm:$0xff] 0.0
        %284 = vst [vmem:[#allocation2 + $0xa8] sm:$0xff] 0.0
        %285 = vst [vmem:[#allocation2 + $0xb0] sm:$0xff] 0.0
        %286 = vst [vmem:[#allocation2 + $0xb8] sm:$0xff] 0.0
        %287 = vst [vmem:[#allocation2 + $0xc0] sm:$0xff] 0.0
        %288 = vst [vmem:[#allocation2 + $0xc8] sm:$0xff] 0.0
        %289 = vst [vmem:[#allocation2 + $0xd0] sm:$0xff] 0.0
        %290 = vst [vmem:[#allocation2 + $0xd8] sm:$0xff] 0.0
        %291 = vst [vmem:[#allocation2 + $0xe0] sm:$0xff] 0.0
        %292 = vst [vmem:[#allocation2 + $0xe8] sm:$0xff] 0.0
        %293 = vst [vmem:[#allocation2 + $0xf0] sm:$0xff] 0.0
        %294 = vst [vmem:[#allocation2 + $0xf8] sm:$0xff] 0.0
      $region36: #{vit_forward.16} parent=31 // pred_fallthru
        _
      %v295 = vld [vmem:[#allocation2] sm:$0xff]
      %v296 = vld [vmem:[#allocation2 + $0x8] sm:$0xff]
      %v297 = vld [vmem:[#allocation2 + $0x10] sm:$0xff]
      %v298 = vld [vmem:[#allocation2 + $0x18] sm:$0xff]
      %v299 = vld [vmem:[#allocation2 + $0x20] sm:$0xff]
      %v300 = vld [vmem:[#allocation2 + $0x28] sm:$0xff]
      %v301 = vld [vmem:[#allocation2 + $0x30] sm:$0xff]
      %v302 = vld [vmem:[#allocation2 + $0x38] sm:$0xff]
      %v303 = vld [vmem:[#allocation2 + $0x40] sm:$0xff]
      %v304 = vld [vmem:[#allocation2 + $0x48] sm:$0xff]
      %v305 = vld [vmem:[#allocation2 + $0x50] sm:$0xff]
      %v306 = vld [vmem:[#allocation2 + $0x58] sm:$0xff]
      %v307 = vld [vmem:[#allocation2 + $0x60] sm:$0xff]
      %v308 = vld [vmem:[#allocation2 + $0x68] sm:$0xff]
      %v309 = vld [vmem:[#allocation2 + $0x70] sm:$0xff]
      %v310 = vld [vmem:[#allocation2 + $0x78] sm:$0xff]
      %v311 = vld [vmem:[#allocation2 + $0x80] sm:$0xff]
      %v312 = vld [vmem:[#allocation2 + $0x88] sm:$0xff]
      %v313 = vld [vmem:[#allocation2 + $0x90] sm:$0xff]
      %v314 = vld [vmem:[#allocation2 + $0x98] sm:$0xff]
      %v315 = vld [vmem:[#allocation2 + $0xa0] sm:$0xff]
      %v316 = vld [vmem:[#allocation2 + $0xa8] sm:$0xff]
      %v317 = vld [vmem:[#allocation2 + $0xb0] sm:$0xff]
      %v318 = vld [vmem:[#allocation2 + $0xb8] sm:$0xff]
      %v319 = vld [vmem:[#allocation2 + $0xc0] sm:$0xff]
      %v320 = vld [vmem:[#allocation2 + $0xc8] sm:$0xff]
      %v321 = vld [vmem:[#allocation2 + $0xd0] sm:$0xff]
      %v322 = vld [vmem:[#allocation2 + $0xd8] sm:$0xff]
      %v323 = vld [vmem:[#allocation2 + $0xe0] sm:$0xff]
      %v324 = vld [vmem:[#allocation2 + $0xe8] sm:$0xff]
      %v325 = vld [vmem:[#allocation2 + $0xf0] sm:$0xff]
      %v326 = vld [vmem:[#allocation2 + $0xf8] sm:$0xff]
      %v327 = vld [vmem:[%s236] sm:$0xf]
      %v328 = vld [vmem:[%s236 + $0x4] sm:$0xf]
      %v329 = vld [vmem:[%s236 + $0x8] sm:$0xf]
      %v330 = vld [vmem:[%s236 + $0xc] sm:$0xf]
      %v331 = vld [vmem:[%s236 + $0x10] sm:$0xf]
      %v332 = vld [vmem:[%s236 + $0x14] sm:$0xf]
      %v333 = vld [vmem:[%s236 + $0x18] sm:$0xf]
      %v334 = vld [vmem:[%s236 + $0x1c] sm:$0xf]
      %v335 = vld [vmem:[%s236 + $0x20] sm:$0xf]
      %v336 = vld [vmem:[%s236 + $0x24] sm:$0xf]
      %v337 = vld [vmem:[%s236 + $0x28] sm:$0xf]
      %v338 = vld [vmem:[%s236 + $0x2c] sm:$0xf]
      %v339 = vld [vmem:[%s236 + $0x30] sm:$0xf]
      %v340 = vld [vmem:[%s236 + $0x34] sm:$0xf]
      %v341 = vld [vmem:[%s236 + $0x38] sm:$0xf]
      %v342 = vld [vmem:[%s236 + $0x3c] sm:$0xf]
      %v343 = vld [vmem:[%s236 + $0x40] sm:$0xf]
      %v344 = vld [vmem:[%s236 + $0x44] sm:$0xf]
      %v345 = vld [vmem:[%s236 + $0x48] sm:$0xf]
      %v346 = vld [vmem:[%s236 + $0x4c] sm:$0xf]
      %v347 = vld [vmem:[%s236 + $0x50] sm:$0xf]
      %v348 = vld [vmem:[%s236 + $0x54] sm:$0xf]
      %v349 = vld [vmem:[%s236 + $0x58] sm:$0xf]
      %v350 = vld [vmem:[%s236 + $0x5c] sm:$0xf]
      %v351 = vld [vmem:[%s236 + $0x60] sm:$0xf]
      %v352 = vld [vmem:[%s236 + $0x64] sm:$0xf]
      %v353 = vld [vmem:[%s236 + $0x68] sm:$0xf]
      %v354 = vld [vmem:[%s236 + $0x6c] sm:$0xf]
      %v355 = vld [vmem:[%s236 + $0x70] sm:$0xf]
      %v356 = vld [vmem:[%s236 + $0x74] sm:$0xf]
      %v357 = vld [vmem:[%s236 + $0x78] sm:$0xf]
      %v358 = vld [vmem:[%s236 + $0x7c] sm:$0xf]
      %v359 = vld [vmem:[%s245] sm:$0xf]
      %v360 = vld [vmem:[%s245 + $0x4] sm:$0xf]
      %v361 = vld [vmem:[%s245 + $0x8] sm:$0xf]
      %v362 = vld [vmem:[%s245 + $0xc] sm:$0xf]
      %v363 = vld [vmem:[%s245 + $0x10] sm:$0xf]
      %v364 = vld [vmem:[%s245 + $0x14] sm:$0xf]
      %v365 = vld [vmem:[%s245 + $0x18] sm:$0xf]
      %v366 = vld [vmem:[%s245 + $0x1c] sm:$0xf]
      %v367 = vld [vmem:[%s245 + $0x20] sm:$0xf]
      %v368 = vld [vmem:[%s245 + $0x24] sm:$0xf]
      %v369 = vld [vmem:[%s245 + $0x28] sm:$0xf]
      %v370 = vld [vmem:[%s245 + $0x2c] sm:$0xf]
      %v371 = vld [vmem:[%s245 + $0x30] sm:$0xf]
      %v372 = vld [vmem:[%s245 + $0x34] sm:$0xf]
      %v373 = vld [vmem:[%s245 + $0x38] sm:$0xf]
      %v374 = vld [vmem:[%s245 + $0x3c] sm:$0xf]
      %v407 = vunpack.c.l.b16 %v327
      %v408 = vunpack.c.l.b16 %v328
      %v409 = vunpack.c.l.b16 %v329
      %v410 = vunpack.c.l.b16 %v330
      %v411 = vunpack.c.l.b16 %v331
      %v412 = vunpack.c.l.b16 %v332
      %v413 = vunpack.c.l.b16 %v333
      %v414 = vunpack.c.l.b16 %v334
      %v415 = vunpack.c.l.b16 %v335
      %v416 = vunpack.c.l.b16 %v336
      %v417 = vunpack.c.l.b16 %v337
      %v418 = vunpack.c.l.b16 %v338
      %v419 = vunpack.c.l.b16 %v339
      %v420 = vunpack.c.l.b16 %v340
      %v421 = vunpack.c.l.b16 %v341
      %v422 = vunpack.c.l.b16 %v342
      %v423 = vunpack.c.l.b16 %v343
      %v424 = vunpack.c.l.b16 %v344
      %v425 = vunpack.c.l.b16 %v345
      %v426 = vunpack.c.l.b16 %v346
      %v427 = vunpack.c.l.b16 %v347
      %v428 = vunpack.c.l.b16 %v348
      %v429 = vunpack.c.l.b16 %v349
      %v430 = vunpack.c.l.b16 %v350
      %v431 = vunpack.c.l.b16 %v351
      %v432 = vunpack.c.l.b16 %v352
      %v433 = vunpack.c.l.b16 %v353
      %v434 = vunpack.c.l.b16 %v354
      %v435 = vunpack.c.l.b16 %v355
      %v436 = vunpack.c.l.b16 %v356
      %v437 = vunpack.c.l.b16 %v357
      %v438 = vunpack.c.l.b16 %v358
      %v439 = vpack.c.b16 %v408, %v407
      %v440 = vpack.c.b16 %v410, %v409
      %v441 = vpack.c.b16 %v412, %v411
      %v442 = vpack.c.b16 %v414, %v413
      %v443 = vpack.c.b16 %v416, %v415
      %v444 = vpack.c.b16 %v418, %v417
      %v445 = vpack.c.b16 %v420, %v419
      %v446 = vpack.c.b16 %v422, %v421
      %v447 = vpack.c.b16 %v424, %v423
      %v448 = vpack.c.b16 %v426, %v425
      %v449 = vpack.c.b16 %v428, %v427
      %v450 = vpack.c.b16 %v430, %v429
      %v451 = vpack.c.b16 %v432, %v431
      %v452 = vpack.c.b16 %v434, %v433
      %v453 = vpack.c.b16 %v436, %v435
      %v454 = vpack.c.b16 %v438, %v437
      %v487 = vunpack.c.l.b16 %v359
      %v488 = vunpack.c.l.b16 %v360
      %v489 = vunpack.c.l.b16 %v361
      %v490 = vunpack.c.l.b16 %v362
      %v491 = vunpack.c.l.b16 %v363
      %v492 = vunpack.c.l.b16 %v364
      %v493 = vunpack.c.l.b16 %v365
      %v494 = vunpack.c.l.b16 %v366
      %v495 = vunpack.c.l.b16 %v367
      %v496 = vunpack.c.l.b16 %v368
      %v497 = vunpack.c.l.b16 %v369
      %v498 = vunpack.c.l.b16 %v370
      %v499 = vunpack.c.l.b16 %v371
      %v500 = vunpack.c.l.b16 %v372
      %v501 = vunpack.c.l.b16 %v373
      %v502 = vunpack.c.l.b16 %v374
      %v503 = vpack.c.b16 %v488, %v487
      %v504 = vpack.c.b16 %v490, %v489
      %v505 = vpack.c.b16 %v492, %v491
      %v506 = vpack.c.b16 %v494, %v493
      %v507 = vpack.c.b16 %v496, %v495
      %v508 = vpack.c.b16 %v498, %v497
      %v509 = vpack.c.b16 %v500, %v499
      %v510 = vpack.c.b16 %v502, %v501
      %519 = vmatpush.bf16.msra.mxu0 %v510
      %520 = vmatpush.bf16.msra.mxu0 %v509
      %521 = vmatpush.bf16.msra.mxu0 %v508
      %522 = vmatpush.bf16.msra.mxu0 %v507
      %523 = vmatpush.bf16.msra.mxu0 %v506
      %524 = vmatpush.bf16.msra.mxu0 %v505
      %525 = vmatpush.bf16.msra.mxu0 %v504
      %526 = vmatpush.bf16.msra.mxu0 %v503
      %527 = vmatmul.bf16.gmra.mxu0 %v439
      %v528 = vpop.f32.mrf.mxu0
      %v529 = vadd.f32 0.0, %v528
      %v530 = vpop.f32.mrf.mxu0
      %v531 = vadd.f32 0.0, %v530
      %532 = vmatmul.bf16.gmra.mxu0 %v440
      %v533 = vpop.f32.mrf.mxu0
      %v534 = vadd.f32 0.0, %v533
      %v535 = vpop.f32.mrf.mxu0
      %v536 = vadd.f32 0.0, %v535
      %537 = vmatmul.bf16.gmra.mxu0 %v441
      %v538 = vpop.f32.mrf.mxu0
      %v539 = vadd.f32 0.0, %v538
      %v540 = vpop.f32.mrf.mxu0
      %v541 = vadd.f32 0.0, %v540
      %542 = vmatmul.bf16.gmra.mxu0 %v442
      %v543 = vpop.f32.mrf.mxu0
      %v544 = vadd.f32 0.0, %v543
      %v545 = vpop.f32.mrf.mxu0
      %v546 = vadd.f32 0.0, %v545
      %547 = vmatmul.bf16.gmra.mxu0 %v443
      %v548 = vpop.f32.mrf.mxu0
      %v549 = vadd.f32 0.0, %v548
      %v550 = vpop.f32.mrf.mxu0
      %v551 = vadd.f32 0.0, %v550
      %552 = vmatmul.bf16.gmra.mxu0 %v444
      %v553 = vpop.f32.mrf.mxu0
      %v554 = vadd.f32 0.0, %v553
      %v555 = vpop.f32.mrf.mxu0
      %v556 = vadd.f32 0.0, %v555
      %557 = vmatmul.bf16.gmra.mxu0 %v445
      %v558 = vpop.f32.mrf.mxu0
      %v559 = vadd.f32 0.0, %v558
      %v560 = vpop.f32.mrf.mxu0
      %v561 = vadd.f32 0.0, %v560
      %562 = vmatmul.bf16.gmra.mxu0 %v446
      %v563 = vpop.f32.mrf.mxu0
      %v564 = vadd.f32 0.0, %v563
      %v565 = vpop.f32.mrf.mxu0
      %v566 = vadd.f32 0.0, %v565
      %567 = vmatmul.bf16.gmra.mxu0 %v447
      %v568 = vpop.f32.mrf.mxu0
      %v569 = vadd.f32 0.0, %v568
      %v570 = vpop.f32.mrf.mxu0
      %v571 = vadd.f32 0.0, %v570
      %572 = vmatmul.bf16.gmra.mxu0 %v448
      %v573 = vpop.f32.mrf.mxu0
      %v574 = vadd.f32 0.0, %v573
      %v575 = vpop.f32.mrf.mxu0
      %v576 = vadd.f32 0.0, %v575
      %577 = vmatmul.bf16.gmra.mxu0 %v449
      %v578 = vpop.f32.mrf.mxu0
      %v579 = vadd.f32 0.0, %v578
      %v580 = vpop.f32.mrf.mxu0
      %v581 = vadd.f32 0.0, %v580
      %582 = vmatmul.bf16.gmra.mxu0 %v450
      %v583 = vpop.f32.mrf.mxu0
      %v584 = vadd.f32 0.0, %v583
      %v585 = vpop.f32.mrf.mxu0
      %v586 = vadd.f32 0.0, %v585
      %587 = vmatmul.bf16.gmra.mxu0 %v451
      %v588 = vpop.f32.mrf.mxu0
      %v589 = vadd.f32 0.0, %v588
      %v590 = vpop.f32.mrf.mxu0
      %v591 = vadd.f32 0.0, %v590
      %592 = vmatmul.bf16.gmra.mxu0 %v452
      %v593 = vpop.f32.mrf.mxu0
      %v594 = vadd.f32 0.0, %v593
      %v595 = vpop.f32.mrf.mxu0
      %v596 = vadd.f32 0.0, %v595
      %597 = vmatmul.bf16.gmra.mxu0 %v453
      %v598 = vpop.f32.mrf.mxu0
      %v599 = vadd.f32 0.0, %v598
      %v600 = vpop.f32.mrf.mxu0
      %v601 = vadd.f32 0.0, %v600
      %602 = vmatmul.bf16.gmra.mxu0 %v454
      %v603 = vpop.f32.mrf.mxu0
      %v604 = vadd.f32 0.0, %v603
      %v605 = vpop.f32.mrf.mxu0
      %v606 = vadd.f32 0.0, %v605
      %607 = vdwg.mxu0
      %v608 = vadd.f32 %v295, %v529
      %v609 = vadd.f32 %v296, %v531
      %v610 = vadd.f32 %v297, %v534
      %v611 = vadd.f32 %v298, %v536
      %v612 = vadd.f32 %v299, %v539
      %v613 = vadd.f32 %v300, %v541
      %v614 = vadd.f32 %v301, %v544
      %v615 = vadd.f32 %v302, %v546
      %v616 = vadd.f32 %v303, %v549
      %v617 = vadd.f32 %v304, %v551
      %v618 = vadd.f32 %v305, %v554
      %v619 = vadd.f32 %v306, %v556
      %v620 = vadd.f32 %v307, %v559
      %v621 = vadd.f32 %v308, %v561
      %v622 = vadd.f32 %v309, %v564
      %v623 = vadd.f32 %v310, %v566
      %v624 = vadd.f32 %v311, %v569
      %v625 = vadd.f32 %v312, %v571
      %v626 = vadd.f32 %v313, %v574
      %v627 = vadd.f32 %v314, %v576
      %v628 = vadd.f32 %v315, %v579
      %v629 = vadd.f32 %v316, %v581
      %v630 = vadd.f32 %v317, %v584
      %v631 = vadd.f32 %v318, %v586
      %v632 = vadd.f32 %v319, %v589
      %v633 = vadd.f32 %v320, %v591
      %v634 = vadd.f32 %v321, %v594
      %v635 = vadd.f32 %v322, %v596
      %v636 = vadd.f32 %v323, %v599
      %v637 = vadd.f32 %v324, %v601
      %v638 = vadd.f32 %v325, %v604
      %v639 = vadd.f32 %v326, %v606
      %640 = vst [vmem:[#allocation2] sm:$0xff] %v608
      %641 = vst [vmem:[#allocation2 + $0x8] sm:$0xff] %v609
      %642 = vst [vmem:[#allocation2 + $0x10] sm:$0xff] %v610
      %643 = vst [vmem:[#allocation2 + $0x18] sm:$0xff] %v611
      %644 = vst [vmem:[#allocation2 + $0x20] sm:$0xff] %v612
      %645 = vst [vmem:[#allocation2 + $0x28] sm:$0xff] %v613
      %646 = vst [vmem:[#allocation2 + $0x30] sm:$0xff] %v614
      %647 = vst [vmem:[#allocation2 + $0x38] sm:$0xff] %v615
      %648 = vst [vmem:[#allocation2 + $0x40] sm:$0xff] %v616
      %649 = vst [vmem:[#allocation2 + $0x48] sm:$0xff] %v617
      %650 = vst [vmem:[#allocation2 + $0x50] sm:$0xff] %v618
      %651 = vst [vmem:[#allocation2 + $0x58] sm:$0xff] %v619
      %652 = vst [vmem:[#allocation2 + $0x60] sm:$0xff] %v620
      %653 = vst [vmem:[#allocation2 + $0x68] sm:$0xff] %v621
      %654 = vst [vmem:[#allocation2 + $0x70] sm:$0xff] %v622
      %655 = vst [vmem:[#allocation2 + $0x78] sm:$0xff] %v623
      %656 = vst [vmem:[#allocation2 + $0x80] sm:$0xff] %v624
      %657 = vst [vmem:[#allocation2 + $0x88] sm:$0xff] %v625
      %658 = vst [vmem:[#allocation2 + $0x90] sm:$0xff] %v626
      %659 = vst [vmem:[#allocation2 + $0x98] sm:$0xff] %v627
      %660 = vst [vmem:[#allocation2 + $0xa0] sm:$0xff] %v628
      %661 = vst [vmem:[#allocation2 + $0xa8] sm:$0xff] %v629
      %662 = vst [vmem:[#allocation2 + $0xb0] sm:$0xff] %v630
      %663 = vst [vmem:[#allocation2 + $0xb8] sm:$0xff] %v631
      %664 = vst [vmem:[#allocation2 + $0xc0] sm:$0xff] %v632
      %665 = vst [vmem:[#allocation2 + $0xc8] sm:$0xff] %v633
      %666 = vst [vmem:[#allocation2 + $0xd0] sm:$0xff] %v634
      %667 = vst [vmem:[#allocation2 + $0xd8] sm:$0xff] %v635
      %668 = vst [vmem:[#allocation2 + $0xe0] sm:$0xff] %v636
      %669 = vst [vmem:[#allocation2 + $0xe8] sm:$0xff] %v637
      %670 = vst [vmem:[#allocation2 + $0xf0] sm:$0xff] %v638
      %671 = vst [vmem:[#allocation2 + $0xf8] sm:$0xff] %v639
      // Predicated region
      $region37: #{vit_forward.16} parent=31 // pred_check
        %p672 = pneg %p259
      $region38: #{vit_forward.16} parent=31 // pred_check_branch
        %674 = sbr.rel (%p672) target = $region40
      $region39: #{vit_forward.16} parent=31 // pred_region
        %v675 = vld [vmem:[#allocation2] sm:$0xff]
        %v676 = vld [vmem:[#allocation2 + $0x8] sm:$0xff]
        %v677 = vld [vmem:[#allocation2 + $0x10] sm:$0xff]
        %v678 = vld [vmem:[#allocation2 + $0x18] sm:$0xff]
        %v679 = vld [vmem:[#allocation2 + $0x20] sm:$0xff]
        %v680 = vld [vmem:[#allocation2 + $0x28] sm:$0xff]
        %v681 = vld [vmem:[#allocation2 + $0x30] sm:$0xff]
        %v682 = vld [vmem:[#allocation2 + $0x38] sm:$0xff]
        %v683 = vld [vmem:[#allocation2 + $0x40] sm:$0xff]
        %v684 = vld [vmem:[#allocation2 + $0x48] sm:$0xff]
        %v685 = vld [vmem:[#allocation2 + $0x50] sm:$0xff]
        %v686 = vld [vmem:[#allocation2 + $0x58] sm:$0xff]
        %v687 = vld [vmem:[#allocation2 + $0x60] sm:$0xff]
        %v688 = vld [vmem:[#allocation2 + $0x68] sm:$0xff]
        %v689 = vld [vmem:[#allocation2 + $0x70] sm:$0xff]
        %v690 = vld [vmem:[#allocation2 + $0x78] sm:$0xff]
        %v691 = vld [vmem:[#allocation2 + $0x80] sm:$0xff]
        %v692 = vld [vmem:[#allocation2 + $0x88] sm:$0xff]
        %v693 = vld [vmem:[#allocation2 + $0x90] sm:$0xff]
        %v694 = vld [vmem:[#allocation2 + $0x98] sm:$0xff]
        %v695 = vld [vmem:[#allocation2 + $0xa0] sm:$0xff]
        %v696 = vld [vmem:[#allocation2 + $0xa8] sm:$0xff]
        %v697 = vld [vmem:[#allocation2 + $0xb0] sm:$0xff]
        %v698 = vld [vmem:[#allocation2 + $0xb8] sm:$0xff]
        %v699 = vld [vmem:[#allocation2 + $0xc0] sm:$0xff]
        %v700 = vld [vmem:[#allocation2 + $0xc8] sm:$0xff]
        %v701 = vld [vmem:[#allocation2 + $0xd0] sm:$0xff]
        %v702 = vld [vmem:[#allocation2 + $0xd8] sm:$0xff]
        %v703 = vld [vmem:[#allocation2 + $0xe0] sm:$0xff]
        %v704 = vld [vmem:[#allocation2 + $0xe8] sm:$0xff]
        %v705 = vld [vmem:[#allocation2 + $0xf0] sm:$0xff]
        %v706 = vld [vmem:[#allocation2 + $0xf8] sm:$0xff]
        %v707 = vld [vmem:[%s249] sm:$0x1]
        %v709 = vperm.slane %v707, 0
        %v711 = vadd.f32 %v675, %v709
        %v712 = vadd.f32 %v676, %v709
        %v713 = vadd.f32 %v677, %v709
        %v714 = vadd.f32 %v678, %v709
        %v715 = vadd.f32 %v679, %v709
        %v716 = vadd.f32 %v680, %v709
        %v717 = vadd.f32 %v681, %v709
        %v718 = vadd.f32 %v682, %v709
        %v719 = vadd.f32 %v683, %v709
        %v720 = vadd.f32 %v684, %v709
        %v721 = vadd.f32 %v685, %v709
        %v722 = vadd.f32 %v686, %v709
        %v723 = vadd.f32 %v687, %v709
        %v724 = vadd.f32 %v688, %v709
        %v725 = vadd.f32 %v689, %v709
        %v726 = vadd.f32 %v690, %v709
        %v727 = vadd.f32 %v691, %v709
        %v728 = vadd.f32 %v692, %v709
        %v729 = vadd.f32 %v693, %v709
        %v730 = vadd.f32 %v694, %v709
        %v731 = vadd.f32 %v695, %v709
        %v732 = vadd.f32 %v696, %v709
        %v733 = vadd.f32 %v697, %v709
        %v734 = vadd.f32 %v698, %v709
        %v735 = vadd.f32 %v699, %v709
        %v736 = vadd.f32 %v700, %v709
        %v737 = vadd.f32 %v701, %v709
        %v738 = vadd.f32 %v702, %v709
        %v739 = vadd.f32 %v703, %v709
        %v740 = vadd.f32 %v704, %v709
        %v741 = vadd.f32 %v705, %v709
        %v742 = vadd.f32 %v706, %v709
        %v743 = vmax.f32 %v711, 0.0
        %v744 = vmax.f32 %v712, 0.0
        %v745 = vmax.f32 %v713, 0.0
        %v746 = vmax.f32 %v714, 0.0
        %v747 = vmax.f32 %v715, 0.0
        %v748 = vmax.f32 %v716, 0.0
        %v749 = vmax.f32 %v717, 0.0
        %v750 = vmax.f32 %v718, 0.0
        %v751 = vmax.f32 %v719, 0.0
        %v752 = vmax.f32 %v720, 0.0
        %v753 = vmax.f32 %v721, 0.0
        %v754 = vmax.f32 %v722, 0.0
        %v755 = vmax.f32 %v723, 0.0
        %v756 = vmax.f32 %v724, 0.0
        %v757 = vmax.f32 %v725, 0.0
        %v758 = vmax.f32 %v726, 0.0
        %v759 = vmax.f32 %v727, 0.0
        %v760 = vmax.f32 %v728, 0.0
        %v761 = vmax.f32 %v729, 0.0
        %v762 = vmax.f32 %v730, 0.0
        %v763 = vmax.f32 %v731, 0.0
        %v764 = vmax.f32 %v732, 0.0
        %v765 = vmax.f32 %v733, 0.0
        %v766 = vmax.f32 %v734, 0.0
        %v767 = vmax.f32 %v735, 0.0
        %v768 = vmax.f32 %v736, 0.0
        %v769 = vmax.f32 %v737, 0.0
        %v770 = vmax.f32 %v738, 0.0
        %v771 = vmax.f32 %v739, 0.0
        %v772 = vmax.f32 %v740, 0.0
        %v773 = vmax.f32 %v741, 0.0
        %v774 = vmax.f32 %v742, 0.0
        %775 = vst [vmem:[%s257] sm:$0xff] %v743
        %776 = vst [vmem:[%s257 + $0x8] sm:$0xff] %v744
        %777 = vst [vmem:[%s257 + $0x10] sm:$0xff] %v745
        %778 = vst [vmem:[%s257 + $0x18] sm:$0xff] %v746
        %779 = vst [vmem:[%s257 + $0x20] sm:$0xff] %v747
        %780 = vst [vmem:[%s257 + $0x28] sm:$0xff] %v748
        %781 = vst [vmem:[%s257 + $0x30] sm:$0xff] %v749
        %782 = vst [vmem:[%s257 + $0x38] sm:$0xff] %v750
        %783 = vst [vmem:[%s257 + $0x40] sm:$0xff] %v751
        %784 = vst [vmem:[%s257 + $0x48] sm:$0xff] %v752
        %785 = vst [vmem:[%s257 + $0x50] sm:$0xff] %v753
        %786 = vst [vmem:[%s257 + $0x58] sm:$0xff] %v754
        %787 = vst [vmem:[%s257 + $0x60] sm:$0xff] %v755
        %788 = vst [vmem:[%s257 + $0x68] sm:$0xff] %v756
        %789 = vst [vmem:[%s257 + $0x70] sm:$0xff] %v757
        %790 = vst [vmem:[%s257 + $0x78] sm:$0xff] %v758
        %791 = vst [vmem:[%s257 + $0x80] sm:$0xff] %v759
        %792 = vst [vmem:[%s257 + $0x88] sm:$0xff] %v760
        %793 = vst [vmem:[%s257 + $0x90] sm:$0xff] %v761
        %794 = vst [vmem:[%s257 + $0x98] sm:$0xff] %v762
        %795 = vst [vmem:[%s257 + $0xa0] sm:$0xff] %v763
        %796 = vst [vmem:[%s257 + $0xa8] sm:$0xff] %v764
        %797 = vst [vmem:[%s257 + $0xb0] sm:$0xff] %v765
        %798 = vst [vmem:[%s257 + $0xb8] sm:$0xff] %v766
        %799 = vst [vmem:[%s257 + $0xc0] sm:$0xff] %v767
        %800 = vst [vmem:[%s257 + $0xc8] sm:$0xff] %v768
        %801 = vst [vmem:[%s257 + $0xd0] sm:$0xff] %v769
        %802 = vst [vmem:[%s257 + $0xd8] sm:$0xff] %v770
        %803 = vst [vmem:[%s257 + $0xe0] sm:$0xff] %v771
        %804 = vst [vmem:[%s257 + $0xe8] sm:$0xff] %v772
        %805 = vst [vmem:[%s257 + $0xf0] sm:$0xff] %v773
        %806 = vst [vmem:[%s257 + $0xf8] sm:$0xff] %v774
      $region40: #{vit_forward.16} parent=31 // pred_fallthru
        _
      %s807 = smul.u32 32, %s19
      %p808 = scmp.lt.s32.totalorder %s807, 63
      %s809 = scalar_select %p808, %s807, 63
      %p810 = scmp.lt.s32.totalorder %s20, 0
      %s811 = scalar_select %p810, %s20, 0
      %s812 = sadd.s32 %s811, %s809
      %s813 = smul.addr %s812, 8
      %s814 = scalar_lea.vmem %s3, %s813
      // Predicated region
      $region41: #{vit_forward.16} parent=31 // pred_check
        %p815 = pneg %p135
      $region42: #{vit_forward.16} parent=31 // pred_check_branch
        %817 = sbr.rel (%p815) target = $region44
      $region43: #{vit_forward.16} parent=31 // pred_region
        %s818 = smul.u32 32, %s19
      $region44: #{vit_forward.16} parent=31 // pred_fallthru
        _
    $region32: #{vit_forward.16} parent=5 // pred_fallthru
      _
    %p819 = scmp.le.s32.totalorder 2, %s9
    // Predicated region
    $region45: #{vit_forward.16} parent=5 // pred_check
      %p820 = pneg %p819
    $region46: #{vit_forward.16} parent=5 // pred_check_branch
      %822 = sbr.rel (%p820) target = $region48
    $region47: #{vit_forward.16} parent=5 // pred_region
      %s823 = ssub.s32 %s9, 2
      // Predicated region
      $region49: #{vit_forward.16} parent=47 // pred_check
        %p824 = pneg %p141
      $region50: #{vit_forward.16} parent=47 // pred_check_branch
        %826 = sbr.rel (%p824) target = $region52
      $region51: #{vit_forward.16} parent=47 // pred_region
        %s827 = smul.u32 32, %s22
        %p828 = scmp.lt.s32.totalorder %s827, 63
        %s829 = scalar_select %p828, %s827, 63
        %p830 = scmp.lt.s32.totalorder %s23, 0
        %s831 = scalar_select %p830, %s23, 0
        %s832 = sadd.s32 %s831, %s829
        %s833 = smul.addr %s832, 8
        %s834 = scalar_lea.vmem %s3, %s833
      $region52: #{vit_forward.16} parent=47 // pred_fallthru
        _
    $region48: #{vit_forward.16} parent=5 // pred_fallthru
      _
  $region6: #{vit_forward.16} parent=0 // loop_footer
    %s13 = sadd.s32 1, %s9
  $region7: #{vit_forward.16} parent=0 // loop_footer_branch
    %8 = sbr.rel target = $region3
  $region8: #{vit_forward.16} parent=0 // loop_exit
    _

// kernel: vit_forward.18
$region0: #{vit_forward.18}
  #allocation0 [shape = 'u32[]', space=smem, size = 0x4, offset = 0x4, fixed_abs, tag = 'smem constant byte address 0x4 - core index']
  #allocation1 [shape = 'u32[72,128]{1,0:T(1,128)}', space=vmem, size = 0x9000, scoped, tag = 'internal scratch']
  #allocation2 [shape = 'f32[128,128]{1,0:T(8,128)}', space=vmem, size = 0x10000, scoped, tag = 'scratch operand']
  %s0 = inlined_call_operand.vmem [shape: bf16[128,128], index: 0, kind: input, shape index: {}]
  %s1 = inlined_call_operand.vmem [shape: bf16[128,128], index: 1, kind: input, shape index: {}]
  %s2 = inlined_call_operand.vmem [shape: f32[1,128], index: 2, kind: input, shape index: {}]
  %s3 = inlined_call_operand.vmem [shape: f32[128,128], index: 3, kind: output, shape index: {}]
  %s4 = sld [smem:[#allocation0]]
  $region30: #{vit_forward.18} parent=0
    _
  %s6 = ssub.s32 1, %s4
  %s7 = scalar_select 0, %s6, %s4
  // Predicated region
  $region2: #{vit_forward.18} parent=0 // pred_check
    _
  $region3: #{vit_forward.18} parent=0 // pred_check_branch
    %9 = sbr.rel (0) target = $region5
  $region4: #{vit_forward.18} parent=0 // pred_region
    _
  $region5: #{vit_forward.18} parent=0 // pred_fallthru
    _
  // Predicated region
  $region6: #{vit_forward.18} parent=0 // pred_check
    _
  $region7: #{vit_forward.18} parent=0 // pred_check_branch
    %11 = sbr.rel (0) target = $region9
  $region8: #{vit_forward.18} parent=0 // pred_region
    _
  $region9: #{vit_forward.18} parent=0 // pred_fallthru
    _
  // Predicated region
  $region10: #{vit_forward.18} parent=0 // pred_check
    _
  $region11: #{vit_forward.18} parent=0 // pred_check_branch
    %13 = sbr.rel (0) target = $region13
  $region12: #{vit_forward.18} parent=0 // pred_region
    _
  $region13: #{vit_forward.18} parent=0 // pred_fallthru
    _
  %p14 = scmp.eq.s32.totalorder 0, 0
  // Predicated region
  $region14: #{vit_forward.18} parent=0 // pred_check
    %p15 = pneg %p14
  $region15: #{vit_forward.18} parent=0 // pred_check_branch
    %17 = sbr.rel (%p15) target = $region17
  $region16: #{vit_forward.18} parent=0 // pred_region
    %18 = vst [vmem:[#allocation2] sm:$0xff] 0.0
    %19 = vst [vmem:[#allocation2 + $0x8] sm:$0xff] 0.0
    %20 = vst [vmem:[#allocation2 + $0x10] sm:$0xff] 0.0
    %21 = vst [vmem:[#allocation2 + $0x18] sm:$0xff] 0.0
    %22 = vst [vmem:[#allocation2 + $0x20] sm:$0xff] 0.0
    %23 = vst [vmem:[#allocation2 + $0x28] sm:$0xff] 0.0
    %24 = vst [vmem:[#allocation2 + $0x30] sm:$0xff] 0.0
    %25 = vst [vmem:[#allocation2 + $0x38] sm:$0xff] 0.0
    %26 = vst [vmem:[#allocation2 + $0x40] sm:$0xff] 0.0
    %27 = vst [vmem:[#allocation2 + $0x48] sm:$0xff] 0.0
    %28 = vst [vmem:[#allocation2 + $0x50] sm:$0xff] 0.0
    %29 = vst [vmem:[#allocation2 + $0x58] sm:$0xff] 0.0
    %30 = vst [vmem:[#allocation2 + $0x60] sm:$0xff] 0.0
    %31 = vst [vmem:[#allocation2 + $0x68] sm:$0xff] 0.0
    %32 = vst [vmem:[#allocation2 + $0x70] sm:$0xff] 0.0
    %33 = vst [vmem:[#allocation2 + $0x78] sm:$0xff] 0.0
  $region17: #{vit_forward.18} parent=0 // pred_fallthru
    _
  %v34 = vld [vmem:[#allocation2] sm:$0xff]
  %v35 = vld [vmem:[#allocation2 + $0x8] sm:$0xff]
  %v36 = vld [vmem:[#allocation2 + $0x10] sm:$0xff]
  %v37 = vld [vmem:[#allocation2 + $0x18] sm:$0xff]
  %v38 = vld [vmem:[#allocation2 + $0x20] sm:$0xff]
  %v39 = vld [vmem:[#allocation2 + $0x28] sm:$0xff]
  %v40 = vld [vmem:[#allocation2 + $0x30] sm:$0xff]
  %v41 = vld [vmem:[#allocation2 + $0x38] sm:$0xff]
  %v42 = vld [vmem:[#allocation2 + $0x40] sm:$0xff]
  %v43 = vld [vmem:[#allocation2 + $0x48] sm:$0xff]
  %v44 = vld [vmem:[#allocation2 + $0x50] sm:$0xff]
  %v45 = vld [vmem:[#allocation2 + $0x58] sm:$0xff]
  %v46 = vld [vmem:[#allocation2 + $0x60] sm:$0xff]
  %v47 = vld [vmem:[#allocation2 + $0x68] sm:$0xff]
  %v48 = vld [vmem:[#allocation2 + $0x70] sm:$0xff]
  %v49 = vld [vmem:[#allocation2 + $0x78] sm:$0xff]
  %v50 = vld [vmem:[%s0] sm:$0xf]
  %v51 = vld [vmem:[%s0 + $0x4] sm:$0xf]
  %v52 = vld [vmem:[%s0 + $0x8] sm:$0xf]
  %v53 = vld [vmem:[%s0 + $0xc] sm:$0xf]
  %v54 = vld [vmem:[%s0 + $0x10] sm:$0xf]
  %v55 = vld [vmem:[%s0 + $0x14] sm:$0xf]
  %v56 = vld [vmem:[%s0 + $0x18] sm:$0xf]
  %v57 = vld [vmem:[%s0 + $0x1c] sm:$0xf]
  %v58 = vld [vmem:[%s0 + $0x20] sm:$0xf]
  %v59 = vld [vmem:[%s0 + $0x24] sm:$0xf]
  %v60 = vld [vmem:[%s0 + $0x28] sm:$0xf]
  %v61 = vld [vmem:[%s0 + $0x2c] sm:$0xf]
  %v62 = vld [vmem:[%s0 + $0x30] sm:$0xf]
  %v63 = vld [vmem:[%s0 + $0x34] sm:$0xf]
  %v64 = vld [vmem:[%s0 + $0x38] sm:$0xf]
  %v65 = vld [vmem:[%s0 + $0x3c] sm:$0xf]
  %v66 = vld [vmem:[%s1] sm:$0xf]
  %v67 = vld [vmem:[%s1 + $0x4] sm:$0xf]
  %v68 = vld [vmem:[%s1 + $0x8] sm:$0xf]
  %v69 = vld [vmem:[%s1 + $0xc] sm:$0xf]
  %v70 = vld [vmem:[%s1 + $0x10] sm:$0xf]
  %v71 = vld [vmem:[%s1 + $0x14] sm:$0xf]
  %v72 = vld [vmem:[%s1 + $0x18] sm:$0xf]
  %v73 = vld [vmem:[%s1 + $0x1c] sm:$0xf]
  %v74 = vld [vmem:[%s1 + $0x20] sm:$0xf]
  %v75 = vld [vmem:[%s1 + $0x24] sm:$0xf]
  %v76 = vld [vmem:[%s1 + $0x28] sm:$0xf]
  %v77 = vld [vmem:[%s1 + $0x2c] sm:$0xf]
  %v78 = vld [vmem:[%s1 + $0x30] sm:$0xf]
  %v79 = vld [vmem:[%s1 + $0x34] sm:$0xf]
  %v80 = vld [vmem:[%s1 + $0x38] sm:$0xf]
  %v81 = vld [vmem:[%s1 + $0x3c] sm:$0xf]
  %v98 = vunpack.c.l.b16 %v50
  %v99 = vunpack.c.l.b16 %v51
  %v100 = vunpack.c.l.b16 %v52
  %v101 = vunpack.c.l.b16 %v53
  %v102 = vunpack.c.l.b16 %v54
  %v103 = vunpack.c.l.b16 %v55
  %v104 = vunpack.c.l.b16 %v56
  %v105 = vunpack.c.l.b16 %v57
  %v106 = vunpack.c.l.b16 %v58
  %v107 = vunpack.c.l.b16 %v59
  %v108 = vunpack.c.l.b16 %v60
  %v109 = vunpack.c.l.b16 %v61
  %v110 = vunpack.c.l.b16 %v62
  %v111 = vunpack.c.l.b16 %v63
  %v112 = vunpack.c.l.b16 %v64
  %v113 = vunpack.c.l.b16 %v65
  %v114 = vpack.c.b16 %v99, %v98
  %v115 = vpack.c.b16 %v101, %v100
  %v116 = vpack.c.b16 %v103, %v102
  %v117 = vpack.c.b16 %v105, %v104
  %v118 = vpack.c.b16 %v107, %v106
  %v119 = vpack.c.b16 %v109, %v108
  %v120 = vpack.c.b16 %v111, %v110
  %v121 = vpack.c.b16 %v113, %v112
  %v146 = vunpack.c.l.b16 %v66
  %v147 = vunpack.c.l.b16 %v67
  %v148 = vunpack.c.l.b16 %v68
  %v149 = vunpack.c.l.b16 %v69
  %v150 = vunpack.c.l.b16 %v70
  %v151 = vunpack.c.l.b16 %v71
  %v152 = vunpack.c.l.b16 %v72
  %v153 = vunpack.c.l.b16 %v73
  %v154 = vunpack.c.l.b16 %v74
  %v155 = vunpack.c.l.b16 %v75
  %v156 = vunpack.c.l.b16 %v76
  %v157 = vunpack.c.l.b16 %v77
  %v158 = vunpack.c.l.b16 %v78
  %v159 = vunpack.c.l.b16 %v79
  %v160 = vunpack.c.l.b16 %v80
  %v161 = vunpack.c.l.b16 %v81
  %v162 = vpack.c.b16 %v147, %v146
  %v163 = vpack.c.b16 %v149, %v148
  %v164 = vpack.c.b16 %v151, %v150
  %v165 = vpack.c.b16 %v153, %v152
  %v166 = vpack.c.b16 %v155, %v154
  %v167 = vpack.c.b16 %v157, %v156
  %v168 = vpack.c.b16 %v159, %v158
  %v169 = vpack.c.b16 %v161, %v160
  %178 = vmatpush.bf16.msra.mxu0 %v169
  %179 = vmatpush.bf16.msra.mxu0 %v168
  %180 = vmatpush.bf16.msra.mxu0 %v167
  %181 = vmatpush.bf16.msra.mxu0 %v166
  %182 = vmatpush.bf16.msra.mxu0 %v165
  %183 = vmatpush.bf16.msra.mxu0 %v164
  %184 = vmatpush.bf16.msra.mxu0 %v163
  %185 = vmatpush.bf16.msra.mxu0 %v162
  %186 = vmatmul.bf16.gmra.mxu0 %v114
  %v187 = vpop.f32.mrf.mxu0
  %v188 = vadd.f32 0.0, %v187
  %v189 = vpop.f32.mrf.mxu0
  %v190 = vadd.f32 0.0, %v189
  %191 = vmatmul.bf16.gmra.mxu0 %v115
  %v192 = vpop.f32.mrf.mxu0
  %v193 = vadd.f32 0.0, %v192
  %v194 = vpop.f32.mrf.mxu0
  %v195 = vadd.f32 0.0, %v194
  %196 = vmatmul.bf16.gmra.mxu0 %v116
  %v197 = vpop.f32.mrf.mxu0
  %v198 = vadd.f32 0.0, %v197
  %v199 = vpop.f32.mrf.mxu0
  %v200 = vadd.f32 0.0, %v199
  %201 = vmatmul.bf16.gmra.mxu0 %v117
  %v202 = vpop.f32.mrf.mxu0
  %v203 = vadd.f32 0.0, %v202
  %v204 = vpop.f32.mrf.mxu0
  %v205 = vadd.f32 0.0, %v204
  %206 = vmatmul.bf16.gmra.mxu0 %v118
  %v207 = vpop.f32.mrf.mxu0
  %v208 = vadd.f32 0.0, %v207
  %v209 = vpop.f32.mrf.mxu0
  %v210 = vadd.f32 0.0, %v209
  %211 = vmatmul.bf16.gmra.mxu0 %v119
  %v212 = vpop.f32.mrf.mxu0
  %v213 = vadd.f32 0.0, %v212
  %v214 = vpop.f32.mrf.mxu0
  %v215 = vadd.f32 0.0, %v214
  %216 = vmatmul.bf16.gmra.mxu0 %v120
  %v217 = vpop.f32.mrf.mxu0
  %v218 = vadd.f32 0.0, %v217
  %v219 = vpop.f32.mrf.mxu0
  %v220 = vadd.f32 0.0, %v219
  %221 = vmatmul.bf16.gmra.mxu0 %v121
  %v222 = vpop.f32.mrf.mxu0
  %v223 = vadd.f32 0.0, %v222
  %v224 = vpop.f32.mrf.mxu0
  %v225 = vadd.f32 0.0, %v224
  %226 = vdwg.mxu0
  %v227 = vadd.f32 %v34, %v188
  %v228 = vadd.f32 %v35, %v190
  %v229 = vadd.f32 %v36, %v193
  %v230 = vadd.f32 %v37, %v195
  %v231 = vadd.f32 %v38, %v198
  %v232 = vadd.f32 %v39, %v200
  %v233 = vadd.f32 %v40, %v203
  %v234 = vadd.f32 %v41, %v205
  %v235 = vadd.f32 %v42, %v208
  %v236 = vadd.f32 %v43, %v210
  %v237 = vadd.f32 %v44, %v213
  %v238 = vadd.f32 %v45, %v215
  %v239 = vadd.f32 %v46, %v218
  %v240 = vadd.f32 %v47, %v220
  %v241 = vadd.f32 %v48, %v223
  %v242 = vadd.f32 %v49, %v225
  %243 = vst [vmem:[#allocation2] sm:$0xff] %v227
  %244 = vst [vmem:[#allocation2 + $0x8] sm:$0xff] %v228
  %245 = vst [vmem:[#allocation2 + $0x10] sm:$0xff] %v229
  %246 = vst [vmem:[#allocation2 + $0x18] sm:$0xff] %v230
  %247 = vst [vmem:[#allocation2 + $0x20] sm:$0xff] %v231
  %248 = vst [vmem:[#allocation2 + $0x28] sm:$0xff] %v232
  %249 = vst [vmem:[#allocation2 + $0x30] sm:$0xff] %v233
  %250 = vst [vmem:[#allocation2 + $0x38] sm:$0xff] %v234
  %251 = vst [vmem:[#allocation2 + $0x40] sm:$0xff] %v235
  %252 = vst [vmem:[#allocation2 + $0x48] sm:$0xff] %v236
  %253 = vst [vmem:[#allocation2 + $0x50] sm:$0xff] %v237
  %254 = vst [vmem:[#allocation2 + $0x58] sm:$0xff] %v238
  %255 = vst [vmem:[#allocation2 + $0x60] sm:$0xff] %v239
  %256 = vst [vmem:[#allocation2 + $0x68] sm:$0xff] %v240
  %257 = vst [vmem:[#allocation2 + $0x70] sm:$0xff] %v241
  %258 = vst [vmem:[#allocation2 + $0x78] sm:$0xff] %v242
  // Predicated region
  $region18: #{vit_forward.18} parent=0 // pred_check
    %p259 = pneg %p14
  $region19: #{vit_forward.18} parent=0 // pred_check_branch
    %261 = sbr.rel (%p259) target = $region21
  $region20: #{vit_forward.18} parent=0 // pred_region
    %v262 = vld [vmem:[#allocation2] sm:$0xff]
    %v263 = vld [vmem:[#allocation2 + $0x8] sm:$0xff]
    %v264 = vld [vmem:[#allocation2 + $0x10] sm:$0xff]
    %v265 = vld [vmem:[#allocation2 + $0x18] sm:$0xff]
    %v266 = vld [vmem:[#allocation2 + $0x20] sm:$0xff]
    %v267 = vld [vmem:[#allocation2 + $0x28] sm:$0xff]
    %v268 = vld [vmem:[#allocation2 + $0x30] sm:$0xff]
    %v269 = vld [vmem:[#allocation2 + $0x38] sm:$0xff]
    %v270 = vld [vmem:[#allocation2 + $0x40] sm:$0xff]
    %v271 = vld [vmem:[#allocation2 + $0x48] sm:$0xff]
    %v272 = vld [vmem:[#allocation2 + $0x50] sm:$0xff]
    %v273 = vld [vmem:[#allocation2 + $0x58] sm:$0xff]
    %v274 = vld [vmem:[#allocation2 + $0x60] sm:$0xff]
    %v275 = vld [vmem:[#allocation2 + $0x68] sm:$0xff]
    %v276 = vld [vmem:[#allocation2 + $0x70] sm:$0xff]
    %v277 = vld [vmem:[#allocation2 + $0x78] sm:$0xff]
    %v278 = vld [vmem:[%s2] sm:$0x1]
    %v280 = vperm.slane %v278, 0
    %v282 = vadd.f32 %v262, %v280
    %v283 = vadd.f32 %v263, %v280
    %v284 = vadd.f32 %v264, %v280
    %v285 = vadd.f32 %v265, %v280
    %v286 = vadd.f32 %v266, %v280
    %v287 = vadd.f32 %v267, %v280
    %v288 = vadd.f32 %v268, %v280
    %v289 = vadd.f32 %v269, %v280
    %v290 = vadd.f32 %v270, %v280
    %v291 = vadd.f32 %v271, %v280
    %v292 = vadd.f32 %v272, %v280
    %v293 = vadd.f32 %v273, %v280
    %v294 = vadd.f32 %v274, %v280
    %v295 = vadd.f32 %v275, %v280
    %v296 = vadd.f32 %v276, %v280
    %v297 = vadd.f32 %v277, %v280
    %v298 = vmax.f32 %v282, 0.0
    %v299 = vmax.f32 %v283, 0.0
    %v300 = vmax.f32 %v284, 0.0
    %v301 = vmax.f32 %v285, 0.0
    %v302 = vmax.f32 %v286, 0.0
    %v303 = vmax.f32 %v287, 0.0
    %v304 = vmax.f32 %v288, 0.0
    %v305 = vmax.f32 %v289, 0.0
    %v306 = vmax.f32 %v290, 0.0
    %v307 = vmax.f32 %v291, 0.0
    %v308 = vmax.f32 %v292, 0.0
    %v309 = vmax.f32 %v293, 0.0
    %v310 = vmax.f32 %v294, 0.0
    %v311 = vmax.f32 %v295, 0.0
    %v312 = vmax.f32 %v296, 0.0
    %v313 = vmax.f32 %v297, 0.0
    %314 = vst [vmem:[%s3] sm:$0xff] %v298
    %315 = vst [vmem:[%s3 + $0x8] sm:$0xff] %v299
    %316 = vst [vmem:[%s3 + $0x10] sm:$0xff] %v300
    %317 = vst [vmem:[%s3 + $0x18] sm:$0xff] %v301
    %318 = vst [vmem:[%s3 + $0x20] sm:$0xff] %v302
    %319 = vst [vmem:[%s3 + $0x28] sm:$0xff] %v303
    %320 = vst [vmem:[%s3 + $0x30] sm:$0xff] %v304
    %321 = vst [vmem:[%s3 + $0x38] sm:$0xff] %v305
    %322 = vst [vmem:[%s3 + $0x40] sm:$0xff] %v306
    %323 = vst [vmem:[%s3 + $0x48] sm:$0xff] %v307
    %324 = vst [vmem:[%s3 + $0x50] sm:$0xff] %v308
    %325 = vst [vmem:[%s3 + $0x58] sm:$0xff] %v309
    %326 = vst [vmem:[%s3 + $0x60] sm:$0xff] %v310
    %327 = vst [vmem:[%s3 + $0x68] sm:$0xff] %v311
    %328 = vst [vmem:[%s3 + $0x70] sm:$0xff] %v312
    %329 = vst [vmem:[%s3 + $0x78] sm:$0xff] %v313
  $region21: #{vit_forward.18} parent=0 // pred_fallthru
    _
  // Predicated region
  $region22: #{vit_forward.18} parent=0 // pred_check
    _
  $region23: #{vit_forward.18} parent=0 // pred_check_branch
    %331 = sbr.rel (0) target = $region25
  $region24: #{vit_forward.18} parent=0 // pred_region
    _
  $region25: #{vit_forward.18} parent=0 // pred_fallthru
    _
  // Predicated region
  $region26: #{vit_forward.18} parent=0 // pred_check
    _
  $region27: #{vit_forward.18} parent=0 // pred_check_branch
    %333 = sbr.rel (0) target = $region29
  $region28: #{vit_forward.18} parent=0 // pred_region
    _
  $region29: #{vit_forward.18} parent=0 // pred_fallthru
    _

// kernel: vit_forward.20
$region0: #{vit_forward.20}
  #allocation0 [shape = 'u32[]', space=smem, size = 0x4, offset = 0x4, fixed_abs, tag = 'smem constant byte address 0x4 - core index']
  #allocation1 [shape = 'u32[72,128]{1,0:T(1,128)}', space=vmem, size = 0x9000, scoped, tag = 'internal scratch']
  #allocation2 [shape = 'f32[32,128]{1,0:T(8,128)}', space=vmem, size = 0x4000, scoped, tag = 'scratch operand']
  %s0 = inlined_call_operand.vmem [shape: bf16[32,128], index: 0, kind: input, shape index: {}]
  %s1 = inlined_call_operand.vmem [shape: bf16[128,128], index: 1, kind: input, shape index: {}]
  %s2 = inlined_call_operand.vmem [shape: f32[1,128], index: 2, kind: input, shape index: {}]
  %s3 = inlined_call_operand.vmem [shape: f32[32,128], index: 3, kind: output, shape index: {}]
  %s4 = sld [smem:[#allocation0]]
  $region30: #{vit_forward.20} parent=0
    _
  %s6 = ssub.s32 1, %s4
  %s7 = scalar_select 0, %s6, %s4
  // Predicated region
  $region2: #{vit_forward.20} parent=0 // pred_check
    _
  $region3: #{vit_forward.20} parent=0 // pred_check_branch
    %9 = sbr.rel (0) target = $region5
  $region4: #{vit_forward.20} parent=0 // pred_region
    _
  $region5: #{vit_forward.20} parent=0 // pred_fallthru
    _
  // Predicated region
  $region6: #{vit_forward.20} parent=0 // pred_check
    _
  $region7: #{vit_forward.20} parent=0 // pred_check_branch
    %11 = sbr.rel (0) target = $region9
  $region8: #{vit_forward.20} parent=0 // pred_region
    _
  $region9: #{vit_forward.20} parent=0 // pred_fallthru
    _
  // Predicated region
  $region10: #{vit_forward.20} parent=0 // pred_check
    _
  $region11: #{vit_forward.20} parent=0 // pred_check_branch
    %13 = sbr.rel (0) target = $region13
  $region12: #{vit_forward.20} parent=0 // pred_region
    _
  $region13: #{vit_forward.20} parent=0 // pred_fallthru
    _
  %p14 = scmp.eq.s32.totalorder 0, 0
  // Predicated region
  $region14: #{vit_forward.20} parent=0 // pred_check
    %p15 = pneg %p14
  $region15: #{vit_forward.20} parent=0 // pred_check_branch
    %17 = sbr.rel (%p15) target = $region17
  $region16: #{vit_forward.20} parent=0 // pred_region
    %18 = vst [vmem:[#allocation2] sm:$0xff] 0.0
    %19 = vst [vmem:[#allocation2 + $0x8] sm:$0xff] 0.0
    %20 = vst [vmem:[#allocation2 + $0x10] sm:$0xff] 0.0
    %21 = vst [vmem:[#allocation2 + $0x18] sm:$0xff] 0.0
  $region17: #{vit_forward.20} parent=0 // pred_fallthru
    _
  %v22 = vld [vmem:[#allocation2] sm:$0xff]
  %v23 = vld [vmem:[#allocation2 + $0x8] sm:$0xff]
  %v24 = vld [vmem:[#allocation2 + $0x10] sm:$0xff]
  %v25 = vld [vmem:[#allocation2 + $0x18] sm:$0xff]
  %v26 = vld [vmem:[%s0] sm:$0xf]
  %v27 = vld [vmem:[%s0 + $0x4] sm:$0xf]
  %v28 = vld [vmem:[%s0 + $0x8] sm:$0xf]
  %v29 = vld [vmem:[%s0 + $0xc] sm:$0xf]
  %v30 = vld [vmem:[%s1] sm:$0xf]
  %v31 = vld [vmem:[%s1 + $0x4] sm:$0xf]
  %v32 = vld [vmem:[%s1 + $0x8] sm:$0xf]
  %v33 = vld [vmem:[%s1 + $0xc] sm:$0xf]
  %v34 = vld [vmem:[%s1 + $0x10] sm:$0xf]
  %v35 = vld [vmem:[%s1 + $0x14] sm:$0xf]
  %v36 = vld [vmem:[%s1 + $0x18] sm:$0xf]
  %v37 = vld [vmem:[%s1 + $0x1c] sm:$0xf]
  %v38 = vld [vmem:[%s1 + $0x20] sm:$0xf]
  %v39 = vld [vmem:[%s1 + $0x24] sm:$0xf]
  %v40 = vld [vmem:[%s1 + $0x28] sm:$0xf]
  %v41 = vld [vmem:[%s1 + $0x2c] sm:$0xf]
  %v42 = vld [vmem:[%s1 + $0x30] sm:$0xf]
  %v43 = vld [vmem:[%s1 + $0x34] sm:$0xf]
  %v44 = vld [vmem:[%s1 + $0x38] sm:$0xf]
  %v45 = vld [vmem:[%s1 + $0x3c] sm:$0xf]
  %v50 = vunpack.c.l.b16 %v26
  %v51 = vunpack.c.l.b16 %v27
  %v52 = vunpack.c.l.b16 %v28
  %v53 = vunpack.c.l.b16 %v29
  %v54 = vpack.c.b16 %v51, %v50
  %v55 = vpack.c.b16 %v53, %v52
  %v74 = vunpack.c.l.b16 %v30
  %v75 = vunpack.c.l.b16 %v31
  %v76 = vunpack.c.l.b16 %v32
  %v77 = vunpack.c.l.b16 %v33
  %v78 = vunpack.c.l.b16 %v34
  %v79 = vunpack.c.l.b16 %v35
  %v80 = vunpack.c.l.b16 %v36
  %v81 = vunpack.c.l.b16 %v37
  %v82 = vunpack.c.l.b16 %v38
  %v83 = vunpack.c.l.b16 %v39
  %v84 = vunpack.c.l.b16 %v40
  %v85 = vunpack.c.l.b16 %v41
  %v86 = vunpack.c.l.b16 %v42
  %v87 = vunpack.c.l.b16 %v43
  %v88 = vunpack.c.l.b16 %v44
  %v89 = vunpack.c.l.b16 %v45
  %v90 = vpack.c.b16 %v75, %v74
  %v91 = vpack.c.b16 %v77, %v76
  %v92 = vpack.c.b16 %v79, %v78
  %v93 = vpack.c.b16 %v81, %v80
  %v94 = vpack.c.b16 %v83, %v82
  %v95 = vpack.c.b16 %v85, %v84
  %v96 = vpack.c.b16 %v87, %v86
  %v97 = vpack.c.b16 %v89, %v88
  %106 = vmatpush.bf16.msra.mxu0 %v97
  %107 = vmatpush.bf16.msra.mxu0 %v96
  %108 = vmatpush.bf16.msra.mxu0 %v95
  %109 = vmatpush.bf16.msra.mxu0 %v94
  %110 = vmatpush.bf16.msra.mxu0 %v93
  %111 = vmatpush.bf16.msra.mxu0 %v92
  %112 = vmatpush.bf16.msra.mxu0 %v91
  %113 = vmatpush.bf16.msra.mxu0 %v90
  %114 = vmatmul.bf16.gmra.mxu0 %v54
  %v115 = vpop.f32.mrf.mxu0
  %v116 = vadd.f32 0.0, %v115
  %v117 = vpop.f32.mrf.mxu0
  %v118 = vadd.f32 0.0, %v117
  %119 = vmatmul.bf16.gmra.mxu0 %v55
  %v120 = vpop.f32.mrf.mxu0
  %v121 = vadd.f32 0.0, %v120
  %v122 = vpop.f32.mrf.mxu0
  %v123 = vadd.f32 0.0, %v122
  %124 = vdwg.mxu0
  %v125 = vadd.f32 %v22, %v116
  %v126 = vadd.f32 %v23, %v118
  %v127 = vadd.f32 %v24, %v121
  %v128 = vadd.f32 %v25, %v123
  %129 = vst [vmem:[#allocation2] sm:$0xff] %v125
  %130 = vst [vmem:[#allocation2 + $0x8] sm:$0xff] %v126
  %131 = vst [vmem:[#allocation2 + $0x10] sm:$0xff] %v127
  %132 = vst [vmem:[#allocation2 + $0x18] sm:$0xff] %v128
  // Predicated region
  $region18: #{vit_forward.20} parent=0 // pred_check
    %p133 = pneg %p14
  $region19: #{vit_forward.20} parent=0 // pred_check_branch
    %135 = sbr.rel (%p133) target = $region21
  $region20: #{vit_forward.20} parent=0 // pred_region
    %v136 = vld [vmem:[#allocation2] sm:$0xff]
    %v137 = vld [vmem:[#allocation2 + $0x8] sm:$0xff]
    %v138 = vld [vmem:[#allocation2 + $0x10] sm:$0xff]
    %v139 = vld [vmem:[#allocation2 + $0x18] sm:$0xff]
    %v140 = vld [vmem:[%s2] sm:$0x1]
    %v142 = vperm.slane %v140, 0
    %v144 = vadd.f32 %v136, %v142
    %v145 = vadd.f32 %v137, %v142
    %v146 = vadd.f32 %v138, %v142
    %v147 = vadd.f32 %v139, %v142
    %148 = vst [vmem:[%s3] sm:$0xff] %v144
    %149 = vst [vmem:[%s3 + $0x8] sm:$0xff] %v145
    %150 = vst [vmem:[%s3 + $0x10] sm:$0xff] %v146
    %151 = vst [vmem:[%s3 + $0x18] sm:$0xff] %v147
  $region21: #{vit_forward.20} parent=0 // pred_fallthru
    _
  // Predicated region
  $region22: #{vit_forward.20} parent=0 // pred_check
    _
  $region23: #{vit_forward.20} parent=0 // pred_check_branch
    %153 = sbr.rel (0) target = $region25
  $region24: #{vit_forward.20} parent=0 // pred_region
    _
  $region25: #{vit_forward.20} parent=0 // pred_fallthru
    _
  // Predicated region
  $region26: #{vit_forward.20} parent=0 // pred_check
    _
  $region27: #{vit_forward.20} parent=0 // pred_check_branch
    %155 = sbr.rel (0) target = $region29
  $region28: #{vit_forward.20} parent=0 // pred_region
    _
  $region29: #{vit_forward.20} parent=0 // pred_fallthru
    _

// kernel: vit_forward.19
$region0: #{vit_forward.19}
  #allocation0 [shape = 'u32[]', space=smem, size = 0x4, offset = 0x4, fixed_abs, tag = 'smem constant byte address 0x4 - core index']
  #allocation1 [shape = 'u32[72,128]{1,0:T(1,128)}', space=vmem, size = 0x9000, scoped, tag = 'internal scratch']
  #allocation2 [shape = 'f32[32,128]{1,0:T(8,128)}', space=vmem, size = 0x4000, scoped, tag = 'scratch operand']
  %s0 = inlined_call_operand.vmem [shape: bf16[32,256], index: 0, kind: input, shape index: {}]
  %s1 = inlined_call_operand.vmem [shape: bf16[256,128], index: 1, kind: input, shape index: {}]
  %s2 = inlined_call_operand.vmem [shape: f32[1,128], index: 2, kind: input, shape index: {}]
  %s3 = inlined_call_operand.vmem [shape: f32[32,128], index: 3, kind: output, shape index: {}]
  %s4 = sld [smem:[#allocation0]]
  $region30: #{vit_forward.19} parent=0
    _
  %s6 = ssub.s32 1, %s4
  %s7 = scalar_select 0, %s6, %s4
  // Predicated region
  $region2: #{vit_forward.19} parent=0 // pred_check
    _
  $region3: #{vit_forward.19} parent=0 // pred_check_branch
    %9 = sbr.rel (0) target = $region5
  $region4: #{vit_forward.19} parent=0 // pred_region
    _
  $region5: #{vit_forward.19} parent=0 // pred_fallthru
    _
  // Predicated region
  $region6: #{vit_forward.19} parent=0 // pred_check
    _
  $region7: #{vit_forward.19} parent=0 // pred_check_branch
    %11 = sbr.rel (0) target = $region9
  $region8: #{vit_forward.19} parent=0 // pred_region
    _
  $region9: #{vit_forward.19} parent=0 // pred_fallthru
    _
  // Predicated region
  $region10: #{vit_forward.19} parent=0 // pred_check
    _
  $region11: #{vit_forward.19} parent=0 // pred_check_branch
    %13 = sbr.rel (0) target = $region13
  $region12: #{vit_forward.19} parent=0 // pred_region
    _
  $region13: #{vit_forward.19} parent=0 // pred_fallthru
    _
  %p14 = scmp.eq.s32.totalorder 0, 0
  // Predicated region
  $region14: #{vit_forward.19} parent=0 // pred_check
    %p15 = pneg %p14
  $region15: #{vit_forward.19} parent=0 // pred_check_branch
    %17 = sbr.rel (%p15) target = $region17
  $region16: #{vit_forward.19} parent=0 // pred_region
    %18 = vst [vmem:[#allocation2] sm:$0xff] 0.0
    %19 = vst [vmem:[#allocation2 + $0x8] sm:$0xff] 0.0
    %20 = vst [vmem:[#allocation2 + $0x10] sm:$0xff] 0.0
    %21 = vst [vmem:[#allocation2 + $0x18] sm:$0xff] 0.0
  $region17: #{vit_forward.19} parent=0 // pred_fallthru
    _
  %v22 = vld [vmem:[#allocation2] sm:$0xff]
  %v23 = vld [vmem:[#allocation2 + $0x8] sm:$0xff]
  %v24 = vld [vmem:[#allocation2 + $0x10] sm:$0xff]
  %v25 = vld [vmem:[#allocation2 + $0x18] sm:$0xff]
  %v26 = vld [vmem:[%s0] sm:$0xff]
  %v27 = vld [vmem:[%s0 + $0x8] sm:$0xff]
  %v28 = vld [vmem:[%s0 + $0x10] sm:$0xff]
  %v29 = vld [vmem:[%s0 + $0x18] sm:$0xff]
  %v30 = vld [vmem:[%s1] sm:$0xf]
  %v31 = vld [vmem:[%s1 + $0x4] sm:$0xf]
  %v32 = vld [vmem:[%s1 + $0x8] sm:$0xf]
  %v33 = vld [vmem:[%s1 + $0xc] sm:$0xf]
  %v34 = vld [vmem:[%s1 + $0x10] sm:$0xf]
  %v35 = vld [vmem:[%s1 + $0x14] sm:$0xf]
  %v36 = vld [vmem:[%s1 + $0x18] sm:$0xf]
  %v37 = vld [vmem:[%s1 + $0x1c] sm:$0xf]
  %v38 = vld [vmem:[%s1 + $0x20] sm:$0xf]
  %v39 = vld [vmem:[%s1 + $0x24] sm:$0xf]
  %v40 = vld [vmem:[%s1 + $0x28] sm:$0xf]
  %v41 = vld [vmem:[%s1 + $0x2c] sm:$0xf]
  %v42 = vld [vmem:[%s1 + $0x30] sm:$0xf]
  %v43 = vld [vmem:[%s1 + $0x34] sm:$0xf]
  %v44 = vld [vmem:[%s1 + $0x38] sm:$0xf]
  %v45 = vld [vmem:[%s1 + $0x3c] sm:$0xf]
  %v46 = vld [vmem:[%s1 + $0x40] sm:$0xf]
  %v47 = vld [vmem:[%s1 + $0x44] sm:$0xf]
  %v48 = vld [vmem:[%s1 + $0x48] sm:$0xf]
  %v49 = vld [vmem:[%s1 + $0x4c] sm:$0xf]
  %v50 = vld [vmem:[%s1 + $0x50] sm:$0xf]
  %v51 = vld [vmem:[%s1 + $0x54] sm:$0xf]
  %v52 = vld [vmem:[%s1 + $0x58] sm:$0xf]
  %v53 = vld [vmem:[%s1 + $0x5c] sm:$0xf]
  %v54 = vld [vmem:[%s1 + $0x60] sm:$0xf]
  %v55 = vld [vmem:[%s1 + $0x64] sm:$0xf]
  %v56 = vld [vmem:[%s1 + $0x68] sm:$0xf]
  %v57 = vld [vmem:[%s1 + $0x6c] sm:$0xf]
  %v58 = vld [vmem:[%s1 + $0x70] sm:$0xf]
  %v59 = vld [vmem:[%s1 + $0x74] sm:$0xf]
  %v60 = vld [vmem:[%s1 + $0x78] sm:$0xf]
  %v61 = vld [vmem:[%s1 + $0x7c] sm:$0xf]
  %v66 = vunpack.c.l.b16 %v26
  %v67 = vunpack.c.h.b16 %v26
  %v68 = vunpack.c.l.b16 %v27
  %v69 = vunpack.c.h.b16 %v27
  %v70 = vunpack.c.l.b16 %v28
  %v71 = vunpack.c.h.b16 %v28
  %v72 = vunpack.c.l.b16 %v29
  %v73 = vunpack.c.h.b16 %v29
  %v74 = vpack.c.b16 %v68, %v66
  %v75 = vpack.c.b16 %v69, %v67
  %v76 = vpack.c.b16 %v72, %v70
  %v77 = vpack.c.b16 %v73, %v71
  %v114 = vunpack.c.l.b16 %v30
  %v115 = vunpack.c.l.b16 %v31
  %v116 = vunpack.c.l.b16 %v32
  %v117 = vunpack.c.l.b16 %v33
  %v118 = vunpack.c.l.b16 %v34
  %v119 = vunpack.c.l.b16 %v35
  %v120 = vunpack.c.l.b16 %v36
  %v121 = vunpack.c.l.b16 %v37
  %v122 = vunpack.c.l.b16 %v38
  %v123 = vunpack.c.l.b16 %v39
  %v124 = vunpack.c.l.b16 %v40
  %v125 = vunpack.c.l.b16 %v41
  %v126 = vunpack.c.l.b16 %v42
  %v127 = vunpack.c.l.b16 %v43
  %v128 = vunpack.c.l.b16 %v44
  %v129 = vunpack.c.l.b16 %v45
  %v130 = vunpack.c.l.b16 %v46
  %v131 = vunpack.c.l.b16 %v47
  %v132 = vunpack.c.l.b16 %v48
  %v133 = vunpack.c.l.b16 %v49
  %v134 = vunpack.c.l.b16 %v50
  %v135 = vunpack.c.l.b16 %v51
  %v136 = vunpack.c.l.b16 %v52
  %v137 = vunpack.c.l.b16 %v53
  %v138 = vunpack.c.l.b16 %v54
  %v139 = vunpack.c.l.b16 %v55
  %v140 = vunpack.c.l.b16 %v56
  %v141 = vunpack.c.l.b16 %v57
  %v142 = vunpack.c.l.b16 %v58
  %v143 = vunpack.c.l.b16 %v59
  %v144 = vunpack.c.l.b16 %v60
  %v145 = vunpack.c.l.b16 %v61
  %v146 = vpack.c.b16 %v115, %v114
  %v147 = vpack.c.b16 %v117, %v116
  %v148 = vpack.c.b16 %v119, %v118
  %v149 = vpack.c.b16 %v121, %v120
  %v150 = vpack.c.b16 %v123, %v122
  %v151 = vpack.c.b16 %v125, %v124
  %v152 = vpack.c.b16 %v127, %v126
  %v153 = vpack.c.b16 %v129, %v128
  %v154 = vpack.c.b16 %v131, %v130
  %v155 = vpack.c.b16 %v133, %v132
  %v156 = vpack.c.b16 %v135, %v134
  %v157 = vpack.c.b16 %v137, %v136
  %v158 = vpack.c.b16 %v139, %v138
  %v159 = vpack.c.b16 %v141, %v140
  %v160 = vpack.c.b16 %v143, %v142
  %v161 = vpack.c.b16 %v145, %v144
  %178 = vmatpush.bf16.msra.mxu0 %v153
  %179 = vmatpush.bf16.msra.mxu0 %v152
  %180 = vmatpush.bf16.msra.mxu0 %v151
  %181 = vmatpush.bf16.msra.mxu0 %v150
  %182 = vmatpush.bf16.msra.mxu0 %v149
  %183 = vmatpush.bf16.msra.mxu0 %v148
  %184 = vmatpush.bf16.msra.mxu0 %v147
  %185 = vmatpush.bf16.msra.mxu0 %v146
  %186 = vmatmul.bf16.gmra.mxu0 %v74
  %v187 = vpop.f32.mrf.mxu0
  %v188 = vadd.f32 0.0, %v187
  %v189 = vpop.f32.mrf.mxu0
  %v190 = vadd.f32 0.0, %v189
  %191 = vmatmul.bf16.gmra.mxu0 %v76
  %v192 = vpop.f32.mrf.mxu0
  %v193 = vadd.f32 0.0, %v192
  %v194 = vpop.f32.mrf.mxu0
  %v195 = vadd.f32 0.0, %v194
  %196 = vdwg.mxu0
  %197 = vmatpush.bf16.msra.mxu0 %v161
  %198 = vmatpush.bf16.msra.mxu0 %v160
  %199 = vmatpush.bf16.msra.mxu0 %v159
  %200 = vmatpush.bf16.msra.mxu0 %v158
  %201 = vmatpush.bf16.msra.mxu0 %v157
  %202 = vmatpush.bf16.msra.mxu0 %v156
  %203 = vmatpush.bf16.msra.mxu0 %v155
  %204 = vmatpush.bf16.msra.mxu0 %v154
  %205 = vmatmul.bf16.gmra.mxu0 %v75
  %v206 = vpop.f32.mrf.mxu0
  %v207 = vadd.f32 %v188, %v206
  %v208 = vpop.f32.mrf.mxu0
  %v209 = vadd.f32 %v190, %v208
  %210 = vmatmul.bf16.gmra.mxu0 %v77
  %v211 = vpop.f32.mrf.mxu0
  %v212 = vadd.f32 %v193, %v211
  %v213 = vpop.f32.mrf.mxu0
  %v214 = vadd.f32 %v195, %v213
  %215 = vdwg.mxu0
  %v216 = vadd.f32 %v22, %v207
  %v217 = vadd.f32 %v23, %v209
  %v218 = vadd.f32 %v24, %v212
  %v219 = vadd.f32 %v25, %v214
  %220 = vst [vmem:[#allocation2] sm:$0xff] %v216
  %221 = vst [vmem:[#allocation2 + $0x8] sm:$0xff] %v217
  %222 = vst [vmem:[#allocation2 + $0x10] sm:$0xff] %v218
  %223 = vst [vmem:[#allocation2 + $0x18] sm:$0xff] %v219
  // Predicated region
  $region18: #{vit_forward.19} parent=0 // pred_check
    %p224 = pneg %p14
  $region19: #{vit_forward.19} parent=0 // pred_check_branch
    %226 = sbr.rel (%p224) target = $region21
  $region20: #{vit_forward.19} parent=0 // pred_region
    %v227 = vld [vmem:[#allocation2] sm:$0xff]
    %v228 = vld [vmem:[#allocation2 + $0x8] sm:$0xff]
    %v229 = vld [vmem:[#allocation2 + $0x10] sm:$0xff]
    %v230 = vld [vmem:[#allocation2 + $0x18] sm:$0xff]
    %v231 = vld [vmem:[%s2] sm:$0x1]
    %v233 = vperm.slane %v231, 0
    %v235 = vadd.f32 %v227, %v233
    %v236 = vadd.f32 %v228, %v233
    %v237 = vadd.f32 %v229, %v233
    %v238 = vadd.f32 %v230, %v233
    %v239 = vmax.f32 %v235, 0.0
    %v240 = vmax.f32 %v236, 0.0
    %v241 = vmax.f32 %v237, 0.0
    %v242 = vmax.f32 %v238, 0.0
    %243 = vst [vmem:[%s3] sm:$0xff] %v239
    %244 = vst [vmem:[%s3 + $0x8] sm:$0xff] %v240
    %245 = vst [vmem:[%s3 + $0x10] sm:$0xff] %v241
    %246 = vst [vmem:[%s3 + $0x18] sm:$0xff] %v242
  $region21: #{vit_forward.19} parent=0 // pred_fallthru
    _
  // Predicated region
  $region22: #{vit_forward.19} parent=0 // pred_check
    _
  $region23: #{vit_forward.19} parent=0 // pred_check_branch
    %248 = sbr.rel (0) target = $region25
  $region24: #{vit_forward.19} parent=0 // pred_region
    _
  $region25: #{vit_forward.19} parent=0 // pred_fallthru
    _
  // Predicated region
  $region26: #{vit_forward.19} parent=0 // pred_check
    _
  $region27: #{vit_forward.19} parent=0 // pred_check_branch
    %250 = sbr.rel (0) target = $region29
  $region28: #{vit_forward.19} parent=0 // pred_region
    _
  $region29: #{vit_forward.19} parent=0 // pred_fallthru
    _

// kernel: vit_forward.21
$region0: #{vit_forward.21}
  #allocation0 [shape = 'u32[]', space=smem, size = 0x4, offset = 0x4, fixed_abs, tag = 'smem constant byte address 0x4 - core index']
  #allocation1 [shape = 'u32[72,128]{1,0:T(1,128)}', space=vmem, size = 0x9000, scoped, tag = 'internal scratch']
  %s0 = inlined_call_operand.vmem [shape: f32[48,32], index: 0, kind: input, shape index: {}]
  %s1 = inlined_call_operand.vmem [shape: f32[1,32], index: 1, kind: input, shape index: {}]
  %s2 = inlined_call_operand.vmem [shape: f32[1,32], index: 2, kind: input, shape index: {}]
  %s3 = inlined_call_operand.vmem [shape: bf16[32,128], index: 3, kind: input, shape index: {}]
  %s4 = inlined_call_operand.vmem [shape: f32[48,128], index: 4, kind: output, shape index: {}]
  %s5 = sld [smem:[#allocation0]]
  $region26: #{vit_forward.21} parent=0
    _
  %s7 = ssub.s32 1, %s5
  %s8 = scalar_select 0, %s7, %s5
  // Predicated region
  $region2: #{vit_forward.21} parent=0 // pred_check
    _
  $region3: #{vit_forward.21} parent=0 // pred_check_branch
    %10 = sbr.rel (0) target = $region5
  $region4: #{vit_forward.21} parent=0 // pred_region
    _
  $region5: #{vit_forward.21} parent=0 // pred_fallthru
    _
  // Predicated region
  $region6: #{vit_forward.21} parent=0 // pred_check
    _
  $region7: #{vit_forward.21} parent=0 // pred_check_branch
    %12 = sbr.rel (0) target = $region9
  $region8: #{vit_forward.21} parent=0 // pred_region
    _
  $region9: #{vit_forward.21} parent=0 // pred_fallthru
    _
  // Predicated region
  $region10: #{vit_forward.21} parent=0 // pred_check
    _
  $region11: #{vit_forward.21} parent=0 // pred_check_branch
    %14 = sbr.rel (0) target = $region13
  $region12: #{vit_forward.21} parent=0 // pred_region
    _
  $region13: #{vit_forward.21} parent=0 // pred_fallthru
    _
  // Predicated region
  $region14: #{vit_forward.21} parent=0 // pred_check
    _
  $region15: #{vit_forward.21} parent=0 // pred_check_branch
    %16 = sbr.rel (0) target = $region17
  $region16: #{vit_forward.21} parent=0 // pred_region
    _
  $region17: #{vit_forward.21} parent=0 // pred_fallthru
    _
  %v18 = vld [vmem:[%s0] sm:$0xff]
  %v19 = vld [vmem:[%s0 + $0x8] sm:$0xff]
  %v20 = vld [vmem:[%s0 + $0x10] sm:$0xff]
  %v21 = vld [vmem:[%s0 + $0x18] sm:$0xff]
  %v22 = vld [vmem:[%s0 + $0x20] sm:$0xff]
  %v23 = vld [vmem:[%s0 + $0x28] sm:$0xff]
  %vm24 = vcmask 261120
  %v25 = vsel %vm24, %v18, 0.0
  %26 = vadd.xlane.f32.xlu0 %v25
  %v27 = vpop.xlane.xlu0 %26
  %v28 = vsel %vm24, %v19, 0.0
  %29 = vadd.xlane.f32.xlu0 %v28
  %v30 = vpop.xlane.xlu0 %29
  %v31 = vsel %vm24, %v20, 0.0
  %32 = vadd.xlane.f32.xlu0 %v31
  %v33 = vpop.xlane.xlu0 %32
  %v34 = vsel %vm24, %v21, 0.0
  %35 = vadd.xlane.f32.xlu0 %v34
  %v36 = vpop.xlane.xlu0 %35
  %v37 = vsel %vm24, %v22, 0.0
  %38 = vadd.xlane.f32.xlu0 %v37
  %v39 = vpop.xlane.xlu0 %38
  %v40 = vsel %vm24, %v23, 0.0
  %41 = vadd.xlane.f32.xlu0 %v40
  %v42 = vpop.xlane.xlu0 %41
  %v43 = vrcp.pop 32.0
  %v44 = vmul.f32 32.0, %v43
  %v45 = vsub.f32 1.0, %v44
  %v46 = vmul.f32 %v43, %v45
  %v47 = vadd.f32 %v43, %v46
  %vm48 = vweird.f32 %v43
  %v49 = vsel %vm48, %v43, %v47
  %v50 = vmul.f32 %v27, %v49
  %v51 = vmul.f32 %v30, %v49
  %v52 = vmul.f32 %v33, %v49
  %v53 = vmul.f32 %v36, %v49
  %v54 = vmul.f32 %v39, %v49
  %v55 = vmul.f32 %v42, %v49
  %v56 = vsub.f32 %v18, %v50
  %v57 = vsub.f32 %v19, %v51
  %v58 = vsub.f32 %v20, %v52
  %v59 = vsub.f32 %v21, %v53
  %v60 = vsub.f32 %v22, %v54
  %v61 = vsub.f32 %v23, %v55
  %v62 = vmul.f32 %v56, %v56
  %v63 = vmul.f32 %v57, %v57
  %v64 = vmul.f32 %v58, %v58
  %v65 = vmul.f32 %v59, %v59
  %v66 = vmul.f32 %v60, %v60
  %v67 = vmul.f32 %v61, %v61
  %v68 = vsel %vm24, %v62, 0.0
  %69 = vadd.xlane.f32.xlu0 %v68
  %v70 = vpop.xlane.xlu0 %69
  %v71 = vsel %vm24, %v63, 0.0
  %72 = vadd.xlane.f32.xlu0 %v71
  %v73 = vpop.xlane.xlu0 %72
  %v74 = vsel %vm24, %v64, 0.0
  %75 = vadd.xlane.f32.xlu0 %v74
  %v76 = vpop.xlane.xlu0 %75
  %v77 = vsel %vm24, %v65, 0.0
  %78 = vadd.xlane.f32.xlu0 %v77
  %v79 = vpop.xlane.xlu0 %78
  %v80 = vsel %vm24, %v66, 0.0
  %81 = vadd.xlane.f32.xlu0 %v80
  %v82 = vpop.xlane.xlu0 %81
  %v83 = vsel %vm24, %v67, 0.0
  %84 = vadd.xlane.f32.xlu0 %v83
  %v85 = vpop.xlane.xlu0 %84
  %v86 = vmul.f32 %v70, %v49
  %v87 = vmul.f32 %v73, %v49
  %v88 = vmul.f32 %v76, %v49
  %v89 = vmul.f32 %v79, %v49
  %v90 = vmul.f32 %v82, %v49
  %v91 = vmul.f32 %v85, %v49
  %v92 = vadd.f32 %v86, 1e-05
  %v93 = vadd.f32 %v87, 1e-05
  %v94 = vadd.f32 %v88, 1e-05
  %v95 = vadd.f32 %v89, 1e-05
  %v96 = vadd.f32 %v90, 1e-05
  %v97 = vadd.f32 %v91, 1e-05
  %v98 = vrsqrt.pop %v92
  %v99 = vmul.f32 %v98, %v92
  %v100 = vmul.f32 %v99, %v98
  %v101 = vmul.f32 0.5, %v100
  %v102 = vsub.f32 1.5, %v101
  %v103 = vmul.f32 %v98, %v102
  %vm104 = vweird.f32 %v92
  %vm105 = vweird.f32 %v98
  %vm106 = vmor %vm104, %vm105
  %v107 = vsel %vm106, %v98, %v103
  %v108 = vrsqrt.pop %v93
  %v109 = vmul.f32 %v108, %v93
  %v110 = vmul.f32 %v109, %v108
  %v111 = vmul.f32 0.5, %v110
  %v112 = vsub.f32 1.5, %v111
  %v113 = vmul.f32 %v108, %v112
  %vm114 = vweird.f32 %v93
  %vm115 = vweird.f32 %v108
  %vm116 = vmor %vm114, %vm115
  %v117 = vsel %vm116, %v108, %v113
  %v118 = vrsqrt.pop %v94
  %v119 = vmul.f32 %v118, %v94
  %v120 = vmul.f32 %v119, %v118
  %v121 = vmul.f32 0.5, %v120
  %v122 = vsub.f32 1.5, %v121
  %v123 = vmul.f32 %v118, %v122
  %vm124 = vweird.f32 %v94
  %vm125 = vweird.f32 %v118
  %vm126 = vmor %vm124, %vm125
  %v127 = vsel %vm126, %v118, %v123
  %v128 = vrsqrt.pop %v95
  %v129 = vmul.f32 %v128, %v95
  %v130 = vmul.f32 %v129, %v128
  %v131 = vmul.f32 0.5, %v130
  %v132 = vsub.f32 1.5, %v131
  %v133 = vmul.f32 %v128, %v132
  %vm134 = vweird.f32 %v95
  %vm135 = vweird.f32 %v128
  %vm136 = vmor %vm134, %vm135
  %v137 = vsel %vm136, %v128, %v133
  %v138 = vrsqrt.pop %v96
  %v139 = vmul.f32 %v138, %v96
  %v140 = vmul.f32 %v139, %v138
  %v141 = vmul.f32 0.5, %v140
  %v142 = vsub.f32 1.5, %v141
  %v143 = vmul.f32 %v138, %v142
  %vm144 = vweird.f32 %v96
  %vm145 = vweird.f32 %v138
  %vm146 = vmor %vm144, %vm145
  %v147 = vsel %vm146, %v138, %v143
  %v148 = vrsqrt.pop %v97
  %v149 = vmul.f32 %v148, %v97
  %v150 = vmul.f32 %v149, %v148
  %v151 = vmul.f32 0.5, %v150
  %v152 = vsub.f32 1.5, %v151
  %v153 = vmul.f32 %v148, %v152
  %vm154 = vweird.f32 %v97
  %vm155 = vweird.f32 %v148
  %vm156 = vmor %vm154, %vm155
  %v157 = vsel %vm156, %v148, %v153
  %v158 = vmul.f32 %v56, %v107
  %v159 = vmul.f32 %v57, %v117
  %v160 = vmul.f32 %v58, %v127
  %v161 = vmul.f32 %v59, %v137
  %v162 = vmul.f32 %v60, %v147
  %v163 = vmul.f32 %v61, %v157
  %v164 = vld [vmem:[%s1] sm:$0x1]
  %v166 = vperm.slane %v164, 0
  %v168 = vmul.f32 %v158, %v166
  %v169 = vmul.f32 %v159, %v166
  %v170 = vmul.f32 %v160, %v166
  %v171 = vmul.f32 %v161, %v166
  %v172 = vmul.f32 %v162, %v166
  %v173 = vmul.f32 %v163, %v166
  %v174 = vld [vmem:[%s2] sm:$0x1]
  %v176 = vperm.slane %v174, 0
  %v178 = vadd.f32 %v168, %v176
  %v179 = vadd.f32 %v169, %v176
  %v180 = vadd.f32 %v170, %v176
  %v181 = vadd.f32 %v171, %v176
  %v182 = vadd.f32 %v172, %v176
  %v183 = vadd.f32 %v173, %v176
  %v184 = vpack.c.bf16 %v179, %v178
  %v185 = vpack.c.bf16 %v181, %v180
  %v186 = vpack.c.bf16 %v183, %v182
  %v187 = vld [vmem:[%s3] sm:$0xf]
  %v188 = vld [vmem:[%s3 + $0x4] sm:$0xf]
  %v189 = vld [vmem:[%s3 + $0x8] sm:$0xf]
  %v190 = vld [vmem:[%s3 + $0xc] sm:$0xf]
  %v195 = vunpack.c.l.b16 %v187
  %v196 = vunpack.c.l.b16 %v188
  %v197 = vunpack.c.l.b16 %v189
  %v198 = vunpack.c.l.b16 %v190
  %v199 = vpack.c.b16 %v196, %v195
  %v200 = vpack.c.b16 %v198, %v197
  %v204 = vsel %vm24, %v184, 0
  %v207 = vsel %vm24, %v185, 0
  %v210 = vsel %vm24, %v186, 0
  %212 = vmatpush.bf16.msra.mxu0 0
  %213 = vmatpush.bf16.msra.mxu0 0
  %214 = vmatpush.bf16.msra.mxu0 0
  %215 = vmatpush.bf16.msra.mxu0 0
  %216 = vmatpush.bf16.msra.mxu0 0
  %217 = vmatpush.bf16.msra.mxu0 0
  %218 = vmatpush.bf16.msra.mxu0 %v200
  %219 = vmatpush.bf16.msra.mxu0 %v199
  %220 = vmatmul.bf16.gmra.mxu0 %v204
  %v221 = vpop.f32.mrf.mxu0
  %v222 = vadd.f32 0.0, %v221
  %v223 = vpop.f32.mrf.mxu0
  %v224 = vadd.f32 0.0, %v223
  %225 = vmatmul.bf16.gmra.mxu0 %v207
  %v226 = vpop.f32.mrf.mxu0
  %v227 = vadd.f32 0.0, %v226
  %v228 = vpop.f32.mrf.mxu0
  %v229 = vadd.f32 0.0, %v228
  %230 = vmatmul.bf16.gmra.mxu0 %v210
  %v231 = vpop.f32.mrf.mxu0
  %v232 = vadd.f32 0.0, %v231
  %v233 = vpop.f32.mrf.mxu0
  %v234 = vadd.f32 0.0, %v233
  %235 = vdwg.mxu0
  %236 = vst [vmem:[%s4] sm:$0xff] %v222
  %237 = vst [vmem:[%s4 + $0x8] sm:$0xff] %v224
  %238 = vst [vmem:[%s4 + $0x10] sm:$0xff] %v227
  %239 = vst [vmem:[%s4 + $0x18] sm:$0xff] %v229
  %240 = vst [vmem:[%s4 + $0x20] sm:$0xff] %v232
  %241 = vst [vmem:[%s4 + $0x28] sm:$0xff] %v234
  // Predicated region
  $region18: #{vit_forward.21} parent=0 // pred_check
    _
  $region19: #{vit_forward.21} parent=0 // pred_check_branch
    %243 = sbr.rel (0) target = $region21
  $region20: #{vit_forward.21} parent=0 // pred_region
    _
  $region21: #{vit_forward.21} parent=0 // pred_fallthru
    _
  // Predicated region
  $region22: #{vit_forward.21} parent=0 // pred_check
    _
  $region23: #{vit_forward.21} parent=0 // pred_check_branch
    %245 = sbr.rel (0) target = $region25
  $region24: #{vit_forward.21} parent=0 // pred_region
    _
  $region25: #{vit_forward.21} parent=0 // pred_fallthru
    _

// kernel: vit_forward.22
$region0: #{vit_forward.22}
  #allocation0 [shape = 'u32[]', space=smem, size = 0x4, offset = 0x4, fixed_abs, tag = 'smem constant byte address 0x4 - core index']
  #allocation1 [shape = 'u32[72,128]{1,0:T(1,128)}', space=vmem, size = 0x9000, scoped, tag = 'internal scratch']
  %s0 = inlined_call_operand.vmem [shape: f32[2,4,24,8], index: 0, kind: input, shape index: {}]
  %s1 = inlined_call_operand.vmem [shape: f32[2,4,24,8], index: 1, kind: input, shape index: {}]
  %s2 = inlined_call_operand.vmem [shape: f32[2,4,24,8], index: 2, kind: input, shape index: {}]
  %s3 = inlined_call_operand.vmem [shape: f32[2,4,24,8], index: 3, kind: output, shape index: {}]
  %s4 = sld [smem:[#allocation0]]
  $region45: #{vit_forward.22} parent=0
    _
  %s6 = ssub.s32 1, %s4
  %s7 = scalar_select 0, %s6, %s4
  loop: start=0, step=1, limit=4
  $region2: #{vit_forward.22} parent=0 // loop_pre_header
    _
  $region3: #{vit_forward.22} parent=0 // loop_header
    %s9 = sphi 0, %s13
    %p10 = scmp.ge.s32.totalorder %s9, 4
    %s19 = sphi 0, %s21
    %s22 = sphi 0, %s19
    %s23 = sphi 0, %s22
    %s39 = sphi 0, %s23
    %s45 = sphi 0, %s47
    %s48 = sphi 0, %s45
    %s49 = sphi 0, %s48
    %s65 = sphi 0, %s49
    %s71 = sphi 0, %s73
    %s74 = sphi 0, %s71
    %s75 = sphi 0, %s74
    %s91 = sphi 0, %s75
    %s97 = sphi 0, %s99
    %s100 = sphi 0, %s97
    %s101 = sphi 0, %s100
    %s117 = sphi 0, %s101
  $region4: #{vit_forward.22} parent=0 // loop_header_branch
    %12 = sbr.rel (%p10) target = $region8
  $region5: #{vit_forward.22} parent=0 // loop_body
    %s14 = ssub.s32 %s9, 1
    %s15 = ssub.s32 %s9, 2
    %s16 = sadd.s32 %s9, 1
    %s17 = ssub.s32 %s9, %s16
    %p18 = scmp.eq.s32.totalorder %s17, 0
    %s20 = sadd.s32 %s19, 1
    %s21 = scalar_select %p18, %s19, %s20
    %p24 = pneg %p18
    %p25 = scmp.eq.s32.totalorder %s9, 1
    %p26 = por %p24, %p25
    %p27 = scmp.ne.s32.totalorder %s19, %s22
    %p28 = scmp.eq.s32.totalorder %s9, 0
    %p29 = por %p27, %p28
    %p30 = scmp.ne.s32.totalorder %s19, %s22
    %p31 = scmp.eq.s32.totalorder %s14, 1
    %p32 = por %p30, %p31
    %p33 = scmp.ne.s32.totalorder %s22, %s23
    %p34 = scmp.eq.s32.totalorder %s14, 0
    %p35 = por %p33, %p34
    %p36 = scmp.ne.s32.totalorder %s22, %s23
    %p37 = scmp.eq.s32.totalorder %s15, 1
    %p38 = por %p36, %p37
    %p40 = scmp.ne.s32.totalorder %s23, %s39
    %p41 = scmp.eq.s32.totalorder %s15, 0
    %p42 = por %p40, %p41
    %s43 = ssub.s32 %s9, %s16
    %p44 = scmp.eq.s32.totalorder %s43, 0
    %s46 = sadd.s32 %s45, 1
    %s47 = scalar_select %p44, %s45, %s46
    %p50 = pneg %p44
    %p51 = scmp.eq.s32.totalorder %s9, 1
    %p52 = por %p50, %p51
    %p53 = scmp.ne.s32.totalorder %s45, %s48
    %p54 = scmp.eq.s32.totalorder %s9, 0
    %p55 = por %p53, %p54
    %p56 = scmp.ne.s32.totalorder %s45, %s48
    %p57 = scmp.eq.s32.totalorder %s14, 1
    %p58 = por %p56, %p57
    %p59 = scmp.ne.s32.totalorder %s48, %s49
    %p60 = scmp.eq.s32.totalorder %s14, 0
    %p61 = por %p59, %p60
    %p62 = scmp.ne.s32.totalorder %s48, %s49
    %p63 = scmp.eq.s32.totalorder %s15, 1
    %p64 = por %p62, %p63
    %p66 = scmp.ne.s32.totalorder %s49, %s65
    %p67 = scmp.eq.s32.totalorder %s15, 0
    %p68 = por %p66, %p67
    %s69 = ssub.s32 %s9, %s16
    %p70 = scmp.eq.s32.totalorder %s69, 0
    %s72 = sadd.s32 %s71, 1
    %s73 = scalar_select %p70, %s71, %s72
    %p76 = pneg %p70
    %p77 = scmp.eq.s32.totalorder %s9, 1
    %p78 = por %p76, %p77
    %p79 = scmp.ne.s32.totalorder %s71, %s74
    %p80 = scmp.eq.s32.totalorder %s9, 0
    %p81 = por %p79, %p80
    %p82 = scmp.ne.s32.totalorder %s71, %s74
    %p83 = scmp.eq.s32.totalorder %s14, 1
    %p84 = por %p82, %p83
    %p85 = scmp.ne.s32.totalorder %s74, %s75
    %p86 = scmp.eq.s32.totalorder %s14, 0
    %p87 = por %p85, %p86
    %p88 = scmp.ne.s32.totalorder %s74, %s75
    %p89 = scmp.eq.s32.totalorder %s15, 1
    %p90 = por %p88, %p89
    %p92 = scmp.ne.s32.totalorder %s75, %s91
    %p93 = scmp.eq.s32.totalorder %s15, 0
    %p94 = por %p92, %p93
    %s95 = ssub.s32 %s9, %s16
    %p96 = scmp.eq.s32.totalorder %s95, 0
    %s98 = sadd.s32 %s97, 1
    %s99 = scalar_select %p96, %s97, %s98
    %p102 = pneg %p96
    %p103 = scmp.eq.s32.totalorder %s9, 1
    %p104 = por %p102, %p103
    %p105 = scmp.ne.s32.totalorder %s97, %s100
    %p106 = scmp.eq.s32.totalorder %s9, 0
    %p107 = por %p105, %p106
    %p108 = scmp.ne.s32.totalorder %s97, %s100
    %p109 = scmp.eq.s32.totalorder %s14, 1
    %p110 = por %p108, %p109
    %p111 = scmp.ne.s32.totalorder %s100, %s101
    %p112 = scmp.eq.s32.totalorder %s14, 0
    %p113 = por %p111, %p112
    %p114 = scmp.ne.s32.totalorder %s100, %s101
    %p115 = scmp.eq.s32.totalorder %s15, 1
    %p116 = por %p114, %p115
    %p118 = scmp.ne.s32.totalorder %s101, %s117
    %p119 = scmp.eq.s32.totalorder %s15, 0
    %p120 = por %p118, %p119
    %p121 = scmp.le.s32.totalorder 1, %s9
    %p122 = scmp.lt.s32.totalorder %s9, 3
    %p123 = pnand %p121, %p122
    %p124 = pneg %p123
    // Predicated region
    $region9: #{vit_forward.22} parent=5 // pred_check
      _
    $region10: #{vit_forward.22} parent=5 // pred_check_branch
      %126 = sbr.rel (%p123) target = $region12
    $region11: #{vit_forward.22} parent=5 // pred_region
      %s127 = ssub.s32 %s9, 1
    $region12: #{vit_forward.22} parent=5 // pred_fallthru
      _
    %p128 = scmp.lt.s32.totalorder %s9, 2
    // Predicated region
    $region13: #{vit_forward.22} parent=5 // pred_check
      %p129 = pneg %p128
    $region14: #{vit_forward.22} parent=5 // pred_check_branch
      %131 = sbr.rel (%p129) target = $region16
    $region15: #{vit_forward.22} parent=5 // pred_region
      // Predicated region
      $region17: #{vit_forward.22} parent=15 // pred_check
        %p132 = pneg %p29
      $region18: #{vit_forward.22} parent=15 // pred_check_branch
        %134 = sbr.rel (%p132) target = $region20
      $region19: #{vit_forward.22} parent=15 // pred_region
        %p135 = scmp.lt.s32.totalorder %s9, 1
        %s136 = scalar_select %p135, %s9, 1
        %s137 = smul.addr %s136, 12
        %s138 = smul.addr %s137, 8
        %s139 = scalar_lea.vmem %s0, %s138
      $region20: #{vit_forward.22} parent=15 // pred_fallthru
        _
      // Predicated region
      $region21: #{vit_forward.22} parent=15 // pred_check
        %p140 = pneg %p55
      $region22: #{vit_forward.22} parent=15 // pred_check_branch
        %142 = sbr.rel (%p140) target = $region24
      $region23: #{vit_forward.22} parent=15 // pred_region
        %p143 = scmp.lt.s32.totalorder %s9, 1
        %s144 = scalar_select %p143, %s9, 1
        %s145 = smul.addr %s144, 12
        %s146 = smul.addr %s145, 8
        %s147 = scalar_lea.vmem %s1, %s146
      $region24: #{vit_forward.22} parent=15 // pred_fallthru
        _
      // Predicated region
      $region25: #{vit_forward.22} parent=15 // pred_check
        %p148 = pneg %p81
      $region26: #{vit_forward.22} parent=15 // pred_check_branch
        %150 = sbr.rel (%p148) target = $region28
      $region27: #{vit_forward.22} parent=15 // pred_region
        %p151 = scmp.lt.s32.totalorder %s9, 1
        %s152 = scalar_select %p151, %s9, 1
        %s153 = smul.addr %s152, 12
        %s154 = smul.addr %s153, 8
        %s155 = scalar_lea.vmem %s2, %s154
      $region28: #{vit_forward.22} parent=15 // pred_fallthru
        _
    $region16: #{vit_forward.22} parent=5 // pred_fallthru
      _
    %p156 = scmp.le.s32.totalorder 1, %s9
    %p157 = scmp.lt.s32.totalorder %s9, 3
    %p158 = pnand %p156, %p157
    %p159 = pneg %p158
    // Predicated region
    $region29: #{vit_forward.22} parent=5 // pred_check
      _
    $region30: #{vit_forward.22} parent=5 // pred_check_branch
      %161 = sbr.rel (%p158) target = $region32
    $region31: #{vit_forward.22} parent=5 // pred_region
      %s162 = ssub.s32 %s9, 1
      %p163 = scmp.lt.s32.totalorder %s14, 1
      %s164 = scalar_select %p163, %s14, 1
      %s165 = smul.addr %s164, 12
      %s166 = smul.addr %s165, 8
      %s167 = scalar_lea.vmem %s0, %s166
      %p168 = pneg %p35
      %p169 = pneg %p32
      %p170 = scmp.lt.s32.totalorder %s14, 1
      %s171 = scalar_select %p170, %s14, 1
      %s172 = smul.addr %s171, 12
      %s173 = smul.addr %s172, 8
      %s174 = scalar_lea.vmem %s1, %s173
      %p175 = pneg %p61
      %p176 = pneg %p58
      %p177 = scmp.lt.s32.totalorder %s14, 1
      %s178 = scalar_select %p177, %s14, 1
      %s179 = smul.addr %s178, 12
      %s180 = smul.addr %s179, 8
      %s181 = scalar_lea.vmem %s2, %s180
      %p182 = pneg %p87
      %p183 = pneg %p84
      %p184 = pneg %p113
      %p185 = pneg %p110
      %p186 = scmp.lt.s32.totalorder %s14, 1
      %s187 = scalar_select %p186, %s14, 1
      %s188 = smul.addr %s187, 12
      %s189 = smul.addr %s188, 8
      %s190 = scalar_lea.vmem %s3, %s189
      %p191 = scmp.lt.s32.totalorder %s14, 1
      %s192 = scalar_select %p191, %s14, 1
      %s193 = smul.addr %s192, 12
      %s194 = smul.addr %s193, 8
      %s195 = scalar_lea.vmem %s0, %s194
      %p196 = scmp.lt.s32.totalorder %s14, 1
      %s197 = scalar_select %p196, %s14, 1
      %s198 = smul.addr %s197, 12
      %s199 = smul.addr %s198, 8
      %s200 = scalar_lea.vmem %s1, %s199
      %p201 = scmp.lt.s32.totalorder %s14, 1
      %s202 = scalar_select %p201, %s14, 1
      %s203 = smul.addr %s202, 12
      %s204 = smul.addr %s203, 8
      %s205 = scalar_lea.vmem %s2, %s204
      %p206 = scmp.lt.s32.totalorder %s14, 1
      %s207 = scalar_select %p206, %s14, 1
      %s208 = smul.addr %s207, 12
      %s209 = smul.addr %s208, 8
      %s210 = scalar_lea.vmem %s3, %s209
      %v212 = vld [vmem:[%s195] sm:$0xff]
      %v213 = vld [vmem:[%s195 + $0x8] sm:$0xff]
      %v214 = vld [vmem:[%s195 + $0x10] sm:$0xff]
      %v215 = vld [vmem:[%s195 + $0x18] sm:$0xff]
      %v216 = vld [vmem:[%s195 + $0x20] sm:$0xff]
      %v217 = vld [vmem:[%s195 + $0x28] sm:$0xff]
      %v218 = vld [vmem:[%s195 + $0x30] sm:$0xff]
      %v219 = vld [vmem:[%s195 + $0x38] sm:$0xff]
      %v220 = vld [vmem:[%s195 + $0x40] sm:$0xff]
      %v221 = vld [vmem:[%s195 + $0x48] sm:$0xff]
      %v222 = vld [vmem:[%s195 + $0x50] sm:$0xff]
      %v223 = vld [vmem:[%s195 + $0x58] sm:$0xff]
      %v224 = vmul.f32 %v212, 0.35355338
      %v225 = vmul.f32 %v213, 0.35355338
      %v226 = vmul.f32 %v214, 0.35355338
      %v227 = vmul.f32 %v215, 0.35355338
      %v228 = vmul.f32 %v216, 0.35355338
      %v229 = vmul.f32 %v217, 0.35355338
      %v230 = vmul.f32 %v218, 0.35355338
      %v231 = vmul.f32 %v219, 0.35355338
      %v232 = vmul.f32 %v220, 0.35355338
      %v233 = vmul.f32 %v221, 0.35355338
      %v234 = vmul.f32 %v222, 0.35355338
      %v235 = vmul.f32 %v223, 0.35355338
      %v236 = vpack.c.bf16 %v224, %v224
      %v237 = vpack.c.bf16 %v225, %v225
      %v238 = vpack.c.bf16 %v226, %v226
      %v239 = vpack.c.bf16 %v227, %v227
      %v240 = vpack.c.bf16 %v228, %v228
      %v241 = vpack.c.bf16 %v229, %v229
      %v242 = vpack.c.bf16 %v230, %v230
      %v243 = vpack.c.bf16 %v231, %v231
      %v244 = vpack.c.bf16 %v232, %v232
      %v245 = vpack.c.bf16 %v233, %v233
      %v246 = vpack.c.bf16 %v234, %v234
      %v247 = vpack.c.bf16 %v235, %v235
      %v248 = vld [vmem:[%s200] sm:$0xff]
      %v249 = vld [vmem:[%s200 + $0x8] sm:$0xff]
      %v250 = vld [vmem:[%s200 + $0x10] sm:$0xff]
      %v251 = vld [vmem:[%s200 + $0x18] sm:$0xff]
      %v252 = vld [vmem:[%s200 + $0x20] sm:$0xff]
      %v253 = vld [vmem:[%s200 + $0x28] sm:$0xff]
      %v254 = vld [vmem:[%s200 + $0x30] sm:$0xff]
      %v255 = vld [vmem:[%s200 + $0x38] sm:$0xff]
      %v256 = vld [vmem:[%s200 + $0x40] sm:$0xff]
      %v257 = vld [vmem:[%s200 + $0x48] sm:$0xff]
      %v258 = vld [vmem:[%s200 + $0x50] sm:$0xff]
      %v259 = vld [vmem:[%s200 + $0x58] sm:$0xff]
      %v260 = vpack.c.bf16 %v248, %v248
      %v261 = vpack.c.bf16 %v249, %v249
      %v262 = vpack.c.bf16 %v250, %v250
      %v263 = vpack.c.bf16 %v251, %v251
      %v264 = vpack.c.bf16 %v252, %v252
      %v265 = vpack.c.bf16 %v253, %v253
      %v266 = vpack.c.bf16 %v254, %v254
      %v267 = vpack.c.bf16 %v255, %v255
      %v268 = vpack.c.bf16 %v256, %v256
      %v269 = vpack.c.bf16 %v257, %v257
      %v270 = vpack.c.bf16 %v258, %v258
      %v271 = vpack.c.bf16 %v259, %v259
      %v272 = vld [vmem:[%s205] sm:$0xff]
      %v273 = vld [vmem:[%s205 + $0x8] sm:$0xff]
      %v274 = vld [vmem:[%s205 + $0x10] sm:$0xff]
      %v275 = vld [vmem:[%s205 + $0x18] sm:$0xff]
      %v276 = vld [vmem:[%s205 + $0x20] sm:$0xff]
      %v277 = vld [vmem:[%s205 + $0x28] sm:$0xff]
      %v278 = vld [vmem:[%s205 + $0x30] sm:$0xff]
      %v279 = vld [vmem:[%s205 + $0x38] sm:$0xff]
      %v280 = vld [vmem:[%s205 + $0x40] sm:$0xff]
      %v281 = vld [vmem:[%s205 + $0x48] sm:$0xff]
      %v282 = vld [vmem:[%s205 + $0x50] sm:$0xff]
      %v283 = vld [vmem:[%s205 + $0x58] sm:$0xff]
      %v284 = vpack.c.bf16 %v272, %v272
      %v285 = vpack.c.bf16 %v273, %v273
      %v286 = vpack.c.bf16 %v274, %v274
      %v287 = vpack.c.bf16 %v275, %v275
      %v288 = vpack.c.bf16 %v276, %v276
      %v289 = vpack.c.bf16 %v277, %v277
      %v290 = vpack.c.bf16 %v278, %v278
      %v291 = vpack.c.bf16 %v279, %v279
      %v292 = vpack.c.bf16 %v280, %v280
      %v293 = vpack.c.bf16 %v281, %v281
      %v294 = vpack.c.bf16 %v282, %v282
      %v295 = vpack.c.bf16 %v283, %v283
      %v299 = vunpack.c.l.b16 %v236
      %v300 = vunpack.c.l.b16 %v237
      %v301 = vunpack.c.l.b16 %v238
      %v302 = vpack.c.b16 %v300, %v299
      %v303 = vpack.c.b16 %v301, %v301
      %v307 = vunpack.c.l.b16 %v260
      %v308 = vunpack.c.l.b16 %v261
      %v309 = vunpack.c.l.b16 %v262
      %v310 = vpack.c.b16 %v308, %v307
      %v311 = vpack.c.b16 %v309, %v309
      %vm312 = vcmask 64512
      %v314 = vsel %vm312, %v302, 0
      %v317 = vsel %vm312, %v303, 0
      %v320 = vsel %vm312, %v310, 0
      %v323 = vsel %vm312, %v311, 0
      %325 = vmatpush.bf16.xpose.msra.mxu0 0
      %326 = vmatpush.bf16.xpose.msra.mxu0 0
      %327 = vmatpush.bf16.xpose.msra.mxu0 0
      %328 = vmatpush.bf16.xpose.msra.mxu0 0
      %329 = vmatpush.bf16.xpose.msra.mxu0 0
      %330 = vmatpush.bf16.xpose.msra.mxu0 0
      %331 = vmatpush.bf16.xpose.msra.mxu0 %v323
      %332 = vmatpush.bf16.xpose.msra.mxu0 %v320
      %333 = vmatmul.bf16.gmra.mxu0 %v314
      %v334 = vpop.f32.mrf.mxu0
      %v335 = vadd.f32 0.0, %v334
      %v336 = vpop.f32.mrf.mxu0
      %v337 = vadd.f32 0.0, %v336
      %338 = vmatmul.bf16.gmra.mxu0 %v317
      %v339 = vpop.f32.mrf.mxu0
      %v340 = vadd.f32 0.0, %v339
      %v341 = vpop.f32.mrf.mxu0
      %342 = vdwg.mxu0
      %v346 = vunpack.c.l.b16 %v239
      %v347 = vunpack.c.l.b16 %v240
      %v348 = vunpack.c.l.b16 %v241
      %v349 = vpack.c.b16 %v347, %v346
      %v350 = vpack.c.b16 %v348, %v348
      %v354 = vunpack.c.l.b16 %v263
      %v355 = vunpack.c.l.b16 %v264
      %v356 = vunpack.c.l.b16 %v265
      %v357 = vpack.c.b16 %v355, %v354
      %v358 = vpack.c.b16 %v356, %v356
      %v360 = vsel %vm312, %v349, 0
      %v363 = vsel %vm312, %v350, 0
      %v366 = vsel %vm312, %v357, 0
      %v369 = vsel %vm312, %v358, 0
      %371 = vmatpush.bf16.xpose.msra.mxu0 0
      %372 = vmatpush.bf16.xpose.msra.mxu0 0
      %373 = vmatpush.bf16.xpose.msra.mxu0 0
      %374 = vmatpush.bf16.xpose.msra.mxu0 0
      %375 = vmatpush.bf16.xpose.msra.mxu0 0
      %376 = vmatpush.bf16.xpose.msra.mxu0 0
      %377 = vmatpush.bf16.xpose.msra.mxu0 %v369
      %378 = vmatpush.bf16.xpose.msra.mxu0 %v366
      %379 = vmatmul.bf16.gmra.mxu0 %v360
      %v380 = vpop.f32.mrf.mxu0
      %v381 = vadd.f32 0.0, %v380
      %v382 = vpop.f32.mrf.mxu0
      %v383 = vadd.f32 0.0, %v382
      %384 = vmatmul.bf16.gmra.mxu0 %v363
      %v385 = vpop.f32.mrf.mxu0
      %v386 = vadd.f32 0.0, %v385
      %v387 = vpop.f32.mrf.mxu0
      %388 = vdwg.mxu0
      %v392 = vunpack.c.l.b16 %v242
      %v393 = vunpack.c.l.b16 %v243
      %v394 = vunpack.c.l.b16 %v244
      %v395 = vpack.c.b16 %v393, %v392
      %v396 = vpack.c.b16 %v394, %v394
      %v400 = vunpack.c.l.b16 %v266
      %v401 = vunpack.c.l.b16 %v267
      %v402 = vunpack.c.l.b16 %v268
      %v403 = vpack.c.b16 %v401, %v400
      %v404 = vpack.c.b16 %v402, %v402
      %v406 = vsel %vm312, %v395, 0
      %v409 = vsel %vm312, %v396, 0
      %v412 = vsel %vm312, %v403, 0
      %v415 = vsel %vm312, %v404, 0
      %417 = vmatpush.bf16.xpose.msra.mxu0 0
      %418 = vmatpush.bf16.xpose.msra.mxu0 0
      %419 = vmatpush.bf16.xpose.msra.mxu0 0
      %420 = vmatpush.bf16.xpose.msra.mxu0 0
      %421 = vmatpush.bf16.xpose.msra.mxu0 0
      %422 = vmatpush.bf16.xpose.msra.mxu0 0
      %423 = vmatpush.bf16.xpose.msra.mxu0 %v415
      %424 = vmatpush.bf16.xpose.msra.mxu0 %v412
      %425 = vmatmul.bf16.gmra.mxu0 %v406
      %v426 = vpop.f32.mrf.mxu0
      %v427 = vadd.f32 0.0, %v426
      %v428 = vpop.f32.mrf.mxu0
      %v429 = vadd.f32 0.0, %v428
      %430 = vmatmul.bf16.gmra.mxu0 %v409
      %v431 = vpop.f32.mrf.mxu0
      %v432 = vadd.f32 0.0, %v431
      %v433 = vpop.f32.mrf.mxu0
      %434 = vdwg.mxu0
      %v438 = vunpack.c.l.b16 %v245
      %v439 = vunpack.c.l.b16 %v246
      %v440 = vunpack.c.l.b16 %v247
      %v441 = vpack.c.b16 %v439, %v438
      %v442 = vpack.c.b16 %v440, %v440
      %v446 = vunpack.c.l.b16 %v269
      %v447 = vunpack.c.l.b16 %v270
      %v448 = vunpack.c.l.b16 %v271
      %v449 = vpack.c.b16 %v447, %v446
      %v450 = vpack.c.b16 %v448, %v448
      %v452 = vsel %vm312, %v441, 0
      %v455 = vsel %vm312, %v442, 0
      %v458 = vsel %vm312, %v449, 0
      %v461 = vsel %vm312, %v450, 0
      %463 = vmatpush.bf16.xpose.msra.mxu0 0
      %464 = vmatpush.bf16.xpose.msra.mxu0 0
      %465 = vmatpush.bf16.xpose.msra.mxu0 0
      %466 = vmatpush.bf16.xpose.msra.mxu0 0
      %467 = vmatpush.bf16.xpose.msra.mxu0 0
      %468 = vmatpush.bf16.xpose.msra.mxu0 0
      %469 = vmatpush.bf16.xpose.msra.mxu0 %v461
      %470 = vmatpush.bf16.xpose.msra.mxu0 %v458
      %471 = vmatmul.bf16.gmra.mxu0 %v452
      %v472 = vpop.f32.mrf.mxu0
      %v473 = vadd.f32 0.0, %v472
      %v474 = vpop.f32.mrf.mxu0
      %v475 = vadd.f32 0.0, %v474
      %476 = vmatmul.bf16.gmra.mxu0 %v455
      %v477 = vpop.f32.mrf.mxu0
      %v478 = vadd.f32 0.0, %v477
      %v479 = vpop.f32.mrf.mxu0
      %480 = vdwg.mxu0
      %v481 = vlaneseq
      %v482 = vand.u32 %v481, 127
      %vm483 = vcmp.lt.s32.totalorder %v482, 17
      %v484 = vsel %vm483, %v335, -1e+30
      %v485 = vsel %vm483, %v337, -1e+30
      %v486 = vsel %vm483, %v340, -1e+30
      %v487 = vsel %vm483, %v381, -1e+30
      %v488 = vsel %vm483, %v383, -1e+30
      %v489 = vsel %vm483, %v386, -1e+30
      %v490 = vsel %vm483, %v427, -1e+30
      %v491 = vsel %vm483, %v429, -1e+30
      %v492 = vsel %vm483, %v432, -1e+30
      %v493 = vsel %vm483, %v473, -1e+30
      %v494 = vsel %vm483, %v475, -1e+30
      %v495 = vsel %vm483, %v478, -1e+30
      %vm496 = vcmask 195584
      %v497 = vsel %vm496, %v484, -inf
      %498 = vmax.xlane.f32.xlu0 %v497
      %v499 = vpop.xlane.xlu0 %498
      %v500 = vsel %vm496, %v485, -inf
      %501 = vmax.xlane.f32.xlu0 %v500
      %v502 = vpop.xlane.xlu0 %501
      %v503 = vsel %vm496, %v486, -inf
      %504 = vmax.xlane.f32.xlu0 %v503
      %v505 = vpop.xlane.xlu0 %504
      %v506 = vsel %vm496, %v487, -inf
      %507 = vmax.xlane.f32.xlu0 %v506
      %v508 = vpop.xlane.xlu0 %507
      %v509 = vsel %vm496, %v488, -inf
      %510 = vmax.xlane.f32.xlu0 %v509
      %v511 = vpop.xlane.xlu0 %510
      %v512 = vsel %vm496, %v489, -inf
      %513 = vmax.xlane.f32.xlu0 %v512
      %v514 = vpop.xlane.xlu0 %513
      %v515 = vsel %vm496, %v490, -inf
      %516 = vmax.xlane.f32.xlu0 %v515
      %v517 = vpop.xlane.xlu0 %516
      %v518 = vsel %vm496, %v491, -inf
      %519 = vmax.xlane.f32.xlu0 %v518
      %v520 = vpop.xlane.xlu0 %519
      %v521 = vsel %vm496, %v492, -inf
      %522 = vmax.xlane.f32.xlu0 %v521
      %v523 = vpop.xlane.xlu0 %522
      %v524 = vsel %vm496, %v493, -inf
      %525 = vmax.xlane.f32.xlu0 %v524
      %v526 = vpop.xlane.xlu0 %525
      %v527 = vsel %vm496, %v494, -inf
      %528 = vmax.xlane.f32.xlu0 %v527
      %v529 = vpop.xlane.xlu0 %528
      %v530 = vsel %vm496, %v495, -inf
      %531 = vmax.xlane.f32.xlu0 %v530
      %v532 = vpop.xlane.xlu0 %531
      %v533 = vsub.f32 %v484, %v499
      %v534 = vsub.f32 %v485, %v502
      %v535 = vsub.f32 %v486, %v505
      %v536 = vsub.f32 %v487, %v508
      %v537 = vsub.f32 %v488, %v511
      %v538 = vsub.f32 %v489, %v514
      %v539 = vsub.f32 %v490, %v517
      %v540 = vsub.f32 %v491, %v520
      %v541 = vsub.f32 %v492, %v523
      %v542 = vsub.f32 %v493, %v526
      %v543 = vsub.f32 %v494, %v529
      %v544 = vsub.f32 %v495, %v532
      %v545 = vmul.f32 %v533, 1.442695
      %v546 = vpow.pop %v545
      %v547 = vmul.f32 %v534, 1.442695
      %v548 = vpow.pop %v547
      %v549 = vmul.f32 %v535, 1.442695
      %v550 = vpow.pop %v549
      %v551 = vmul.f32 %v536, 1.442695
      %v552 = vpow.pop %v551
      %v553 = vmul.f32 %v537, 1.442695
      %v554 = vpow.pop %v553
      %v555 = vmul.f32 %v538, 1.442695
      %v556 = vpow.pop %v555
      %v557 = vmul.f32 %v539, 1.442695
      %v558 = vpow.pop %v557
      %v559 = vmul.f32 %v540, 1.442695
      %v560 = vpow.pop %v559
      %v561 = vmul.f32 %v541, 1.442695
      %v562 = vpow.pop %v561
      %v563 = vmul.f32 %v542, 1.442695
      %v564 = vpow.pop %v563
      %v565 = vmul.f32 %v543, 1.442695
      %v566 = vpow.pop %v565
      %v567 = vmul.f32 %v544, 1.442695
      %v568 = vpow.pop %v567
      %v569 = vsel %vm496, %v546, 0.0
      %570 = vadd.xlane.f32.xlu0 %v569
      %v571 = vpop.xlane.xlu0 %570
      %v572 = vsel %vm496, %v548, 0.0
      %573 = vadd.xlane.f32.xlu0 %v572
      %v574 = vpop.xlane.xlu0 %573
      %v575 = vsel %vm496, %v550, 0.0
      %576 = vadd.xlane.f32.xlu0 %v575
      %v577 = vpop.xlane.xlu0 %576
      %v578 = vsel %vm496, %v552, 0.0
      %579 = vadd.xlane.f32.xlu0 %v578
      %v580 = vpop.xlane.xlu0 %579
      %v581 = vsel %vm496, %v554, 0.0
      %582 = vadd.xlane.f32.xlu0 %v581
      %v583 = vpop.xlane.xlu0 %582
      %v584 = vsel %vm496, %v556, 0.0
      %585 = vadd.xlane.f32.xlu0 %v584
      %v586 = vpop.xlane.xlu0 %585
      %v587 = vsel %vm496, %v558, 0.0
      %588 = vadd.xlane.f32.xlu0 %v587
      %v589 = vpop.xlane.xlu0 %588
      %v590 = vsel %vm496, %v560, 0.0
      %591 = vadd.xlane.f32.xlu0 %v590
      %v592 = vpop.xlane.xlu0 %591
      %v593 = vsel %vm496, %v562, 0.0
      %594 = vadd.xlane.f32.xlu0 %v593
      %v595 = vpop.xlane.xlu0 %594
      %v596 = vsel %vm496, %v564, 0.0
      %597 = vadd.xlane.f32.xlu0 %v596
      %v598 = vpop.xlane.xlu0 %597
      %v599 = vsel %vm496, %v566, 0.0
      %600 = vadd.xlane.f32.xlu0 %v599
      %v601 = vpop.xlane.xlu0 %600
      %v602 = vsel %vm496, %v568, 0.0
      %603 = vadd.xlane.f32.xlu0 %v602
      %v604 = vpop.xlane.xlu0 %603
      %v605 = vrcp.pop %v571
      %v606 = vrcp.pop %v574
      %v607 = vrcp.pop %v577
      %v608 = vrcp.pop %v580
      %v609 = vrcp.pop %v583
      %v610 = vrcp.pop %v586
      %v611 = vrcp.pop %v589
      %v612 = vrcp.pop %v592
      %v613 = vrcp.pop %v595
      %v614 = vrcp.pop %v598
      %v615 = vrcp.pop %v601
      %v616 = vrcp.pop %v604
      %v617 = vmul.f32 %v546, %v605
      %v618 = vmul.f32 %v548, %v606
      %v619 = vmul.f32 %v550, %v607
      %v620 = vmul.f32 %v552, %v608
      %v621 = vmul.f32 %v554, %v609
      %v622 = vmul.f32 %v556, %v610
      %v623 = vmul.f32 %v558, %v611
      %v624 = vmul.f32 %v560, %v612
      %v625 = vmul.f32 %v562, %v613
      %v626 = vmul.f32 %v564, %v614
      %v627 = vmul.f32 %v566, %v615
      %v628 = vmul.f32 %v568, %v616
      %v629 = vpack.c.bf16 %v617, %v617
      %v630 = vpack.c.bf16 %v618, %v618
      %v631 = vpack.c.bf16 %v619, %v619
      %v632 = vpack.c.bf16 %v620, %v620
      %v633 = vpack.c.bf16 %v621, %v621
      %v634 = vpack.c.bf16 %v622, %v622
      %v635 = vpack.c.bf16 %v623, %v623
      %v636 = vpack.c.bf16 %v624, %v624
      %v637 = vpack.c.bf16 %v625, %v625
      %v638 = vpack.c.bf16 %v626, %v626
      %v639 = vpack.c.bf16 %v627, %v627
      %v640 = vpack.c.bf16 %v628, %v628
      %v644 = vunpack.c.l.b16 %v629
      %v645 = vunpack.c.l.b16 %v630
      %v646 = vunpack.c.l.b16 %v631
      %v647 = vpack.c.b16 %v645, %v644
      %v648 = vpack.c.b16 %v646, %v646
      %v652 = vunpack.c.l.b16 %v284
      %v653 = vunpack.c.l.b16 %v285
      %v654 = vunpack.c.l.b16 %v286
      %v655 = vpack.c.b16 %v653, %v652
      %v656 = vpack.c.b16 %v654, %v654
      %v659 = vsel %vm496, %v647, 0
      %v662 = vsel %vm496, %v648, 0
      %vm664 = vcmask 1043456
      %v666 = vsel %vm664, %v656, 0
      %668 = vmatpush.bf16.msra.mxu0 0
      %669 = vmatpush.bf16.msra.mxu0 0
      %670 = vmatpush.bf16.msra.mxu0 0
      %671 = vmatpush.bf16.msra.mxu0 0
      %672 = vmatpush.bf16.msra.mxu0 0
      %673 = vmatpush.bf16.msra.mxu0 0
      %674 = vmatpush.bf16.msra.mxu0 %v666
      %675 = vmatpush.bf16.msra.mxu0 %v655
      %676 = vmatmul.bf16.gmra.mxu0 %v659
      %v677 = vpop.f32.mrf.mxu0
      %v678 = vadd.f32 0.0, %v677
      %v679 = vpop.f32.mrf.mxu0
      %v680 = vadd.f32 0.0, %v679
      %681 = vmatmul.bf16.gmra.mxu0 %v662
      %v682 = vpop.f32.mrf.mxu0
      %v683 = vadd.f32 0.0, %v682
      %v684 = vpop.f32.mrf.mxu0
      %685 = vdwg.mxu0
      %v689 = vunpack.c.l.b16 %v632
      %v690 = vunpack.c.l.b16 %v633
      %v691 = vunpack.c.l.b16 %v634
      %v692 = vpack.c.b16 %v690, %v689
      %v693 = vpack.c.b16 %v691, %v691
      %v697 = vunpack.c.l.b16 %v287
      %v698 = vunpack.c.l.b16 %v288
      %v699 = vunpack.c.l.b16 %v289
      %v700 = vpack.c.b16 %v698, %v697
      %v701 = vpack.c.b16 %v699, %v699
      %v704 = vsel %vm496, %v692, 0
      %v707 = vsel %vm496, %v693, 0
      %v710 = vsel %vm664, %v701, 0
      %712 = vmatpush.bf16.msra.mxu0 0
      %713 = vmatpush.bf16.msra.mxu0 0
      %714 = vmatpush.bf16.msra.mxu0 0
      %715 = vmatpush.bf16.msra.mxu0 0
      %716 = vmatpush.bf16.msra.mxu0 0
      %717 = vmatpush.bf16.msra.mxu0 0
      %718 = vmatpush.bf16.msra.mxu0 %v710
      %719 = vmatpush.bf16.msra.mxu0 %v700
      %720 = vmatmul.bf16.gmra.mxu0 %v704
      %v721 = vpop.f32.mrf.mxu0
      %v722 = vadd.f32 0.0, %v721
      %v723 = vpop.f32.mrf.mxu0
      %v724 = vadd.f32 0.0, %v723
      %725 = vmatmul.bf16.gmra.mxu0 %v707
      %v726 = vpop.f32.mrf.mxu0
      %v727 = vadd.f32 0.0, %v726
      %v728 = vpop.f32.mrf.mxu0
      %729 = vdwg.mxu0
      %v733 = vunpack.c.l.b16 %v635
      %v734 = vunpack.c.l.b16 %v636
      %v735 = vunpack.c.l.b16 %v637
      %v736 = vpack.c.b16 %v734, %v733
      %v737 = vpack.c.b16 %v735, %v735
      %v741 = vunpack.c.l.b16 %v290
      %v742 = vunpack.c.l.b16 %v291
      %v743 = vunpack.c.l.b16 %v292
      %v744 = vpack.c.b16 %v742, %v741
      %v745 = vpack.c.b16 %v743, %v743
      %v748 = vsel %vm496, %v736, 0
      %v751 = vsel %vm496, %v737, 0
      %v754 = vsel %vm664, %v745, 0
      %756 = vmatpush.bf16.msra.mxu0 0
      %757 = vmatpush.bf16.msra.mxu0 0
      %758 = vmatpush.bf16.msra.mxu0 0
      %759 = vmatpush.bf16.msra.mxu0 0
      %760 = vmatpush.bf16.msra.mxu0 0
      %761 = vmatpush.bf16.msra.mxu0 0
      %762 = vmatpush.bf16.msra.mxu0 %v754
      %763 = vmatpush.bf16.msra.mxu0 %v744
      %764 = vmatmul.bf16.gmra.mxu0 %v748
      %v765 = vpop.f32.mrf.mxu0
      %v766 = vadd.f32 0.0, %v765
      %v767 = vpop.f32.mrf.mxu0
      %v768 = vadd.f32 0.0, %v767
      %769 = vmatmul.bf16.gmra.mxu0 %v751
      %v770 = vpop.f32.mrf.mxu0
      %v771 = vadd.f32 0.0, %v770
      %v772 = vpop.f32.mrf.mxu0
      %773 = vdwg.mxu0
      %v777 = vunpack.c.l.b16 %v638
      %v778 = vunpack.c.l.b16 %v639
      %v779 = vunpack.c.l.b16 %v640
      %v780 = vpack.c.b16 %v778, %v777
      %v781 = vpack.c.b16 %v779, %v779
      %v785 = vunpack.c.l.b16 %v293
      %v786 = vunpack.c.l.b16 %v294
      %v787 = vunpack.c.l.b16 %v295
      %v788 = vpack.c.b16 %v786, %v785
      %v789 = vpack.c.b16 %v787, %v787
      %v792 = vsel %vm496, %v780, 0
      %v795 = vsel %vm496, %v781, 0
      %v798 = vsel %vm664, %v789, 0
      %800 = vmatpush.bf16.msra.mxu0 0
      %801 = vmatpush.bf16.msra.mxu0 0
      %802 = vmatpush.bf16.msra.mxu0 0
      %803 = vmatpush.bf16.msra.mxu0 0
      %804 = vmatpush.bf16.msra.mxu0 0
      %805 = vmatpush.bf16.msra.mxu0 0
      %806 = vmatpush.bf16.msra.mxu0 %v798
      %807 = vmatpush.bf16.msra.mxu0 %v788
      %808 = vmatmul.bf16.gmra.mxu0 %v792
      %v809 = vpop.f32.mrf.mxu0
      %v810 = vadd.f32 0.0, %v809
      %v811 = vpop.f32.mrf.mxu0
      %v812 = vadd.f32 0.0, %v811
      %813 = vmatmul.bf16.gmra.mxu0 %v795
      %v814 = vpop.f32.mrf.mxu0
      %v815 = vadd.f32 0.0, %v814
      %v816 = vpop.f32.mrf.mxu0
      %817 = vdwg.mxu0
      %818 = vst.msk [vmem:[%s210] sm:$0xff] %vm312, %v678
      %819 = vst.msk [vmem:[%s210 + $0x8] sm:$0xff] %vm312, %v680
      %820 = vst.msk [vmem:[%s210 + $0x10] sm:$0xff] %vm312, %v683
      %821 = vst.msk [vmem:[%s210 + $0x18] sm:$0xff] %vm312, %v722
      %822 = vst.msk [vmem:[%s210 + $0x20] sm:$0xff] %vm312, %v724
      %823 = vst.msk [vmem:[%s210 + $0x28] sm:$0xff] %vm312, %v727
      %824 = vst.msk [vmem:[%s210 + $0x30] sm:$0xff] %vm312, %v766
      %825 = vst.msk [vmem:[%s210 + $0x38] sm:$0xff] %vm312, %v768
      %826 = vst.msk [vmem:[%s210 + $0x40] sm:$0xff] %vm312, %v771
      %827 = vst.msk [vmem:[%s210 + $0x48] sm:$0xff] %vm312, %v810
      %828 = vst.msk [vmem:[%s210 + $0x50] sm:$0xff] %vm312, %v812
      %829 = vst.msk [vmem:[%s210 + $0x58] sm:$0xff] %vm312, %v815
      %p830 = scmp.lt.s32.totalorder %s14, 1
      %s831 = scalar_select %p830, %s14, 1
      %s832 = smul.addr %s831, 12
      %s833 = smul.addr %s832, 8
      %s834 = scalar_lea.vmem %s3, %s833
      // Predicated region
      $region33: #{vit_forward.22} parent=31 // pred_check
        %p835 = pneg %p110
      $region34: #{vit_forward.22} parent=31 // pred_check_branch
        %837 = sbr.rel (%p835) target = $region36
      $region35: #{vit_forward.22} parent=31 // pred_region
        _
      $region36: #{vit_forward.22} parent=31 // pred_fallthru
        _
    $region32: #{vit_forward.22} parent=5 // pred_fallthru
      _
    %p838 = scmp.le.s32.totalorder 2, %s9
    // Predicated region
    $region37: #{vit_forward.22} parent=5 // pred_check
      %p839 = pneg %p838
    $region38: #{vit_forward.22} parent=5 // pred_check_branch
      %841 = sbr.rel (%p839) target = $region40
    $region39: #{vit_forward.22} parent=5 // pred_region
      %s842 = ssub.s32 %s9, 2
      // Predicated region
      $region41: #{vit_forward.22} parent=39 // pred_check
        %p843 = pneg %p116
      $region42: #{vit_forward.22} parent=39 // pred_check_branch
        %845 = sbr.rel (%p843) target = $region44
      $region43: #{vit_forward.22} parent=39 // pred_region
        %p846 = scmp.lt.s32.totalorder %s15, 1
        %s847 = scalar_select %p846, %s15, 1
        %s848 = smul.addr %s847, 12
        %s849 = smul.addr %s848, 8
        %s850 = scalar_lea.vmem %s3, %s849
      $region44: #{vit_forward.22} parent=39 // pred_fallthru
        _
    $region40: #{vit_forward.22} parent=5 // pred_fallthru
      _
  $region6: #{vit_forward.22} parent=0 // loop_footer
    %s13 = sadd.s32 1, %s9
  $region7: #{vit_forward.22} parent=0 // loop_footer_branch
    %8 = sbr.rel target = $region3
  $region8: #{vit_forward.22} parent=0 // loop_exit
    _

// kernel: vit_forward.23
$region0: #{vit_forward.23}
  #allocation0 [shape = 'u32[]', space=smem, size = 0x4, offset = 0x4, fixed_abs, tag = 'smem constant byte address 0x4 - core index']
  #allocation1 [shape = 'u32[72,128]{1,0:T(1,128)}', space=vmem, size = 0x9000, scoped, tag = 'internal scratch']
  #allocation2 [shape = 'f32[48,128]{1,0:T(8,128)}', space=vmem, size = 0x6000, scoped, tag = 'scratch operand']
  %s0 = inlined_call_operand.vmem [shape: bf16[48,128], index: 0, kind: input, shape index: {}]
  %s1 = inlined_call_operand.vmem [shape: bf16[128,128], index: 1, kind: input, shape index: {}]
  %s2 = inlined_call_operand.vmem [shape: f32[1,128], index: 2, kind: input, shape index: {}]
  %s3 = inlined_call_operand.vmem [shape: f32[48,128], index: 3, kind: output, shape index: {}]
  %s4 = sld [smem:[#allocation0]]
  $region30: #{vit_forward.23} parent=0
    _
  %s6 = ssub.s32 1, %s4
  %s7 = scalar_select 0, %s6, %s4
  // Predicated region
  $region2: #{vit_forward.23} parent=0 // pred_check
    _
  $region3: #{vit_forward.23} parent=0 // pred_check_branch
    %9 = sbr.rel (0) target = $region5
  $region4: #{vit_forward.23} parent=0 // pred_region
    _
  $region5: #{vit_forward.23} parent=0 // pred_fallthru
    _
  // Predicated region
  $region6: #{vit_forward.23} parent=0 // pred_check
    _
  $region7: #{vit_forward.23} parent=0 // pred_check_branch
    %11 = sbr.rel (0) target = $region9
  $region8: #{vit_forward.23} parent=0 // pred_region
    _
  $region9: #{vit_forward.23} parent=0 // pred_fallthru
    _
  // Predicated region
  $region10: #{vit_forward.23} parent=0 // pred_check
    _
  $region11: #{vit_forward.23} parent=0 // pred_check_branch
    %13 = sbr.rel (0) target = $region13
  $region12: #{vit_forward.23} parent=0 // pred_region
    _
  $region13: #{vit_forward.23} parent=0 // pred_fallthru
    _
  %p14 = scmp.eq.s32.totalorder 0, 0
  // Predicated region
  $region14: #{vit_forward.23} parent=0 // pred_check
    %p15 = pneg %p14
  $region15: #{vit_forward.23} parent=0 // pred_check_branch
    %17 = sbr.rel (%p15) target = $region17
  $region16: #{vit_forward.23} parent=0 // pred_region
    %18 = vst [vmem:[#allocation2] sm:$0xff] 0.0
    %19 = vst [vmem:[#allocation2 + $0x8] sm:$0xff] 0.0
    %20 = vst [vmem:[#allocation2 + $0x10] sm:$0xff] 0.0
    %21 = vst [vmem:[#allocation2 + $0x18] sm:$0xff] 0.0
    %22 = vst [vmem:[#allocation2 + $0x20] sm:$0xff] 0.0
    %23 = vst [vmem:[#allocation2 + $0x28] sm:$0xff] 0.0
  $region17: #{vit_forward.23} parent=0 // pred_fallthru
    _
  %v24 = vld [vmem:[#allocation2] sm:$0xff]
  %v25 = vld [vmem:[#allocation2 + $0x8] sm:$0xff]
  %v26 = vld [vmem:[#allocation2 + $0x10] sm:$0xff]
  %v27 = vld [vmem:[#allocation2 + $0x18] sm:$0xff]
  %v28 = vld [vmem:[#allocation2 + $0x20] sm:$0xff]
  %v29 = vld [vmem:[#allocation2 + $0x28] sm:$0xff]
  %v30 = vld [vmem:[%s0] sm:$0xf]
  %v31 = vld [vmem:[%s0 + $0x4] sm:$0xf]
  %v32 = vld [vmem:[%s0 + $0x8] sm:$0xf]
  %v33 = vld [vmem:[%s0 + $0xc] sm:$0xf]
  %v34 = vld [vmem:[%s0 + $0x10] sm:$0xf]
  %v35 = vld [vmem:[%s0 + $0x14] sm:$0xf]
  %v36 = vld [vmem:[%s1] sm:$0xf]
  %v37 = vld [vmem:[%s1 + $0x4] sm:$0xf]
  %v38 = vld [vmem:[%s1 + $0x8] sm:$0xf]
  %v39 = vld [vmem:[%s1 + $0xc] sm:$0xf]
  %v40 = vld [vmem:[%s1 + $0x10] sm:$0xf]
  %v41 = vld [vmem:[%s1 + $0x14] sm:$0xf]
  %v42 = vld [vmem:[%s1 + $0x18] sm:$0xf]
  %v43 = vld [vmem:[%s1 + $0x1c] sm:$0xf]
  %v44 = vld [vmem:[%s1 + $0x20] sm:$0xf]
  %v45 = vld [vmem:[%s1 + $0x24] sm:$0xf]
  %v46 = vld [vmem:[%s1 + $0x28] sm:$0xf]
  %v47 = vld [vmem:[%s1 + $0x2c] sm:$0xf]
  %v48 = vld [vmem:[%s1 + $0x30] sm:$0xf]
  %v49 = vld [vmem:[%s1 + $0x34] sm:$0xf]
  %v50 = vld [vmem:[%s1 + $0x38] sm:$0xf]
  %v51 = vld [vmem:[%s1 + $0x3c] sm:$0xf]
  %v58 = vunpack.c.l.b16 %v30
  %v59 = vunpack.c.l.b16 %v31
  %v60 = vunpack.c.l.b16 %v32
  %v61 = vunpack.c.l.b16 %v33
  %v62 = vunpack.c.l.b16 %v34
  %v63 = vunpack.c.l.b16 %v35
  %v64 = vpack.c.b16 %v59, %v58
  %v65 = vpack.c.b16 %v61, %v60
  %v66 = vpack.c.b16 %v63, %v62
  %v86 = vunpack.c.l.b16 %v36
  %v87 = vunpack.c.l.b16 %v37
  %v88 = vunpack.c.l.b16 %v38
  %v89 = vunpack.c.l.b16 %v39
  %v90 = vunpack.c.l.b16 %v40
  %v91 = vunpack.c.l.b16 %v41
  %v92 = vunpack.c.l.b16 %v42
  %v93 = vunpack.c.l.b16 %v43
  %v94 = vunpack.c.l.b16 %v44
  %v95 = vunpack.c.l.b16 %v45
  %v96 = vunpack.c.l.b16 %v46
  %v97 = vunpack.c.l.b16 %v47
  %v98 = vunpack.c.l.b16 %v48
  %v99 = vunpack.c.l.b16 %v49
  %v100 = vunpack.c.l.b16 %v50
  %v101 = vunpack.c.l.b16 %v51
  %v102 = vpack.c.b16 %v87, %v86
  %v103 = vpack.c.b16 %v89, %v88
  %v104 = vpack.c.b16 %v91, %v90
  %v105 = vpack.c.b16 %v93, %v92
  %v106 = vpack.c.b16 %v95, %v94
  %v107 = vpack.c.b16 %v97, %v96
  %v108 = vpack.c.b16 %v99, %v98
  %v109 = vpack.c.b16 %v101, %v100
  %118 = vmatpush.bf16.msra.mxu0 %v109
  %119 = vmatpush.bf16.msra.mxu0 %v108
  %120 = vmatpush.bf16.msra.mxu0 %v107
  %121 = vmatpush.bf16.msra.mxu0 %v106
  %122 = vmatpush.bf16.msra.mxu0 %v105
  %123 = vmatpush.bf16.msra.mxu0 %v104
  %124 = vmatpush.bf16.msra.mxu0 %v103
  %125 = vmatpush.bf16.msra.mxu0 %v102
  %126 = vmatmul.bf16.gmra.mxu0 %v64
  %v127 = vpop.f32.mrf.mxu0
  %v128 = vadd.f32 0.0, %v127
  %v129 = vpop.f32.mrf.mxu0
  %v130 = vadd.f32 0.0, %v129
  %131 = vmatmul.bf16.gmra.mxu0 %v65
  %v132 = vpop.f32.mrf.mxu0
  %v133 = vadd.f32 0.0, %v132
  %v134 = vpop.f32.mrf.mxu0
  %v135 = vadd.f32 0.0, %v134
  %136 = vmatmul.bf16.gmra.mxu0 %v66
  %v137 = vpop.f32.mrf.mxu0
  %v138 = vadd.f32 0.0, %v137
  %v139 = vpop.f32.mrf.mxu0
  %v140 = vadd.f32 0.0, %v139
  %141 = vdwg.mxu0
  %v142 = vadd.f32 %v24, %v128
  %v143 = vadd.f32 %v25, %v130
  %v144 = vadd.f32 %v26, %v133
  %v145 = vadd.f32 %v27, %v135
  %v146 = vadd.f32 %v28, %v138
  %v147 = vadd.f32 %v29, %v140
  %148 = vst [vmem:[#allocation2] sm:$0xff] %v142
  %149 = vst [vmem:[#allocation2 + $0x8] sm:$0xff] %v143
  %150 = vst [vmem:[#allocation2 + $0x10] sm:$0xff] %v144
  %151 = vst [vmem:[#allocation2 + $0x18] sm:$0xff] %v145
  %152 = vst [vmem:[#allocation2 + $0x20] sm:$0xff] %v146
  %153 = vst [vmem:[#allocation2 + $0x28] sm:$0xff] %v147
  // Predicated region
  $region18: #{vit_forward.23} parent=0 // pred_check
    %p154 = pneg %p14
  $region19: #{vit_forward.23} parent=0 // pred_check_branch
    %156 = sbr.rel (%p154) target = $region21
  $region20: #{vit_forward.23} parent=0 // pred_region
    %v157 = vld [vmem:[#allocation2] sm:$0xff]
    %v158 = vld [vmem:[#allocation2 + $0x8] sm:$0xff]
    %v159 = vld [vmem:[#allocation2 + $0x10] sm:$0xff]
    %v160 = vld [vmem:[#allocation2 + $0x18] sm:$0xff]
    %v161 = vld [vmem:[#allocation2 + $0x20] sm:$0xff]
    %v162 = vld [vmem:[#allocation2 + $0x28] sm:$0xff]
    %v163 = vld [vmem:[%s2] sm:$0x1]
    %v165 = vperm.slane %v163, 0
    %v167 = vadd.f32 %v157, %v165
    %v168 = vadd.f32 %v158, %v165
    %v169 = vadd.f32 %v159, %v165
    %v170 = vadd.f32 %v160, %v165
    %v171 = vadd.f32 %v161, %v165
    %v172 = vadd.f32 %v162, %v165
    %173 = vst [vmem:[%s3] sm:$0xff] %v167
    %174 = vst [vmem:[%s3 + $0x8] sm:$0xff] %v168
    %175 = vst [vmem:[%s3 + $0x10] sm:$0xff] %v169
    %176 = vst [vmem:[%s3 + $0x18] sm:$0xff] %v170
    %177 = vst [vmem:[%s3 + $0x20] sm:$0xff] %v171
    %178 = vst [vmem:[%s3 + $0x28] sm:$0xff] %v172
  $region21: #{vit_forward.23} parent=0 // pred_fallthru
    _
  // Predicated region
  $region22: #{vit_forward.23} parent=0 // pred_check
    _
  $region23: #{vit_forward.23} parent=0 // pred_check_branch
    %180 = sbr.rel (0) target = $region25
  $region24: #{vit_forward.23} parent=0 // pred_region
    _
  $region25: #{vit_forward.23} parent=0 // pred_fallthru
    _
  // Predicated region
  $region26: #{vit_forward.23} parent=0 // pred_check
    _
  $region27: #{vit_forward.23} parent=0 // pred_check_branch
    %182 = sbr.rel (0) target = $region29
  $region28: #{vit_forward.23} parent=0 // pred_region
    _
  $region29: #{vit_forward.23} parent=0 // pred_fallthru
    _

// kernel: vit_forward.24
$region0: #{vit_forward.24}
  #allocation0 [shape = 'u32[]', space=smem, size = 0x4, offset = 0x4, fixed_abs, tag = 'smem constant byte address 0x4 - core index']
  #allocation1 [shape = 'u32[72,128]{1,0:T(1,128)}', space=vmem, size = 0x9000, scoped, tag = 'internal scratch']
  %s0 = inlined_call_operand.vmem [shape: f32[48,32], index: 0, kind: input, shape index: {}]
  %s1 = inlined_call_operand.vmem [shape: f32[1,32], index: 1, kind: input, shape index: {}]
  %s2 = inlined_call_operand.vmem [shape: f32[1,32], index: 2, kind: input, shape index: {}]
  %s3 = inlined_call_operand.vmem [shape: bf16[32,128], index: 3, kind: input, shape index: {}]
  %s4 = inlined_call_operand.vmem [shape: f32[1,128], index: 4, kind: input, shape index: {}]
  %s5 = inlined_call_operand.vmem [shape: f32[48,128], index: 5, kind: output, shape index: {}]
  %s6 = sld [smem:[#allocation0]]
  $region30: #{vit_forward.24} parent=0
    _
  %s8 = ssub.s32 1, %s6
  %s9 = scalar_select 0, %s8, %s6
  // Predicated region
  $region2: #{vit_forward.24} parent=0 // pred_check
    _
  $region3: #{vit_forward.24} parent=0 // pred_check_branch
    %11 = sbr.rel (0) target = $region5
  $region4: #{vit_forward.24} parent=0 // pred_region
    _
  $region5: #{vit_forward.24} parent=0 // pred_fallthru
    _
  // Predicated region
  $region6: #{vit_forward.24} parent=0 // pred_check
    _
  $region7: #{vit_forward.24} parent=0 // pred_check_branch
    %13 = sbr.rel (0) target = $region9
  $region8: #{vit_forward.24} parent=0 // pred_region
    _
  $region9: #{vit_forward.24} parent=0 // pred_fallthru
    _
  // Predicated region
  $region10: #{vit_forward.24} parent=0 // pred_check
    _
  $region11: #{vit_forward.24} parent=0 // pred_check_branch
    %15 = sbr.rel (0) target = $region13
  $region12: #{vit_forward.24} parent=0 // pred_region
    _
  $region13: #{vit_forward.24} parent=0 // pred_fallthru
    _
  // Predicated region
  $region14: #{vit_forward.24} parent=0 // pred_check
    _
  $region15: #{vit_forward.24} parent=0 // pred_check_branch
    %17 = sbr.rel (0) target = $region17
  $region16: #{vit_forward.24} parent=0 // pred_region
    _
  $region17: #{vit_forward.24} parent=0 // pred_fallthru
    _
  // Predicated region
  $region18: #{vit_forward.24} parent=0 // pred_check
    _
  $region19: #{vit_forward.24} parent=0 // pred_check_branch
    %19 = sbr.rel (0) target = $region21
  $region20: #{vit_forward.24} parent=0 // pred_region
    _
  $region21: #{vit_forward.24} parent=0 // pred_fallthru
    _
  %v21 = vld [vmem:[%s0] sm:$0xff]
  %v22 = vld [vmem:[%s0 + $0x8] sm:$0xff]
  %v23 = vld [vmem:[%s0 + $0x10] sm:$0xff]
  %v24 = vld [vmem:[%s0 + $0x18] sm:$0xff]
  %v25 = vld [vmem:[%s0 + $0x20] sm:$0xff]
  %v26 = vld [vmem:[%s0 + $0x28] sm:$0xff]
  %vm27 = vcmask 261120
  %v28 = vsel %vm27, %v21, 0.0
  %29 = vadd.xlane.f32.xlu0 %v28
  %v30 = vpop.xlane.xlu0 %29
  %v31 = vsel %vm27, %v22, 0.0
  %32 = vadd.xlane.f32.xlu0 %v31
  %v33 = vpop.xlane.xlu0 %32
  %v34 = vsel %vm27, %v23, 0.0
  %35 = vadd.xlane.f32.xlu0 %v34
  %v36 = vpop.xlane.xlu0 %35
  %v37 = vsel %vm27, %v24, 0.0
  %38 = vadd.xlane.f32.xlu0 %v37
  %v39 = vpop.xlane.xlu0 %38
  %v40 = vsel %vm27, %v25, 0.0
  %41 = vadd.xlane.f32.xlu0 %v40
  %v42 = vpop.xlane.xlu0 %41
  %v43 = vsel %vm27, %v26, 0.0
  %44 = vadd.xlane.f32.xlu0 %v43
  %v45 = vpop.xlane.xlu0 %44
  %v46 = vrcp.pop 32.0
  %v47 = vmul.f32 32.0, %v46
  %v48 = vsub.f32 1.0, %v47
  %v49 = vmul.f32 %v46, %v48
  %v50 = vadd.f32 %v46, %v49
  %vm51 = vweird.f32 %v46
  %v52 = vsel %vm51, %v46, %v50
  %v53 = vmul.f32 %v30, %v52
  %v54 = vmul.f32 %v33, %v52
  %v55 = vmul.f32 %v36, %v52
  %v56 = vmul.f32 %v39, %v52
  %v57 = vmul.f32 %v42, %v52
  %v58 = vmul.f32 %v45, %v52
  %v59 = vsub.f32 %v21, %v53
  %v60 = vsub.f32 %v22, %v54
  %v61 = vsub.f32 %v23, %v55
  %v62 = vsub.f32 %v24, %v56
  %v63 = vsub.f32 %v25, %v57
  %v64 = vsub.f32 %v26, %v58
  %v65 = vmul.f32 %v59, %v59
  %v66 = vmul.f32 %v60, %v60
  %v67 = vmul.f32 %v61, %v61
  %v68 = vmul.f32 %v62, %v62
  %v69 = vmul.f32 %v63, %v63
  %v70 = vmul.f32 %v64, %v64
  %v71 = vsel %vm27, %v65, 0.0
  %72 = vadd.xlane.f32.xlu0 %v71
  %v73 = vpop.xlane.xlu0 %72
  %v74 = vsel %vm27, %v66, 0.0
  %75 = vadd.xlane.f32.xlu0 %v74
  %v76 = vpop.xlane.xlu0 %75
  %v77 = vsel %vm27, %v67, 0.0
  %78 = vadd.xlane.f32.xlu0 %v77
  %v79 = vpop.xlane.xlu0 %78
  %v80 = vsel %vm27, %v68, 0.0
  %81 = vadd.xlane.f32.xlu0 %v80
  %v82 = vpop.xlane.xlu0 %81
  %v83 = vsel %vm27, %v69, 0.0
  %84 = vadd.xlane.f32.xlu0 %v83
  %v85 = vpop.xlane.xlu0 %84
  %v86 = vsel %vm27, %v70, 0.0
  %87 = vadd.xlane.f32.xlu0 %v86
  %v88 = vpop.xlane.xlu0 %87
  %v89 = vmul.f32 %v73, %v52
  %v90 = vmul.f32 %v76, %v52
  %v91 = vmul.f32 %v79, %v52
  %v92 = vmul.f32 %v82, %v52
  %v93 = vmul.f32 %v85, %v52
  %v94 = vmul.f32 %v88, %v52
  %v95 = vadd.f32 %v89, 1e-05
  %v96 = vadd.f32 %v90, 1e-05
  %v97 = vadd.f32 %v91, 1e-05
  %v98 = vadd.f32 %v92, 1e-05
  %v99 = vadd.f32 %v93, 1e-05
  %v100 = vadd.f32 %v94, 1e-05
  %v101 = vrsqrt.pop %v95
  %v102 = vmul.f32 %v101, %v95
  %v103 = vmul.f32 %v102, %v101
  %v104 = vmul.f32 0.5, %v103
  %v105 = vsub.f32 1.5, %v104
  %v106 = vmul.f32 %v101, %v105
  %vm107 = vweird.f32 %v95
  %vm108 = vweird.f32 %v101
  %vm109 = vmor %vm107, %vm108
  %v110 = vsel %vm109, %v101, %v106
  %v111 = vrsqrt.pop %v96
  %v112 = vmul.f32 %v111, %v96
  %v113 = vmul.f32 %v112, %v111
  %v114 = vmul.f32 0.5, %v113
  %v115 = vsub.f32 1.5, %v114
  %v116 = vmul.f32 %v111, %v115
  %vm117 = vweird.f32 %v96
  %vm118 = vweird.f32 %v111
  %vm119 = vmor %vm117, %vm118
  %v120 = vsel %vm119, %v111, %v116
  %v121 = vrsqrt.pop %v97
  %v122 = vmul.f32 %v121, %v97
  %v123 = vmul.f32 %v122, %v121
  %v124 = vmul.f32 0.5, %v123
  %v125 = vsub.f32 1.5, %v124
  %v126 = vmul.f32 %v121, %v125
  %vm127 = vweird.f32 %v97
  %vm128 = vweird.f32 %v121
  %vm129 = vmor %vm127, %vm128
  %v130 = vsel %vm129, %v121, %v126
  %v131 = vrsqrt.pop %v98
  %v132 = vmul.f32 %v131, %v98
  %v133 = vmul.f32 %v132, %v131
  %v134 = vmul.f32 0.5, %v133
  %v135 = vsub.f32 1.5, %v134
  %v136 = vmul.f32 %v131, %v135
  %vm137 = vweird.f32 %v98
  %vm138 = vweird.f32 %v131
  %vm139 = vmor %vm137, %vm138
  %v140 = vsel %vm139, %v131, %v136
  %v141 = vrsqrt.pop %v99
  %v142 = vmul.f32 %v141, %v99
  %v143 = vmul.f32 %v142, %v141
  %v144 = vmul.f32 0.5, %v143
  %v145 = vsub.f32 1.5, %v144
  %v146 = vmul.f32 %v141, %v145
  %vm147 = vweird.f32 %v99
  %vm148 = vweird.f32 %v141
  %vm149 = vmor %vm147, %vm148
  %v150 = vsel %vm149, %v141, %v146
  %v151 = vrsqrt.pop %v100
  %v152 = vmul.f32 %v151, %v100
  %v153 = vmul.f32 %v152, %v151
  %v154 = vmul.f32 0.5, %v153
  %v155 = vsub.f32 1.5, %v154
  %v156 = vmul.f32 %v151, %v155
  %vm157 = vweird.f32 %v100
  %vm158 = vweird.f32 %v151
  %vm159 = vmor %vm157, %vm158
  %v160 = vsel %vm159, %v151, %v156
  %v161 = vmul.f32 %v59, %v110
  %v162 = vmul.f32 %v60, %v120
  %v163 = vmul.f32 %v61, %v130
  %v164 = vmul.f32 %v62, %v140
  %v165 = vmul.f32 %v63, %v150
  %v166 = vmul.f32 %v64, %v160
  %v167 = vld [vmem:[%s1] sm:$0x1]
  %v169 = vperm.slane %v167, 0
  %v171 = vmul.f32 %v161, %v169
  %v172 = vmul.f32 %v162, %v169
  %v173 = vmul.f32 %v163, %v169
  %v174 = vmul.f32 %v164, %v169
  %v175 = vmul.f32 %v165, %v169
  %v176 = vmul.f32 %v166, %v169
  %v177 = vld [vmem:[%s2] sm:$0x1]
  %v179 = vperm.slane %v177, 0
  %v181 = vadd.f32 %v171, %v179
  %v182 = vadd.f32 %v172, %v179
  %v183 = vadd.f32 %v173, %v179
  %v184 = vadd.f32 %v174, %v179
  %v185 = vadd.f32 %v175, %v179
  %v186 = vadd.f32 %v176, %v179
  %v187 = vpack.c.bf16 %v182, %v181
  %v188 = vpack.c.bf16 %v184, %v183
  %v189 = vpack.c.bf16 %v186, %v185
  %v190 = vld [vmem:[%s3] sm:$0xf]
  %v191 = vld [vmem:[%s3 + $0x4] sm:$0xf]
  %v192 = vld [vmem:[%s3 + $0x8] sm:$0xf]
  %v193 = vld [vmem:[%s3 + $0xc] sm:$0xf]
  %v194 = vld [vmem:[%s4] sm:$0x1]
  %v196 = vperm.slane %v194, 0
  %v202 = vunpack.c.l.b16 %v190
  %v203 = vunpack.c.l.b16 %v191
  %v204 = vunpack.c.l.b16 %v192
  %v205 = vunpack.c.l.b16 %v193
  %v206 = vpack.c.b16 %v203, %v202
  %v207 = vpack.c.b16 %v205, %v204
  %v211 = vsel %vm27, %v187, 0
  %v214 = vsel %vm27, %v188, 0
  %v217 = vsel %vm27, %v189, 0
  %219 = vmatpush.bf16.msra.mxu0 0
  %220 = vmatpush.bf16.msra.mxu0 0
  %221 = vmatpush.bf16.msra.mxu0 0
  %222 = vmatpush.bf16.msra.mxu0 0
  %223 = vmatpush.bf16.msra.mxu0 0
  %224 = vmatpush.bf16.msra.mxu0 0
  %225 = vmatpush.bf16.msra.mxu0 %v207
  %226 = vmatpush.bf16.msra.mxu0 %v206
  %227 = vmatmul.bf16.gmra.mxu0 %v211
  %v228 = vpop.f32.mrf.mxu0
  %v229 = vadd.f32 %v196, %v228
  %v230 = vpop.f32.mrf.mxu0
  %v231 = vadd.f32 %v196, %v230
  %232 = vmatmul.bf16.gmra.mxu0 %v214
  %v233 = vpop.f32.mrf.mxu0
  %v234 = vadd.f32 %v196, %v233
  %v235 = vpop.f32.mrf.mxu0
  %v236 = vadd.f32 %v196, %v235
  %237 = vmatmul.bf16.gmra.mxu0 %v217
  %v238 = vpop.f32.mrf.mxu0
  %v239 = vadd.f32 %v196, %v238
  %v240 = vpop.f32.mrf.mxu0
  %v241 = vadd.f32 %v196, %v240
  %242 = vdwg.mxu0
  %v243 = vmax.f32 %v229, 0.0
  %v244 = vmax.f32 %v231, 0.0
  %v245 = vmax.f32 %v234, 0.0
  %v246 = vmax.f32 %v236, 0.0
  %v247 = vmax.f32 %v239, 0.0
  %v248 = vmax.f32 %v241, 0.0
  %249 = vst [vmem:[%s5] sm:$0xff] %v243
  %250 = vst [vmem:[%s5 + $0x8] sm:$0xff] %v244
  %251 = vst [vmem:[%s5 + $0x10] sm:$0xff] %v245
  %252 = vst [vmem:[%s5 + $0x18] sm:$0xff] %v246
  %253 = vst [vmem:[%s5 + $0x20] sm:$0xff] %v247
  %254 = vst [vmem:[%s5 + $0x28] sm:$0xff] %v248
  // Predicated region
  $region22: #{vit_forward.24} parent=0 // pred_check
    _
  $region23: #{vit_forward.24} parent=0 // pred_check_branch
    %256 = sbr.rel (0) target = $region25
  $region24: #{vit_forward.24} parent=0 // pred_region
    _
  $region25: #{vit_forward.24} parent=0 // pred_fallthru
    _
  // Predicated region
  $region26: #{vit_forward.24} parent=0 // pred_check
    _
  $region27: #{vit_forward.24} parent=0 // pred_check_branch
    %258 = sbr.rel (0) target = $region29
  $region28: #{vit_forward.24} parent=0 // pred_region
    _
  $region29: #{vit_forward.24} parent=0 // pred_fallthru
    _

// kernel: vit_forward.31
$region0: #{vit_forward.31}
  #allocation0 [shape = 'u32[]', space=smem, size = 0x4, offset = 0x4, fixed_abs, tag = 'smem constant byte address 0x4 - core index']
  #allocation1 [shape = 'u32[72,128]{1,0:T(1,128)}', space=vmem, size = 0x9000, scoped, tag = 'internal scratch']
  %s0 = inlined_call_operand.vmem [shape: f32[8,32], index: 0, kind: input, shape index: {}]
  %s1 = inlined_call_operand.vmem [shape: f32[1,32], index: 1, kind: input, shape index: {}]
  %s2 = inlined_call_operand.vmem [shape: f32[1,32], index: 2, kind: input, shape index: {}]
  %s3 = inlined_call_operand.vmem [shape: bf16[32,128], index: 3, kind: input, shape index: {}]
  %s4 = inlined_call_operand.vmem [shape: f32[1,128], index: 4, kind: input, shape index: {}]
  %s5 = inlined_call_operand.vmem [shape: f32[8,128], index: 5, kind: output, shape index: {}]
  %s6 = sld [smem:[#allocation0]]
  $region30: #{vit_forward.31} parent=0
    _
  %s8 = ssub.s32 1, %s6
  %s9 = scalar_select 0, %s8, %s6
  // Predicated region
  $region2: #{vit_forward.31} parent=0 // pred_check
    _
  $region3: #{vit_forward.31} parent=0 // pred_check_branch
    %11 = sbr.rel (0) target = $region5
  $region4: #{vit_forward.31} parent=0 // pred_region
    _
  $region5: #{vit_forward.31} parent=0 // pred_fallthru
    _
  // Predicated region
  $region6: #{vit_forward.31} parent=0 // pred_check
    _
  $region7: #{vit_forward.31} parent=0 // pred_check_branch
    %13 = sbr.rel (0) target = $region9
  $region8: #{vit_forward.31} parent=0 // pred_region
    _
  $region9: #{vit_forward.31} parent=0 // pred_fallthru
    _
  // Predicated region
  $region10: #{vit_forward.31} parent=0 // pred_check
    _
  $region11: #{vit_forward.31} parent=0 // pred_check_branch
    %15 = sbr.rel (0) target = $region13
  $region12: #{vit_forward.31} parent=0 // pred_region
    _
  $region13: #{vit_forward.31} parent=0 // pred_fallthru
    _
  // Predicated region
  $region14: #{vit_forward.31} parent=0 // pred_check
    _
  $region15: #{vit_forward.31} parent=0 // pred_check_branch
    %17 = sbr.rel (0) target = $region17
  $region16: #{vit_forward.31} parent=0 // pred_region
    _
  $region17: #{vit_forward.31} parent=0 // pred_fallthru
    _
  // Predicated region
  $region18: #{vit_forward.31} parent=0 // pred_check
    _
  $region19: #{vit_forward.31} parent=0 // pred_check_branch
    %19 = sbr.rel (0) target = $region21
  $region20: #{vit_forward.31} parent=0 // pred_region
    _
  $region21: #{vit_forward.31} parent=0 // pred_fallthru
    _
  %v21 = vld [vmem:[%s0] sm:$0xff]
  %vm22 = vcmask 261120
  %v23 = vsel %vm22, %v21, 0.0
  %24 = vadd.xlane.f32.xlu0 %v23
  %v25 = vpop.xlane.xlu0 %24
  %v26 = vrcp.pop 32.0
  %v27 = vmul.f32 32.0, %v26
  %v28 = vsub.f32 1.0, %v27
  %v29 = vmul.f32 %v26, %v28
  %v30 = vadd.f32 %v26, %v29
  %vm31 = vweird.f32 %v26
  %v32 = vsel %vm31, %v26, %v30
  %v33 = vmul.f32 %v25, %v32
  %v34 = vsub.f32 %v21, %v33
  %v35 = vmul.f32 %v34, %v34
  %v36 = vsel %vm22, %v35, 0.0
  %37 = vadd.xlane.f32.xlu0 %v36
  %v38 = vpop.xlane.xlu0 %37
  %v39 = vmul.f32 %v38, %v32
  %v40 = vadd.f32 %v39, 1e-05
  %v41 = vrsqrt.pop %v40
  %v42 = vmul.f32 %v41, %v40
  %v43 = vmul.f32 %v42, %v41
  %v44 = vmul.f32 0.5, %v43
  %v45 = vsub.f32 1.5, %v44
  %v46 = vmul.f32 %v41, %v45
  %vm47 = vweird.f32 %v40
  %vm48 = vweird.f32 %v41
  %vm49 = vmor %vm47, %vm48
  %v50 = vsel %vm49, %v41, %v46
  %v51 = vmul.f32 %v34, %v50
  %v52 = vld [vmem:[%s1] sm:$0x1]
  %v54 = vperm.slane %v52, 0
  %v56 = vmul.f32 %v51, %v54
  %v57 = vld [vmem:[%s2] sm:$0x1]
  %v59 = vperm.slane %v57, 0
  %v61 = vadd.f32 %v56, %v59
  %v62 = vpack.c.bf16 %v61, %v61
  %v63 = vld [vmem:[%s3] sm:$0xf]
  %v64 = vld [vmem:[%s3 + $0x4] sm:$0xf]
  %v65 = vld [vmem:[%s3 + $0x8] sm:$0xf]
  %v66 = vld [vmem:[%s3 + $0xc] sm:$0xf]
  %v67 = vld [vmem:[%s4] sm:$0x1]
  %v69 = vperm.slane %v67, 0
  %v75 = vunpack.c.l.b16 %v63
  %v76 = vunpack.c.l.b16 %v64
  %v77 = vunpack.c.l.b16 %v65
  %v78 = vunpack.c.l.b16 %v66
  %v79 = vpack.c.b16 %v76, %v75
  %v80 = vpack.c.b16 %v78, %v77
  %v84 = vsel %vm22, %v62, 0
  %86 = vmatpush.bf16.msra.mxu0 0
  %87 = vmatpush.bf16.msra.mxu0 0
  %88 = vmatpush.bf16.msra.mxu0 0
  %89 = vmatpush.bf16.msra.mxu0 0
  %90 = vmatpush.bf16.msra.mxu0 0
  %91 = vmatpush.bf16.msra.mxu0 0
  %92 = vmatpush.bf16.msra.mxu0 %v80
  %93 = vmatpush.bf16.msra.mxu0 %v79
  %94 = vmatmul.bf16.gmra.mxu0 %v84
  %v95 = vpop.f32.mrf.mxu0
  %v96 = vadd.f32 %v69, %v95
  %v97 = vpop.f32.mrf.mxu0
  %98 = vdwg.mxu0
  %99 = vst [vmem:[%s5] sm:$0xff] %v96
  // Predicated region
  $region22: #{vit_forward.31} parent=0 // pred_check
    _
  $region23: #{vit_forward.31} parent=0 // pred_check_branch
    %101 = sbr.rel (0) target = $region25
  $region24: #{vit_forward.31} parent=0 // pred_region
    _
  $region25: #{vit_forward.31} parent=0 // pred_fallthru
    _
  // Predicated region
  $region26: #{vit_forward.31} parent=0 // pred_check
    _
  $region27: #{vit_forward.31} parent=0 // pred_check_branch
    %103 = sbr.rel (0) target = $region29
  $region28: #{vit_forward.31} parent=0 // pred_region
    _
  $region29: #{vit_forward.31} parent=0 // pred_fallthru
    _

</llo_original>
